<compile_context>
chip_gen: v7x
topology: tpu7x:2x2x1
jax: 0.10.0
libtpu: 0.0.40
codegen_flags: <defaults>
</compile_context>

<pallas_src>
import math

import jax
import jax.numpy as jnp
from jax.experimental import pallas as pl
from jax.experimental.pallas import tpu as pltpu

_EPS = 1e-5   # BatchNorm eps (PyTorch default)
_T = 9        # sequence length fed to the LSTMs


def _mm(w, x):
    """w: (M, K) weights, x: (K, B) activations, K tiny (<=18).

    Rank-1 broadcast sum (pure VPU work): avoids MXU push/pop latency at
    these shapes and keeps B on the lane axis.
    """
    out = w[:, 0:1] * x[0:1, :]
    for k in range(1, w.shape[1]):
        out = out + w[:, k:k + 1] * x[k:k + 1, :]
    return out


def _fused_bidir_cell(xc, h, c, whh_p, b_p, hid):
    """One fused fwd+rev LSTM step (PyTorch cell semantics).

    Packed gate-row order (blocks of `hid` rows):
      [i_f, i_r, f_f, f_r, o_f, o_r, g_f, g_r]
    so one sigmoid covers rows [0, 6H) and one tanh covers rows [6H, 8H).
    State layout: h, c are (2H, B) with rows [fwd(H); rev(H)].
    """
    gates = xc + _mm(whh_p, h) + b_p                    # (8H, B)
    sig = jax.nn.sigmoid(gates[0:6 * hid, :])           # i, f, o of both dirs
    g = jnp.tanh(gates[6 * hid:8 * hid, :])             # g of both dirs
    i = sig[0:2 * hid, :]
    f = sig[2 * hid:4 * hid, :]
    o = sig[4 * hid:6 * hid, :]
    c_new = f * c + i * g
    h_new = o * jnp.tanh(c_new)
    return h_new, c_new


def lstmnet_kernel(
    x_ref,                                    # (8, B)   feature-major, B on lanes
    emb_ref,                                  # (2, 8)   embedding table (transposed)
    w1_ref, b1_ref, g1_ref, be1_ref,          # Linear(9,18) + BatchNorm1d(18)
    w2_ref, b2_ref, g2_ref, be2_ref,          # Linear(18,9) + BatchNorm1d(9)
    wih1f_ref, wih1r_ref, whh1_ref, bl1_ref,  # fused bidir LSTM1 (H=2)
    wih2f_ref, wih2r_ref, whh2_ref, bl2_ref,  # fused bidir LSTM2 (H=1)
    out_ref,                                  # (2, T, B) lane-dense output
    y1_ref,                                   # scratch (T, 4, B): relu(lstm1 out)
):
    B = x_ref.shape[1]
    x = x_ref[...]

    # --- Embedding: 8 VPU mask-mul-adds (no MXU round trip) ----------------
    idx = x[0:1, :].astype(jnp.int32)               # (1, B) category column
    emb_cols = emb_ref[...]                         # (2, 8)
    emb_out = (idx == 0).astype(jnp.float32) * emb_cols[:, 0:1]
    for k in range(1, 8):
        emb_out = emb_out + (idx == k).astype(jnp.float32) * emb_cols[:, k:k + 1]
    # emb_out: (2, B)

    # --- Linear(9->18): torch.cat eliminated by splitting the weight -------
    w1 = w1_ref[...]                                # (18, 9)
    x_rest = x[1:8, :]                              # (7, B)
    h1 = _mm(w1[:, 0:2], emb_out) + _mm(w1[:, 2:9], x_rest) + b1_ref[...]

    # --- BatchNorm1d(18), batch (lane) statistics, + ReLU -------------------
    mu1 = jnp.mean(h1, axis=1, keepdims=True)
    var1 = jnp.mean((h1 - mu1) ** 2, axis=1, keepdims=True)
    h1 = (h1 - mu1) * jax.lax.rsqrt(var1 + _EPS) * g1_ref[...] + be1_ref[...]
    h1 = jnp.maximum(h1, 0.0)

    # --- Linear(18->9) + BatchNorm1d(9) + ReLU ------------------------------
    h2 = _mm(w2_ref[...], h1) + b2_ref[...]
    mu2 = jnp.mean(h2, axis=1, keepdims=True)
    var2 = jnp.mean((h2 - mu2) ** 2, axis=1, keepdims=True)
    h2 = (h2 - mu2) * jax.lax.rsqrt(var2 + _EPS) * g2_ref[...] + be2_ref[...]
    seq = jnp.maximum(h2, 0.0)                      # (T=9, B): 9 scalar steps

    # --- LSTM1 (input=1, hidden=2, bidirectional), fwd+rev fused ------------
    H1 = 2
    wih1f = wih1f_ref[...]   # (16, 1)  fwd gate rows (rev rows zero)
    wih1r = wih1r_ref[...]   # (16, 1)  rev gate rows (fwd rows zero)
    whh1 = whh1_ref[...]     # (16, 4)  block-diagonal over [h_fwd; h_rev]
    bl1 = bl1_ref[...]       # (16, 1)  b_ih + b_hh, packed order
    h1s = jnp.zeros((2 * H1, B), jnp.float32)
    c1s = jnp.zeros((2 * H1, B), jnp.float32)
    for s in range(_T):
        xc = wih1f * seq[s:s + 1, :] + wih1r * seq[_T - 1 - s:_T - s, :]
        h1s, c1s = _fused_bidir_cell(xc, h1s, c1s, whh1, bl1, H1)
        y = jnp.maximum(h1s, 0.0)                   # ReLU on lstm1 outputs only
        y1_ref[s, 0:2, :] = y[0:2, :]               # fwd half -> time s
        y1_ref[_T - 1 - s, 2:4, :] = y[2:4, :]      # rev half -> time T-1-s

    # --- LSTM2 (input=4, hidden=1, bidirectional), fwd+rev fused ------------
    H2 = 1
    wih2f = wih2f_ref[...]   # (8, 4)
    wih2r = wih2r_ref[...]   # (8, 4)
    whh2 = whh2_ref[...]     # (8, 2)
    bl2 = bl2_ref[...]       # (8, 1)
    h2s = jnp.zeros((2 * H2, B), jnp.float32)
    c2s = jnp.zeros((2 * H2, B), jnp.float32)
    for s in range(_T):
        xf = y1_ref[s]                              # (4, B) lstm1 out @ time s
        xr = y1_ref[_T - 1 - s]                     # (4, B) lstm1 out @ time T-1-s
        xc = _mm(wih2f, xf) + _mm(wih2r, xr)
        h2s, c2s = _fused_bidir_cell(xc, h2s, c2s, whh2, bl2, H2)
        out_ref[0, s:s + 1, :] = h2s[0:1, :]            # fwd output @ time s
        out_ref[1, _T - 1 - s:_T - s, :] = h2s[1:2, :]  # rev output @ time T-1-s


def lstmnet_forward(x, kernel_params):
    """x: (B, 8) float32 -> (B, 9, 2) float32 (PyTorch-equivalent output)."""
    B = x.shape[0]
    args = (x.T,) + tuple(kernel_params)            # batch -> lane axis
    out = pl.pallas_call(
        lstmnet_kernel,
        out_shape=jax.ShapeDtypeStruct((2, _T, B), jnp.float32),
        in_specs=[pl.BlockSpec(memory_space=pltpu.MemorySpace.VMEM)] * len(args),
        out_specs=pl.BlockSpec(memory_space=pltpu.MemorySpace.VMEM),
        scratch_shapes=[pltpu.VMEM((_T, 4, B), jnp.float32)],
    )(*args)
    # (2, T, B) -> (B, T, 2); the reference's final reshape(-1, 9, 2) is identity.
    return jnp.transpose(out, (2, 1, 0))


# ---------------------------------------------------------------------------
# Parameter packing (wrapper-side, one-time layout plumbing)
# ---------------------------------------------------------------------------
def _gate_reorder(w, hid):
    """PyTorch gate rows [i, f, g, o] -> [i, f, o, g] (blocks of `hid` rows)."""
    return jnp.concatenate(
        [w[0:hid], w[hid:2 * hid], w[3 * hid:4 * hid], w[2 * hid:3 * hid]], axis=0)


def _interleave_dirs(a_f, a_r, hid):
    """Interleave per-gate blocks of the two directions: [g_f, g_r] per gate."""
    blocks = []
    for g in range(4):
        blocks.append(a_f[g * hid:(g + 1) * hid])
        blocks.append(a_r[g * hid:(g + 1) * hid])
    return jnp.concatenate(blocks, axis=0)


def _pack_bidir_lstm(fwd, rev, hid):
    """fwd/rev: (w_ih, w_hh, b_ih, b_hh) in PyTorch layout.
    Returns (wih_f, wih_r, whh, bias) packed for the fused kernel cell."""
    w_ih_f, w_hh_f, b_ih_f, b_hh_f = fwd
    w_ih_r, w_hh_r, b_ih_r, b_hh_r = rev
    zi = jnp.zeros_like(w_ih_f)
    wih_f = _interleave_dirs(_gate_reorder(w_ih_f, hid), zi, hid)
    wih_r = _interleave_dirs(zi, _gate_reorder(w_ih_r, hid), hid)
    zh = jnp.zeros((4 * hid, hid), jnp.float32)
    whh = _interleave_dirs(
        jnp.concatenate([_gate_reorder(w_hh_f, hid), zh], axis=1),
        jnp.concatenate([zh, _gate_reorder(w_hh_r, hid)], axis=1), hid)
    bf = _gate_reorder((b_ih_f + b_hh_f).reshape(4 * hid, 1), hid)
    br = _gate_reorder((b_ih_r + b_hh_r).reshape(4 * hid, 1), hid)
    bias = _interleave_dirs(bf, br, hid)
    return wih_f, wih_r, whh, bias


def init_params(key):
    """Deterministic synthetic parameters with PyTorch-init-like scales,
    returned already packed/transposed for the kernel's batch-on-lanes layout."""
    ks = jax.random.split(key, 9)

    def u(k, shape, fan_in):
        s = 1.0 / math.sqrt(fan_in)
        return jax.random.uniform(k, shape, jnp.float32, -s, s)

    emb_w = jax.random.normal(ks[0], (8, 2), jnp.float32)           # Embedding(8, 2)

    w1 = u(ks[1], (18, 9), 9)                                       # Linear(9, 18)
    b1 = u(ks[2], (18,), 9)
    g1 = jnp.ones((18,), jnp.float32)                               # BatchNorm1d(18)
    be1 = jnp.zeros((18,), jnp.float32)

    w2 = u(ks[3], (9, 18), 18)                                      # Linear(18, 9)
    b2 = u(ks[4], (9,), 18)
    g2 = jnp.ones((9,), jnp.float32)                                # BatchNorm1d(9)
    be2 = jnp.zeros((9,), jnp.float32)

    def lstm_dir(k, in_sz, hid):
        k1, k2, k3, k4 = jax.random.split(k, 4)
        return (u(k1, (4 * hid, in_sz), hid), u(k2, (4 * hid, hid), hid),
                u(k3, (4 * hid,), hid), u(k4, (4 * hid,), hid))

    l1 = _pack_bidir_lstm(lstm_dir(ks[5], 1, 2), lstm_dir(ks[6], 1, 2), 2)
    l2 = _pack_bidir_lstm(lstm_dir(ks[7], 4, 1), lstm_dir(ks[8], 4, 1), 1)

    return (
        emb_w.T,                                                    # (2, 8)
        w1, b1.reshape(18, 1), g1.reshape(18, 1), be1.reshape(18, 1),
        w2, b2.reshape(9, 1), g2.reshape(9, 1), be2.reshape(9, 1),
        *l1, *l2,
    )


if __name__ == "__main__":
    key = jax.random.PRNGKey(0)
    k_idx, k_rest, k_par = jax.random.split(key, 3)

    B = 8
    idx_col = jax.random.randint(k_idx, (B, 1), 0, 8).astype(jnp.float32)
    rest = jax.random.normal(k_rest, (B, 7), jnp.float32)
    x = jnp.concatenate([idx_col, rest], axis=1)                    # (B, 8)

    params = init_params(k_par)
    out = lstmnet_forward(x, params)
    jax.block_until_ready(out)
    assert out.shape == (B, 9, 2) and out.dtype == jnp.float32
    print("KERNEL_OK")
</pallas_src>

<mosaic_0001>
module attributes {stable_mosaic.version = 11 : i64} {
  func.func @lstmnet_kernel(%arg0: memref<8x8xf32, #tpu.memory_space<vmem>>, %arg1: memref<2x8xf32, #tpu.memory_space<vmem>>, %arg2: memref<18x9xf32, #tpu.memory_space<vmem>>, %arg3: memref<18x1xf32, #tpu.memory_space<vmem>>, %arg4: memref<18x1xf32, #tpu.memory_space<vmem>>, %arg5: memref<18x1xf32, #tpu.memory_space<vmem>>, %arg6: memref<9x18xf32, #tpu.memory_space<vmem>>, %arg7: memref<9x1xf32, #tpu.memory_space<vmem>>, %arg8: memref<9x1xf32, #tpu.memory_space<vmem>>, %arg9: memref<9x1xf32, #tpu.memory_space<vmem>>, %arg10: memref<16x1xf32, #tpu.memory_space<vmem>>, %arg11: memref<16x1xf32, #tpu.memory_space<vmem>>, %arg12: memref<16x4xf32, #tpu.memory_space<vmem>>, %arg13: memref<16x1xf32, #tpu.memory_space<vmem>>, %arg14: memref<8x4xf32, #tpu.memory_space<vmem>>, %arg15: memref<8x4xf32, #tpu.memory_space<vmem>>, %arg16: memref<8x2xf32, #tpu.memory_space<vmem>>, %arg17: memref<8x1xf32, #tpu.memory_space<vmem>>, %arg18: memref<2x9x8xf32, #tpu.memory_space<vmem>>, %arg19: memref<9x4x8xf32, #tpu.memory_space<vmem>>) attributes {dimension_semantics = [], scalar_prefetch = 0 : i64, scratch_operands = 1 : i64, tpu.core_type = #tpu.core_type<tc>} {
    %c0 = arith.constant 0 : index
    %c0_0 = arith.constant 0 : index
    %0 = vector.load %arg0[%c0, %c0_0] : memref<8x8xf32, #tpu.memory_space<vmem>>, vector<8x8xf32>
    %1 = vector.extract_strided_slice %0 {offsets = [0, 0], sizes = [1, 8], strides = [1, 1]} : vector<8x8xf32> to vector<1x8xf32>
    %2 = arith.fptosi %1 : vector<1x8xf32> to vector<1x8xi32>
    %c0_1 = arith.constant 0 : index
    %c0_2 = arith.constant 0 : index
    %3 = vector.load %arg1[%c0_1, %c0_2] : memref<2x8xf32, #tpu.memory_space<vmem>>, vector<2x8xf32>
    %c0_i32 = arith.constant 0 : i32
    %4 = vector.broadcast %c0_i32 : i32 to vector<1x8xi32>
    %5 = arith.cmpi eq, %2, %4 : vector<1x8xi32>
    %6 = arith.extui %5 : vector<1x8xi1> to vector<1x8xi32>
    %7 = arith.sitofp %6 : vector<1x8xi32> to vector<1x8xf32>
    %8 = vector.extract_strided_slice %3 {offsets = [0, 0], sizes = [2, 1], strides = [1, 1]} : vector<2x8xf32> to vector<2x1xf32>
    %9 = vector.broadcast %7 : vector<1x8xf32> to vector<2x8xf32>
    %10 = vector.broadcast %8 : vector<2x1xf32> to vector<2x8xf32>
    %11 = arith.mulf %9, %10 : vector<2x8xf32>
    %c1_i32 = arith.constant 1 : i32
    %12 = vector.broadcast %c1_i32 : i32 to vector<1x8xi32>
    %13 = arith.cmpi eq, %2, %12 : vector<1x8xi32>
    %14 = arith.extui %13 : vector<1x8xi1> to vector<1x8xi32>
    %15 = arith.sitofp %14 : vector<1x8xi32> to vector<1x8xf32>
    %16 = vector.extract_strided_slice %3 {offsets = [0, 1], sizes = [2, 1], strides = [1, 1]} : vector<2x8xf32> to vector<2x1xf32>
    %17 = vector.broadcast %15 : vector<1x8xf32> to vector<2x8xf32>
    %18 = vector.broadcast %16 : vector<2x1xf32> to vector<2x8xf32>
    %19 = arith.mulf %17, %18 : vector<2x8xf32>
    %20 = arith.addf %11, %19 : vector<2x8xf32>
    %c2_i32 = arith.constant 2 : i32
    %21 = vector.broadcast %c2_i32 : i32 to vector<1x8xi32>
    %22 = arith.cmpi eq, %2, %21 : vector<1x8xi32>
    %23 = arith.extui %22 : vector<1x8xi1> to vector<1x8xi32>
    %24 = arith.sitofp %23 : vector<1x8xi32> to vector<1x8xf32>
    %25 = vector.extract_strided_slice %3 {offsets = [0, 2], sizes = [2, 1], strides = [1, 1]} : vector<2x8xf32> to vector<2x1xf32>
    %26 = vector.broadcast %24 : vector<1x8xf32> to vector<2x8xf32>
    %27 = vector.broadcast %25 : vector<2x1xf32> to vector<2x8xf32>
    %28 = arith.mulf %26, %27 : vector<2x8xf32>
    %29 = arith.addf %20, %28 : vector<2x8xf32>
    %c3_i32 = arith.constant 3 : i32
    %30 = vector.broadcast %c3_i32 : i32 to vector<1x8xi32>
    %31 = arith.cmpi eq, %2, %30 : vector<1x8xi32>
    %32 = arith.extui %31 : vector<1x8xi1> to vector<1x8xi32>
    %33 = arith.sitofp %32 : vector<1x8xi32> to vector<1x8xf32>
    %34 = vector.extract_strided_slice %3 {offsets = [0, 3], sizes = [2, 1], strides = [1, 1]} : vector<2x8xf32> to vector<2x1xf32>
    %35 = vector.broadcast %33 : vector<1x8xf32> to vector<2x8xf32>
    %36 = vector.broadcast %34 : vector<2x1xf32> to vector<2x8xf32>
    %37 = arith.mulf %35, %36 : vector<2x8xf32>
    %38 = arith.addf %29, %37 : vector<2x8xf32>
    %c4_i32 = arith.constant 4 : i32
    %39 = vector.broadcast %c4_i32 : i32 to vector<1x8xi32>
    %40 = arith.cmpi eq, %2, %39 : vector<1x8xi32>
    %41 = arith.extui %40 : vector<1x8xi1> to vector<1x8xi32>
    %42 = arith.sitofp %41 : vector<1x8xi32> to vector<1x8xf32>
    %43 = vector.extract_strided_slice %3 {offsets = [0, 4], sizes = [2, 1], strides = [1, 1]} : vector<2x8xf32> to vector<2x1xf32>
    %44 = vector.broadcast %42 : vector<1x8xf32> to vector<2x8xf32>
    %45 = vector.broadcast %43 : vector<2x1xf32> to vector<2x8xf32>
    %46 = arith.mulf %44, %45 : vector<2x8xf32>
    %47 = arith.addf %38, %46 : vector<2x8xf32>
    %c5_i32 = arith.constant 5 : i32
    %48 = vector.broadcast %c5_i32 : i32 to vector<1x8xi32>
    %49 = arith.cmpi eq, %2, %48 : vector<1x8xi32>
    %50 = arith.extui %49 : vector<1x8xi1> to vector<1x8xi32>
    %51 = arith.sitofp %50 : vector<1x8xi32> to vector<1x8xf32>
    %52 = vector.extract_strided_slice %3 {offsets = [0, 5], sizes = [2, 1], strides = [1, 1]} : vector<2x8xf32> to vector<2x1xf32>
    %53 = vector.broadcast %51 : vector<1x8xf32> to vector<2x8xf32>
    %54 = vector.broadcast %52 : vector<2x1xf32> to vector<2x8xf32>
    %55 = arith.mulf %53, %54 : vector<2x8xf32>
    %56 = arith.addf %47, %55 : vector<2x8xf32>
    %c6_i32 = arith.constant 6 : i32
    %57 = vector.broadcast %c6_i32 : i32 to vector<1x8xi32>
    %58 = arith.cmpi eq, %2, %57 : vector<1x8xi32>
    %59 = arith.extui %58 : vector<1x8xi1> to vector<1x8xi32>
    %60 = arith.sitofp %59 : vector<1x8xi32> to vector<1x8xf32>
    %61 = vector.extract_strided_slice %3 {offsets = [0, 6], sizes = [2, 1], strides = [1, 1]} : vector<2x8xf32> to vector<2x1xf32>
    %62 = vector.broadcast %60 : vector<1x8xf32> to vector<2x8xf32>
    %63 = vector.broadcast %61 : vector<2x1xf32> to vector<2x8xf32>
    %64 = arith.mulf %62, %63 : vector<2x8xf32>
    %65 = arith.addf %56, %64 : vector<2x8xf32>
    %c7_i32 = arith.constant 7 : i32
    %66 = vector.broadcast %c7_i32 : i32 to vector<1x8xi32>
    %67 = arith.cmpi eq, %2, %66 : vector<1x8xi32>
    %68 = arith.extui %67 : vector<1x8xi1> to vector<1x8xi32>
    %69 = arith.sitofp %68 : vector<1x8xi32> to vector<1x8xf32>
    %70 = vector.extract_strided_slice %3 {offsets = [0, 7], sizes = [2, 1], strides = [1, 1]} : vector<2x8xf32> to vector<2x1xf32>
    %71 = vector.broadcast %69 : vector<1x8xf32> to vector<2x8xf32>
    %72 = vector.broadcast %70 : vector<2x1xf32> to vector<2x8xf32>
    %73 = arith.mulf %71, %72 : vector<2x8xf32>
    %74 = arith.addf %65, %73 : vector<2x8xf32>
    %c0_3 = arith.constant 0 : index
    %c0_4 = arith.constant 0 : index
    %75 = vector.load %arg2[%c0_3, %c0_4] : memref<18x9xf32, #tpu.memory_space<vmem>>, vector<18x9xf32>
    %76 = vector.extract_strided_slice %0 {offsets = [1, 0], sizes = [7, 8], strides = [1, 1]} : vector<8x8xf32> to vector<7x8xf32>
    %77 = vector.extract_strided_slice %75 {offsets = [0, 0], sizes = [18, 2], strides = [1, 1]} : vector<18x9xf32> to vector<18x2xf32>
    %78 = vector.extract_strided_slice %77 {offsets = [0, 0], sizes = [18, 1], strides = [1, 1]} : vector<18x2xf32> to vector<18x1xf32>
    %79 = vector.extract_strided_slice %74 {offsets = [0, 0], sizes = [1, 8], strides = [1, 1]} : vector<2x8xf32> to vector<1x8xf32>
    %80 = vector.broadcast %78 : vector<18x1xf32> to vector<18x8xf32>
    %81 = vector.broadcast %79 : vector<1x8xf32> to vector<18x8xf32>
    %82 = arith.mulf %80, %81 : vector<18x8xf32>
    %83 = vector.extract_strided_slice %77 {offsets = [0, 1], sizes = [18, 1], strides = [1, 1]} : vector<18x2xf32> to vector<18x1xf32>
    %84 = vector.extract_strided_slice %74 {offsets = [1, 0], sizes = [1, 8], strides = [1, 1]} : vector<2x8xf32> to vector<1x8xf32>
    %85 = vector.broadcast %83 : vector<18x1xf32> to vector<18x8xf32>
    %86 = vector.broadcast %84 : vector<1x8xf32> to vector<18x8xf32>
    %87 = arith.mulf %85, %86 : vector<18x8xf32>
    %88 = arith.addf %82, %87 : vector<18x8xf32>
    %89 = vector.extract_strided_slice %75 {offsets = [0, 2], sizes = [18, 7], strides = [1, 1]} : vector<18x9xf32> to vector<18x7xf32>
    %90 = vector.extract_strided_slice %89 {offsets = [0, 0], sizes = [18, 1], strides = [1, 1]} : vector<18x7xf32> to vector<18x1xf32>
    %91 = vector.extract_strided_slice %76 {offsets = [0, 0], sizes = [1, 8], strides = [1, 1]} : vector<7x8xf32> to vector<1x8xf32>
    %92 = vector.broadcast %90 : vector<18x1xf32> to vector<18x8xf32>
    %93 = vector.broadcast %91 : vector<1x8xf32> to vector<18x8xf32>
    %94 = arith.mulf %92, %93 : vector<18x8xf32>
    %95 = vector.extract_strided_slice %89 {offsets = [0, 1], sizes = [18, 1], strides = [1, 1]} : vector<18x7xf32> to vector<18x1xf32>
    %96 = vector.extract_strided_slice %76 {offsets = [1, 0], sizes = [1, 8], strides = [1, 1]} : vector<7x8xf32> to vector<1x8xf32>
    %97 = vector.broadcast %95 : vector<18x1xf32> to vector<18x8xf32>
    %98 = vector.broadcast %96 : vector<1x8xf32> to vector<18x8xf32>
    %99 = arith.mulf %97, %98 : vector<18x8xf32>
    %100 = arith.addf %94, %99 : vector<18x8xf32>
    %101 = vector.extract_strided_slice %89 {offsets = [0, 2], sizes = [18, 1], strides = [1, 1]} : vector<18x7xf32> to vector<18x1xf32>
    %102 = vector.extract_strided_slice %76 {offsets = [2, 0], sizes = [1, 8], strides = [1, 1]} : vector<7x8xf32> to vector<1x8xf32>
    %103 = vector.broadcast %101 : vector<18x1xf32> to vector<18x8xf32>
    %104 = vector.broadcast %102 : vector<1x8xf32> to vector<18x8xf32>
    %105 = arith.mulf %103, %104 : vector<18x8xf32>
    %106 = arith.addf %100, %105 : vector<18x8xf32>
    %107 = vector.extract_strided_slice %89 {offsets = [0, 3], sizes = [18, 1], strides = [1, 1]} : vector<18x7xf32> to vector<18x1xf32>
    %108 = vector.extract_strided_slice %76 {offsets = [3, 0], sizes = [1, 8], strides = [1, 1]} : vector<7x8xf32> to vector<1x8xf32>
    %109 = vector.broadcast %107 : vector<18x1xf32> to vector<18x8xf32>
    %110 = vector.broadcast %108 : vector<1x8xf32> to vector<18x8xf32>
    %111 = arith.mulf %109, %110 : vector<18x8xf32>
    %112 = arith.addf %106, %111 : vector<18x8xf32>
    %113 = vector.extract_strided_slice %89 {offsets = [0, 4], sizes = [18, 1], strides = [1, 1]} : vector<18x7xf32> to vector<18x1xf32>
    %114 = vector.extract_strided_slice %76 {offsets = [4, 0], sizes = [1, 8], strides = [1, 1]} : vector<7x8xf32> to vector<1x8xf32>
    %115 = vector.broadcast %113 : vector<18x1xf32> to vector<18x8xf32>
    %116 = vector.broadcast %114 : vector<1x8xf32> to vector<18x8xf32>
    %117 = arith.mulf %115, %116 : vector<18x8xf32>
    %118 = arith.addf %112, %117 : vector<18x8xf32>
    %119 = vector.extract_strided_slice %89 {offsets = [0, 5], sizes = [18, 1], strides = [1, 1]} : vector<18x7xf32> to vector<18x1xf32>
    %120 = vector.extract_strided_slice %76 {offsets = [5, 0], sizes = [1, 8], strides = [1, 1]} : vector<7x8xf32> to vector<1x8xf32>
    %121 = vector.broadcast %119 : vector<18x1xf32> to vector<18x8xf32>
    %122 = vector.broadcast %120 : vector<1x8xf32> to vector<18x8xf32>
    %123 = arith.mulf %121, %122 : vector<18x8xf32>
    %124 = arith.addf %118, %123 : vector<18x8xf32>
    %125 = vector.extract_strided_slice %89 {offsets = [0, 6], sizes = [18, 1], strides = [1, 1]} : vector<18x7xf32> to vector<18x1xf32>
    %126 = vector.extract_strided_slice %76 {offsets = [6, 0], sizes = [1, 8], strides = [1, 1]} : vector<7x8xf32> to vector<1x8xf32>
    %127 = vector.broadcast %125 : vector<18x1xf32> to vector<18x8xf32>
    %128 = vector.broadcast %126 : vector<1x8xf32> to vector<18x8xf32>
    %129 = arith.mulf %127, %128 : vector<18x8xf32>
    %130 = arith.addf %124, %129 : vector<18x8xf32>
    %131 = arith.addf %88, %130 : vector<18x8xf32>
    %c0_5 = arith.constant 0 : index
    %c0_6 = arith.constant 0 : index
    %132 = vector.load %arg3[%c0_5, %c0_6] : memref<18x1xf32, #tpu.memory_space<vmem>>, vector<18x1xf32>
    %133 = vector.broadcast %132 : vector<18x1xf32> to vector<18x8xf32>
    %134 = arith.addf %131, %133 : vector<18x8xf32>
    %cst = arith.constant dense<0.000000e+00> : vector<18xf32>
    %135 = vector.multi_reduction <add>, %134, %cst [1] : vector<18x8xf32> to vector<18xf32>
    %136 = vector.shape_cast %135 : vector<18xf32> to vector<18x1xf32>
    %cst_7 = arith.constant 8.000000e+00 : f32
    %137 = vector.broadcast %cst_7 : f32 to vector<18x1xf32>
    %138 = arith.divf %136, %137 : vector<18x1xf32>
    %139 = vector.broadcast %138 : vector<18x1xf32> to vector<18x8xf32>
    %140 = arith.subf %134, %139 : vector<18x8xf32>
    %141 = arith.mulf %140, %140 : vector<18x8xf32>
    %cst_8 = arith.constant dense<0.000000e+00> : vector<18xf32>
    %142 = vector.multi_reduction <add>, %141, %cst_8 [1] : vector<18x8xf32> to vector<18xf32>
    %143 = vector.shape_cast %142 : vector<18xf32> to vector<18x1xf32>
    %cst_9 = arith.constant 8.000000e+00 : f32
    %144 = vector.broadcast %cst_9 : f32 to vector<18x1xf32>
    %145 = arith.divf %143, %144 : vector<18x1xf32>
    %146 = vector.broadcast %138 : vector<18x1xf32> to vector<18x8xf32>
    %147 = arith.subf %134, %146 : vector<18x8xf32>
    %cst_10 = arith.constant 9.99999974E-6 : f32
    %148 = vector.broadcast %cst_10 : f32 to vector<18x1xf32>
    %149 = arith.addf %145, %148 : vector<18x1xf32>
    %150 = math.rsqrt %149 : vector<18x1xf32>
    %151 = vector.broadcast %150 : vector<18x1xf32> to vector<18x8xf32>
    %152 = arith.mulf %147, %151 : vector<18x8xf32>
    %c0_11 = arith.constant 0 : index
    %c0_12 = arith.constant 0 : index
    %153 = vector.load %arg4[%c0_11, %c0_12] : memref<18x1xf32, #tpu.memory_space<vmem>>, vector<18x1xf32>
    %154 = vector.broadcast %153 : vector<18x1xf32> to vector<18x8xf32>
    %155 = arith.mulf %152, %154 : vector<18x8xf32>
    %c0_13 = arith.constant 0 : index
    %c0_14 = arith.constant 0 : index
    %156 = vector.load %arg5[%c0_13, %c0_14] : memref<18x1xf32, #tpu.memory_space<vmem>>, vector<18x1xf32>
    %157 = vector.broadcast %156 : vector<18x1xf32> to vector<18x8xf32>
    %158 = arith.addf %155, %157 : vector<18x8xf32>
    %cst_15 = arith.constant 0.000000e+00 : f32
    %159 = vector.broadcast %cst_15 : f32 to vector<18x8xf32>
    %160 = arith.maximumf %158, %159 : vector<18x8xf32>
    %c0_16 = arith.constant 0 : index
    %c0_17 = arith.constant 0 : index
    %161 = vector.load %arg6[%c0_16, %c0_17] : memref<9x18xf32, #tpu.memory_space<vmem>>, vector<9x18xf32>
    %162 = vector.extract_strided_slice %161 {offsets = [0, 0], sizes = [9, 1], strides = [1, 1]} : vector<9x18xf32> to vector<9x1xf32>
    %163 = vector.extract_strided_slice %160 {offsets = [0, 0], sizes = [1, 8], strides = [1, 1]} : vector<18x8xf32> to vector<1x8xf32>
    %164 = vector.broadcast %162 : vector<9x1xf32> to vector<9x8xf32>
    %165 = vector.broadcast %163 : vector<1x8xf32> to vector<9x8xf32>
    %166 = arith.mulf %164, %165 : vector<9x8xf32>
    %167 = vector.extract_strided_slice %161 {offsets = [0, 1], sizes = [9, 1], strides = [1, 1]} : vector<9x18xf32> to vector<9x1xf32>
    %168 = vector.extract_strided_slice %160 {offsets = [1, 0], sizes = [1, 8], strides = [1, 1]} : vector<18x8xf32> to vector<1x8xf32>
    %169 = vector.broadcast %167 : vector<9x1xf32> to vector<9x8xf32>
    %170 = vector.broadcast %168 : vector<1x8xf32> to vector<9x8xf32>
    %171 = arith.mulf %169, %170 : vector<9x8xf32>
    %172 = arith.addf %166, %171 : vector<9x8xf32>
    %173 = vector.extract_strided_slice %161 {offsets = [0, 2], sizes = [9, 1], strides = [1, 1]} : vector<9x18xf32> to vector<9x1xf32>
    %174 = vector.extract_strided_slice %160 {offsets = [2, 0], sizes = [1, 8], strides = [1, 1]} : vector<18x8xf32> to vector<1x8xf32>
    %175 = vector.broadcast %173 : vector<9x1xf32> to vector<9x8xf32>
    %176 = vector.broadcast %174 : vector<1x8xf32> to vector<9x8xf32>
    %177 = arith.mulf %175, %176 : vector<9x8xf32>
    %178 = arith.addf %172, %177 : vector<9x8xf32>
    %179 = vector.extract_strided_slice %161 {offsets = [0, 3], sizes = [9, 1], strides = [1, 1]} : vector<9x18xf32> to vector<9x1xf32>
    %180 = vector.extract_strided_slice %160 {offsets = [3, 0], sizes = [1, 8], strides = [1, 1]} : vector<18x8xf32> to vector<1x8xf32>
    %181 = vector.broadcast %179 : vector<9x1xf32> to vector<9x8xf32>
    %182 = vector.broadcast %180 : vector<1x8xf32> to vector<9x8xf32>
    %183 = arith.mulf %181, %182 : vector<9x8xf32>
    %184 = arith.addf %178, %183 : vector<9x8xf32>
    %185 = vector.extract_strided_slice %161 {offsets = [0, 4], sizes = [9, 1], strides = [1, 1]} : vector<9x18xf32> to vector<9x1xf32>
    %186 = vector.extract_strided_slice %160 {offsets = [4, 0], sizes = [1, 8], strides = [1, 1]} : vector<18x8xf32> to vector<1x8xf32>
    %187 = vector.broadcast %185 : vector<9x1xf32> to vector<9x8xf32>
    %188 = vector.broadcast %186 : vector<1x8xf32> to vector<9x8xf32>
    %189 = arith.mulf %187, %188 : vector<9x8xf32>
    %190 = arith.addf %184, %189 : vector<9x8xf32>
    %191 = vector.extract_strided_slice %161 {offsets = [0, 5], sizes = [9, 1], strides = [1, 1]} : vector<9x18xf32> to vector<9x1xf32>
    %192 = vector.extract_strided_slice %160 {offsets = [5, 0], sizes = [1, 8], strides = [1, 1]} : vector<18x8xf32> to vector<1x8xf32>
    %193 = vector.broadcast %191 : vector<9x1xf32> to vector<9x8xf32>
    %194 = vector.broadcast %192 : vector<1x8xf32> to vector<9x8xf32>
    %195 = arith.mulf %193, %194 : vector<9x8xf32>
    %196 = arith.addf %190, %195 : vector<9x8xf32>
    %197 = vector.extract_strided_slice %161 {offsets = [0, 6], sizes = [9, 1], strides = [1, 1]} : vector<9x18xf32> to vector<9x1xf32>
    %198 = vector.extract_strided_slice %160 {offsets = [6, 0], sizes = [1, 8], strides = [1, 1]} : vector<18x8xf32> to vector<1x8xf32>
    %199 = vector.broadcast %197 : vector<9x1xf32> to vector<9x8xf32>
    %200 = vector.broadcast %198 : vector<1x8xf32> to vector<9x8xf32>
    %201 = arith.mulf %199, %200 : vector<9x8xf32>
    %202 = arith.addf %196, %201 : vector<9x8xf32>
    %203 = vector.extract_strided_slice %161 {offsets = [0, 7], sizes = [9, 1], strides = [1, 1]} : vector<9x18xf32> to vector<9x1xf32>
    %204 = vector.extract_strided_slice %160 {offsets = [7, 0], sizes = [1, 8], strides = [1, 1]} : vector<18x8xf32> to vector<1x8xf32>
    %205 = vector.broadcast %203 : vector<9x1xf32> to vector<9x8xf32>
    %206 = vector.broadcast %204 : vector<1x8xf32> to vector<9x8xf32>
    %207 = arith.mulf %205, %206 : vector<9x8xf32>
    %208 = arith.addf %202, %207 : vector<9x8xf32>
    %209 = vector.extract_strided_slice %161 {offsets = [0, 8], sizes = [9, 1], strides = [1, 1]} : vector<9x18xf32> to vector<9x1xf32>
    %210 = vector.extract_strided_slice %160 {offsets = [8, 0], sizes = [1, 8], strides = [1, 1]} : vector<18x8xf32> to vector<1x8xf32>
    %211 = vector.broadcast %209 : vector<9x1xf32> to vector<9x8xf32>
    %212 = vector.broadcast %210 : vector<1x8xf32> to vector<9x8xf32>
    %213 = arith.mulf %211, %212 : vector<9x8xf32>
    %214 = arith.addf %208, %213 : vector<9x8xf32>
    %215 = vector.extract_strided_slice %161 {offsets = [0, 9], sizes = [9, 1], strides = [1, 1]} : vector<9x18xf32> to vector<9x1xf32>
    %216 = vector.extract_strided_slice %160 {offsets = [9, 0], sizes = [1, 8], strides = [1, 1]} : vector<18x8xf32> to vector<1x8xf32>
    %217 = vector.broadcast %215 : vector<9x1xf32> to vector<9x8xf32>
    %218 = vector.broadcast %216 : vector<1x8xf32> to vector<9x8xf32>
    %219 = arith.mulf %217, %218 : vector<9x8xf32>
    %220 = arith.addf %214, %219 : vector<9x8xf32>
    %221 = vector.extract_strided_slice %161 {offsets = [0, 10], sizes = [9, 1], strides = [1, 1]} : vector<9x18xf32> to vector<9x1xf32>
    %222 = vector.extract_strided_slice %160 {offsets = [10, 0], sizes = [1, 8], strides = [1, 1]} : vector<18x8xf32> to vector<1x8xf32>
    %223 = vector.broadcast %221 : vector<9x1xf32> to vector<9x8xf32>
    %224 = vector.broadcast %222 : vector<1x8xf32> to vector<9x8xf32>
    %225 = arith.mulf %223, %224 : vector<9x8xf32>
    %226 = arith.addf %220, %225 : vector<9x8xf32>
    %227 = vector.extract_strided_slice %161 {offsets = [0, 11], sizes = [9, 1], strides = [1, 1]} : vector<9x18xf32> to vector<9x1xf32>
    %228 = vector.extract_strided_slice %160 {offsets = [11, 0], sizes = [1, 8], strides = [1, 1]} : vector<18x8xf32> to vector<1x8xf32>
    %229 = vector.broadcast %227 : vector<9x1xf32> to vector<9x8xf32>
    %230 = vector.broadcast %228 : vector<1x8xf32> to vector<9x8xf32>
    %231 = arith.mulf %229, %230 : vector<9x8xf32>
    %232 = arith.addf %226, %231 : vector<9x8xf32>
    %233 = vector.extract_strided_slice %161 {offsets = [0, 12], sizes = [9, 1], strides = [1, 1]} : vector<9x18xf32> to vector<9x1xf32>
    %234 = vector.extract_strided_slice %160 {offsets = [12, 0], sizes = [1, 8], strides = [1, 1]} : vector<18x8xf32> to vector<1x8xf32>
    %235 = vector.broadcast %233 : vector<9x1xf32> to vector<9x8xf32>
    %236 = vector.broadcast %234 : vector<1x8xf32> to vector<9x8xf32>
    %237 = arith.mulf %235, %236 : vector<9x8xf32>
    %238 = arith.addf %232, %237 : vector<9x8xf32>
    %239 = vector.extract_strided_slice %161 {offsets = [0, 13], sizes = [9, 1], strides = [1, 1]} : vector<9x18xf32> to vector<9x1xf32>
    %240 = vector.extract_strided_slice %160 {offsets = [13, 0], sizes = [1, 8], strides = [1, 1]} : vector<18x8xf32> to vector<1x8xf32>
    %241 = vector.broadcast %239 : vector<9x1xf32> to vector<9x8xf32>
    %242 = vector.broadcast %240 : vector<1x8xf32> to vector<9x8xf32>
    %243 = arith.mulf %241, %242 : vector<9x8xf32>
    %244 = arith.addf %238, %243 : vector<9x8xf32>
    %245 = vector.extract_strided_slice %161 {offsets = [0, 14], sizes = [9, 1], strides = [1, 1]} : vector<9x18xf32> to vector<9x1xf32>
    %246 = vector.extract_strided_slice %160 {offsets = [14, 0], sizes = [1, 8], strides = [1, 1]} : vector<18x8xf32> to vector<1x8xf32>
    %247 = vector.broadcast %245 : vector<9x1xf32> to vector<9x8xf32>
    %248 = vector.broadcast %246 : vector<1x8xf32> to vector<9x8xf32>
    %249 = arith.mulf %247, %248 : vector<9x8xf32>
    %250 = arith.addf %244, %249 : vector<9x8xf32>
    %251 = vector.extract_strided_slice %161 {offsets = [0, 15], sizes = [9, 1], strides = [1, 1]} : vector<9x18xf32> to vector<9x1xf32>
    %252 = vector.extract_strided_slice %160 {offsets = [15, 0], sizes = [1, 8], strides = [1, 1]} : vector<18x8xf32> to vector<1x8xf32>
    %253 = vector.broadcast %251 : vector<9x1xf32> to vector<9x8xf32>
    %254 = vector.broadcast %252 : vector<1x8xf32> to vector<9x8xf32>
    %255 = arith.mulf %253, %254 : vector<9x8xf32>
    %256 = arith.addf %250, %255 : vector<9x8xf32>
    %257 = vector.extract_strided_slice %161 {offsets = [0, 16], sizes = [9, 1], strides = [1, 1]} : vector<9x18xf32> to vector<9x1xf32>
    %258 = vector.extract_strided_slice %160 {offsets = [16, 0], sizes = [1, 8], strides = [1, 1]} : vector<18x8xf32> to vector<1x8xf32>
    %259 = vector.broadcast %257 : vector<9x1xf32> to vector<9x8xf32>
    %260 = vector.broadcast %258 : vector<1x8xf32> to vector<9x8xf32>
    %261 = arith.mulf %259, %260 : vector<9x8xf32>
    %262 = arith.addf %256, %261 : vector<9x8xf32>
    %263 = vector.extract_strided_slice %161 {offsets = [0, 17], sizes = [9, 1], strides = [1, 1]} : vector<9x18xf32> to vector<9x1xf32>
    %264 = vector.extract_strided_slice %160 {offsets = [17, 0], sizes = [1, 8], strides = [1, 1]} : vector<18x8xf32> to vector<1x8xf32>
    %265 = vector.broadcast %263 : vector<9x1xf32> to vector<9x8xf32>
    %266 = vector.broadcast %264 : vector<1x8xf32> to vector<9x8xf32>
    %267 = arith.mulf %265, %266 : vector<9x8xf32>
    %268 = arith.addf %262, %267 : vector<9x8xf32>
    %c0_18 = arith.constant 0 : index
    %c0_19 = arith.constant 0 : index
    %269 = vector.load %arg7[%c0_18, %c0_19] : memref<9x1xf32, #tpu.memory_space<vmem>>, vector<9x1xf32>
    %270 = vector.broadcast %269 : vector<9x1xf32> to vector<9x8xf32>
    %271 = arith.addf %268, %270 : vector<9x8xf32>
    %cst_20 = arith.constant dense<0.000000e+00> : vector<9xf32>
    %272 = vector.multi_reduction <add>, %271, %cst_20 [1] : vector<9x8xf32> to vector<9xf32>
    %273 = vector.shape_cast %272 : vector<9xf32> to vector<9x1xf32>
    %cst_21 = arith.constant 8.000000e+00 : f32
    %274 = vector.broadcast %cst_21 : f32 to vector<9x1xf32>
    %275 = arith.divf %273, %274 : vector<9x1xf32>
    %276 = vector.broadcast %275 : vector<9x1xf32> to vector<9x8xf32>
    %277 = arith.subf %271, %276 : vector<9x8xf32>
    %278 = arith.mulf %277, %277 : vector<9x8xf32>
    %cst_22 = arith.constant dense<0.000000e+00> : vector<9xf32>
    %279 = vector.multi_reduction <add>, %278, %cst_22 [1] : vector<9x8xf32> to vector<9xf32>
    %280 = vector.shape_cast %279 : vector<9xf32> to vector<9x1xf32>
    %cst_23 = arith.constant 8.000000e+00 : f32
    %281 = vector.broadcast %cst_23 : f32 to vector<9x1xf32>
    %282 = arith.divf %280, %281 : vector<9x1xf32>
    %283 = vector.broadcast %275 : vector<9x1xf32> to vector<9x8xf32>
    %284 = arith.subf %271, %283 : vector<9x8xf32>
    %cst_24 = arith.constant 9.99999974E-6 : f32
    %285 = vector.broadcast %cst_24 : f32 to vector<9x1xf32>
    %286 = arith.addf %282, %285 : vector<9x1xf32>
    %287 = math.rsqrt %286 : vector<9x1xf32>
    %288 = vector.broadcast %287 : vector<9x1xf32> to vector<9x8xf32>
    %289 = arith.mulf %284, %288 : vector<9x8xf32>
    %c0_25 = arith.constant 0 : index
    %c0_26 = arith.constant 0 : index
    %290 = vector.load %arg8[%c0_25, %c0_26] : memref<9x1xf32, #tpu.memory_space<vmem>>, vector<9x1xf32>
    %291 = vector.broadcast %290 : vector<9x1xf32> to vector<9x8xf32>
    %292 = arith.mulf %289, %291 : vector<9x8xf32>
    %c0_27 = arith.constant 0 : index
    %c0_28 = arith.constant 0 : index
    %293 = vector.load %arg9[%c0_27, %c0_28] : memref<9x1xf32, #tpu.memory_space<vmem>>, vector<9x1xf32>
    %294 = vector.broadcast %293 : vector<9x1xf32> to vector<9x8xf32>
    %295 = arith.addf %292, %294 : vector<9x8xf32>
    %cst_29 = arith.constant 0.000000e+00 : f32
    %296 = vector.broadcast %cst_29 : f32 to vector<9x8xf32>
    %297 = arith.maximumf %295, %296 : vector<9x8xf32>
    %c0_30 = arith.constant 0 : index
    %c0_31 = arith.constant 0 : index
    %298 = vector.load %arg10[%c0_30, %c0_31] : memref<16x1xf32, #tpu.memory_space<vmem>>, vector<16x1xf32>
    %c0_32 = arith.constant 0 : index
    %c0_33 = arith.constant 0 : index
    %299 = vector.load %arg11[%c0_32, %c0_33] : memref<16x1xf32, #tpu.memory_space<vmem>>, vector<16x1xf32>
    %c0_34 = arith.constant 0 : index
    %c0_35 = arith.constant 0 : index
    %300 = vector.load %arg12[%c0_34, %c0_35] : memref<16x4xf32, #tpu.memory_space<vmem>>, vector<16x4xf32>
    %c0_36 = arith.constant 0 : index
    %c0_37 = arith.constant 0 : index
    %301 = vector.load %arg13[%c0_36, %c0_37] : memref<16x1xf32, #tpu.memory_space<vmem>>, vector<16x1xf32>
    %cst_38 = arith.constant 0.000000e+00 : f32
    %302 = vector.broadcast %cst_38 : f32 to vector<4x8xf32>
    %cst_39 = arith.constant 0.000000e+00 : f32
    %303 = vector.broadcast %cst_39 : f32 to vector<4x8xf32>
    %304 = vector.extract_strided_slice %297 {offsets = [0, 0], sizes = [1, 8], strides = [1, 1]} : vector<9x8xf32> to vector<1x8xf32>
    %305 = vector.broadcast %298 : vector<16x1xf32> to vector<16x8xf32>
    %306 = vector.broadcast %304 : vector<1x8xf32> to vector<16x8xf32>
    %307 = arith.mulf %305, %306 : vector<16x8xf32>
    %308 = vector.extract_strided_slice %297 {offsets = [8, 0], sizes = [1, 8], strides = [1, 1]} : vector<9x8xf32> to vector<1x8xf32>
    %309 = vector.broadcast %299 : vector<16x1xf32> to vector<16x8xf32>
    %310 = vector.broadcast %308 : vector<1x8xf32> to vector<16x8xf32>
    %311 = arith.mulf %309, %310 : vector<16x8xf32>
    %312 = arith.addf %307, %311 : vector<16x8xf32>
    %313 = vector.extract_strided_slice %300 {offsets = [0, 0], sizes = [16, 1], strides = [1, 1]} : vector<16x4xf32> to vector<16x1xf32>
    %314 = vector.extract_strided_slice %302 {offsets = [0, 0], sizes = [1, 8], strides = [1, 1]} : vector<4x8xf32> to vector<1x8xf32>
    %315 = vector.broadcast %313 : vector<16x1xf32> to vector<16x8xf32>
    %316 = vector.broadcast %314 : vector<1x8xf32> to vector<16x8xf32>
    %317 = arith.mulf %315, %316 : vector<16x8xf32>
    %318 = vector.extract_strided_slice %300 {offsets = [0, 1], sizes = [16, 1], strides = [1, 1]} : vector<16x4xf32> to vector<16x1xf32>
    %319 = vector.extract_strided_slice %302 {offsets = [1, 0], sizes = [1, 8], strides = [1, 1]} : vector<4x8xf32> to vector<1x8xf32>
    %320 = vector.broadcast %318 : vector<16x1xf32> to vector<16x8xf32>
    %321 = vector.broadcast %319 : vector<1x8xf32> to vector<16x8xf32>
    %322 = arith.mulf %320, %321 : vector<16x8xf32>
    %323 = arith.addf %317, %322 : vector<16x8xf32>
    %324 = vector.extract_strided_slice %300 {offsets = [0, 2], sizes = [16, 1], strides = [1, 1]} : vector<16x4xf32> to vector<16x1xf32>
    %325 = vector.extract_strided_slice %302 {offsets = [2, 0], sizes = [1, 8], strides = [1, 1]} : vector<4x8xf32> to vector<1x8xf32>
    %326 = vector.broadcast %324 : vector<16x1xf32> to vector<16x8xf32>
    %327 = vector.broadcast %325 : vector<1x8xf32> to vector<16x8xf32>
    %328 = arith.mulf %326, %327 : vector<16x8xf32>
    %329 = arith.addf %323, %328 : vector<16x8xf32>
    %330 = vector.extract_strided_slice %300 {offsets = [0, 3], sizes = [16, 1], strides = [1, 1]} : vector<16x4xf32> to vector<16x1xf32>
    %331 = vector.extract_strided_slice %302 {offsets = [3, 0], sizes = [1, 8], strides = [1, 1]} : vector<4x8xf32> to vector<1x8xf32>
    %332 = vector.broadcast %330 : vector<16x1xf32> to vector<16x8xf32>
    %333 = vector.broadcast %331 : vector<1x8xf32> to vector<16x8xf32>
    %334 = arith.mulf %332, %333 : vector<16x8xf32>
    %335 = arith.addf %329, %334 : vector<16x8xf32>
    %336 = arith.addf %312, %335 : vector<16x8xf32>
    %337 = vector.broadcast %301 : vector<16x1xf32> to vector<16x8xf32>
    %338 = arith.addf %336, %337 : vector<16x8xf32>
    %339 = vector.extract_strided_slice %338 {offsets = [0, 0], sizes = [12, 8], strides = [1, 1]} : vector<16x8xf32> to vector<12x8xf32>
    %340 = arith.negf %339 : vector<12x8xf32>
    %341 = math.exp %340 : vector<12x8xf32>
    %cst_40 = arith.constant 1.000000e+00 : f32
    %342 = vector.broadcast %cst_40 : f32 to vector<12x8xf32>
    %343 = arith.addf %342, %341 : vector<12x8xf32>
    %344 = arith.divf %342, %343 : vector<12x8xf32>
    %345 = vector.extract_strided_slice %338 {offsets = [12, 0], sizes = [4, 8], strides = [1, 1]} : vector<16x8xf32> to vector<4x8xf32>
    %346 = math.tanh %345 : vector<4x8xf32>
    %347 = vector.extract_strided_slice %344 {offsets = [0, 0], sizes = [4, 8], strides = [1, 1]} : vector<12x8xf32> to vector<4x8xf32>
    %348 = vector.extract_strided_slice %344 {offsets = [4, 0], sizes = [4, 8], strides = [1, 1]} : vector<12x8xf32> to vector<4x8xf32>
    %349 = vector.extract_strided_slice %344 {offsets = [8, 0], sizes = [4, 8], strides = [1, 1]} : vector<12x8xf32> to vector<4x8xf32>
    %350 = arith.mulf %348, %303 : vector<4x8xf32>
    %351 = arith.mulf %347, %346 : vector<4x8xf32>
    %352 = arith.addf %350, %351 : vector<4x8xf32>
    %353 = math.tanh %352 : vector<4x8xf32>
    %354 = arith.mulf %349, %353 : vector<4x8xf32>
    %cst_41 = arith.constant 0.000000e+00 : f32
    %355 = vector.broadcast %cst_41 : f32 to vector<4x8xf32>
    %356 = arith.maximumf %354, %355 : vector<4x8xf32>
    %357 = vector.extract_strided_slice %356 {offsets = [0, 0], sizes = [2, 8], strides = [1, 1]} : vector<4x8xf32> to vector<2x8xf32>
    %c0_42 = arith.constant 0 : index
    %c0_43 = arith.constant 0 : index
    %c0_44 = arith.constant 0 : index
    %358 = vector.load %arg19[%c0_42, %c0_43, %c0_44] : memref<9x4x8xf32, #tpu.memory_space<vmem>>, vector<1x2x8xf32>
    %359 = vector.shape_cast %358 : vector<1x2x8xf32> to vector<2x8xf32>
    %360 = vector.shape_cast %357 : vector<2x8xf32> to vector<1x2x8xf32>
    tpu.vector_store %arg19[%c0_42, %c0_43, %c0_44], %360 {strides = array<i32>} : memref<9x4x8xf32, #tpu.memory_space<vmem>>, vector<1x2x8xf32>,
    %361 = vector.extract_strided_slice %356 {offsets = [2, 0], sizes = [2, 8], strides = [1, 1]} : vector<4x8xf32> to vector<2x8xf32>
    %c8 = arith.constant 8 : index
    %c2 = arith.constant 2 : index
    %c0_45 = arith.constant 0 : index
    %362 = vector.load %arg19[%c8, %c2, %c0_45] : memref<9x4x8xf32, #tpu.memory_space<vmem>>, vector<1x2x8xf32>
    %363 = vector.shape_cast %362 : vector<1x2x8xf32> to vector<2x8xf32>
    %364 = vector.shape_cast %361 : vector<2x8xf32> to vector<1x2x8xf32>
    tpu.vector_store %arg19[%c8, %c2, %c0_45], %364 {strides = array<i32>} : memref<9x4x8xf32, #tpu.memory_space<vmem>>, vector<1x2x8xf32>,
    %365 = vector.extract_strided_slice %297 {offsets = [1, 0], sizes = [1, 8], strides = [1, 1]} : vector<9x8xf32> to vector<1x8xf32>
    %366 = vector.broadcast %298 : vector<16x1xf32> to vector<16x8xf32>
    %367 = vector.broadcast %365 : vector<1x8xf32> to vector<16x8xf32>
    %368 = arith.mulf %366, %367 : vector<16x8xf32>
    %369 = vector.extract_strided_slice %297 {offsets = [7, 0], sizes = [1, 8], strides = [1, 1]} : vector<9x8xf32> to vector<1x8xf32>
    %370 = vector.broadcast %299 : vector<16x1xf32> to vector<16x8xf32>
    %371 = vector.broadcast %369 : vector<1x8xf32> to vector<16x8xf32>
    %372 = arith.mulf %370, %371 : vector<16x8xf32>
    %373 = arith.addf %368, %372 : vector<16x8xf32>
    %374 = vector.extract_strided_slice %300 {offsets = [0, 0], sizes = [16, 1], strides = [1, 1]} : vector<16x4xf32> to vector<16x1xf32>
    %375 = vector.extract_strided_slice %354 {offsets = [0, 0], sizes = [1, 8], strides = [1, 1]} : vector<4x8xf32> to vector<1x8xf32>
    %376 = vector.broadcast %374 : vector<16x1xf32> to vector<16x8xf32>
    %377 = vector.broadcast %375 : vector<1x8xf32> to vector<16x8xf32>
    %378 = arith.mulf %376, %377 : vector<16x8xf32>
    %379 = vector.extract_strided_slice %300 {offsets = [0, 1], sizes = [16, 1], strides = [1, 1]} : vector<16x4xf32> to vector<16x1xf32>
    %380 = vector.extract_strided_slice %354 {offsets = [1, 0], sizes = [1, 8], strides = [1, 1]} : vector<4x8xf32> to vector<1x8xf32>
    %381 = vector.broadcast %379 : vector<16x1xf32> to vector<16x8xf32>
    %382 = vector.broadcast %380 : vector<1x8xf32> to vector<16x8xf32>
    %383 = arith.mulf %381, %382 : vector<16x8xf32>
    %384 = arith.addf %378, %383 : vector<16x8xf32>
    %385 = vector.extract_strided_slice %300 {offsets = [0, 2], sizes = [16, 1], strides = [1, 1]} : vector<16x4xf32> to vector<16x1xf32>
    %386 = vector.extract_strided_slice %354 {offsets = [2, 0], sizes = [1, 8], strides = [1, 1]} : vector<4x8xf32> to vector<1x8xf32>
    %387 = vector.broadcast %385 : vector<16x1xf32> to vector<16x8xf32>
    %388 = vector.broadcast %386 : vector<1x8xf32> to vector<16x8xf32>
    %389 = arith.mulf %387, %388 : vector<16x8xf32>
    %390 = arith.addf %384, %389 : vector<16x8xf32>
    %391 = vector.extract_strided_slice %300 {offsets = [0, 3], sizes = [16, 1], strides = [1, 1]} : vector<16x4xf32> to vector<16x1xf32>
    %392 = vector.extract_strided_slice %354 {offsets = [3, 0], sizes = [1, 8], strides = [1, 1]} : vector<4x8xf32> to vector<1x8xf32>
    %393 = vector.broadcast %391 : vector<16x1xf32> to vector<16x8xf32>
    %394 = vector.broadcast %392 : vector<1x8xf32> to vector<16x8xf32>
    %395 = arith.mulf %393, %394 : vector<16x8xf32>
    %396 = arith.addf %390, %395 : vector<16x8xf32>
    %397 = arith.addf %373, %396 : vector<16x8xf32>
    %398 = vector.broadcast %301 : vector<16x1xf32> to vector<16x8xf32>
    %399 = arith.addf %397, %398 : vector<16x8xf32>
    %400 = vector.extract_strided_slice %399 {offsets = [0, 0], sizes = [12, 8], strides = [1, 1]} : vector<16x8xf32> to vector<12x8xf32>
    %401 = arith.negf %400 : vector<12x8xf32>
    %402 = math.exp %401 : vector<12x8xf32>
    %cst_46 = arith.constant 1.000000e+00 : f32
    %403 = vector.broadcast %cst_46 : f32 to vector<12x8xf32>
    %404 = arith.addf %403, %402 : vector<12x8xf32>
    %405 = arith.divf %403, %404 : vector<12x8xf32>
    %406 = vector.extract_strided_slice %399 {offsets = [12, 0], sizes = [4, 8], strides = [1, 1]} : vector<16x8xf32> to vector<4x8xf32>
    %407 = math.tanh %406 : vector<4x8xf32>
    %408 = vector.extract_strided_slice %405 {offsets = [0, 0], sizes = [4, 8], strides = [1, 1]} : vector<12x8xf32> to vector<4x8xf32>
    %409 = vector.extract_strided_slice %405 {offsets = [4, 0], sizes = [4, 8], strides = [1, 1]} : vector<12x8xf32> to vector<4x8xf32>
    %410 = vector.extract_strided_slice %405 {offsets = [8, 0], sizes = [4, 8], strides = [1, 1]} : vector<12x8xf32> to vector<4x8xf32>
    %411 = arith.mulf %409, %352 : vector<4x8xf32>
    %412 = arith.mulf %408, %407 : vector<4x8xf32>
    %413 = arith.addf %411, %412 : vector<4x8xf32>
    %414 = math.tanh %413 : vector<4x8xf32>
    %415 = arith.mulf %410, %414 : vector<4x8xf32>
    %cst_47 = arith.constant 0.000000e+00 : f32
    %416 = vector.broadcast %cst_47 : f32 to vector<4x8xf32>
    %417 = arith.maximumf %415, %416 : vector<4x8xf32>
    %418 = vector.extract_strided_slice %417 {offsets = [0, 0], sizes = [2, 8], strides = [1, 1]} : vector<4x8xf32> to vector<2x8xf32>
    %c1 = arith.constant 1 : index
    %c0_48 = arith.constant 0 : index
    %c0_49 = arith.constant 0 : index
    %419 = vector.load %arg19[%c1, %c0_48, %c0_49] : memref<9x4x8xf32, #tpu.memory_space<vmem>>, vector<1x2x8xf32>
    %420 = vector.shape_cast %419 : vector<1x2x8xf32> to vector<2x8xf32>
    %421 = vector.shape_cast %418 : vector<2x8xf32> to vector<1x2x8xf32>
    tpu.vector_store %arg19[%c1, %c0_48, %c0_49], %421 {strides = array<i32>} : memref<9x4x8xf32, #tpu.memory_space<vmem>>, vector<1x2x8xf32>,
    %422 = vector.extract_strided_slice %417 {offsets = [2, 0], sizes = [2, 8], strides = [1, 1]} : vector<4x8xf32> to vector<2x8xf32>
    %c7 = arith.constant 7 : index
    %c2_50 = arith.constant 2 : index
    %c0_51 = arith.constant 0 : index
    %423 = vector.load %arg19[%c7, %c2_50, %c0_51] : memref<9x4x8xf32, #tpu.memory_space<vmem>>, vector<1x2x8xf32>
    %424 = vector.shape_cast %423 : vector<1x2x8xf32> to vector<2x8xf32>
    %425 = vector.shape_cast %422 : vector<2x8xf32> to vector<1x2x8xf32>
    tpu.vector_store %arg19[%c7, %c2_50, %c0_51], %425 {strides = array<i32>} : memref<9x4x8xf32, #tpu.memory_space<vmem>>, vector<1x2x8xf32>,
    %426 = vector.extract_strided_slice %297 {offsets = [2, 0], sizes = [1, 8], strides = [1, 1]} : vector<9x8xf32> to vector<1x8xf32>
    %427 = vector.broadcast %298 : vector<16x1xf32> to vector<16x8xf32>
    %428 = vector.broadcast %426 : vector<1x8xf32> to vector<16x8xf32>
    %429 = arith.mulf %427, %428 : vector<16x8xf32>
    %430 = vector.extract_strided_slice %297 {offsets = [6, 0], sizes = [1, 8], strides = [1, 1]} : vector<9x8xf32> to vector<1x8xf32>
    %431 = vector.broadcast %299 : vector<16x1xf32> to vector<16x8xf32>
    %432 = vector.broadcast %430 : vector<1x8xf32> to vector<16x8xf32>
    %433 = arith.mulf %431, %432 : vector<16x8xf32>
    %434 = arith.addf %429, %433 : vector<16x8xf32>
    %435 = vector.extract_strided_slice %300 {offsets = [0, 0], sizes = [16, 1], strides = [1, 1]} : vector<16x4xf32> to vector<16x1xf32>
    %436 = vector.extract_strided_slice %415 {offsets = [0, 0], sizes = [1, 8], strides = [1, 1]} : vector<4x8xf32> to vector<1x8xf32>
    %437 = vector.broadcast %435 : vector<16x1xf32> to vector<16x8xf32>
    %438 = vector.broadcast %436 : vector<1x8xf32> to vector<16x8xf32>
    %439 = arith.mulf %437, %438 : vector<16x8xf32>
    %440 = vector.extract_strided_slice %300 {offsets = [0, 1], sizes = [16, 1], strides = [1, 1]} : vector<16x4xf32> to vector<16x1xf32>
    %441 = vector.extract_strided_slice %415 {offsets = [1, 0], sizes = [1, 8], strides = [1, 1]} : vector<4x8xf32> to vector<1x8xf32>
    %442 = vector.broadcast %440 : vector<16x1xf32> to vector<16x8xf32>
    %443 = vector.broadcast %441 : vector<1x8xf32> to vector<16x8xf32>
    %444 = arith.mulf %442, %443 : vector<16x8xf32>
    %445 = arith.addf %439, %444 : vector<16x8xf32>
    %446 = vector.extract_strided_slice %300 {offsets = [0, 2], sizes = [16, 1], strides = [1, 1]} : vector<16x4xf32> to vector<16x1xf32>
    %447 = vector.extract_strided_slice %415 {offsets = [2, 0], sizes = [1, 8], strides = [1, 1]} : vector<4x8xf32> to vector<1x8xf32>
    %448 = vector.broadcast %446 : vector<16x1xf32> to vector<16x8xf32>
    %449 = vector.broadcast %447 : vector<1x8xf32> to vector<16x8xf32>
    %450 = arith.mulf %448, %449 : vector<16x8xf32>
    %451 = arith.addf %445, %450 : vector<16x8xf32>
    %452 = vector.extract_strided_slice %300 {offsets = [0, 3], sizes = [16, 1], strides = [1, 1]} : vector<16x4xf32> to vector<16x1xf32>
    %453 = vector.extract_strided_slice %415 {offsets = [3, 0], sizes = [1, 8], strides = [1, 1]} : vector<4x8xf32> to vector<1x8xf32>
    %454 = vector.broadcast %452 : vector<16x1xf32> to vector<16x8xf32>
    %455 = vector.broadcast %453 : vector<1x8xf32> to vector<16x8xf32>
    %456 = arith.mulf %454, %455 : vector<16x8xf32>
    %457 = arith.addf %451, %456 : vector<16x8xf32>
    %458 = arith.addf %434, %457 : vector<16x8xf32>
    %459 = vector.broadcast %301 : vector<16x1xf32> to vector<16x8xf32>
    %460 = arith.addf %458, %459 : vector<16x8xf32>
    %461 = vector.extract_strided_slice %460 {offsets = [0, 0], sizes = [12, 8], strides = [1, 1]} : vector<16x8xf32> to vector<12x8xf32>
    %462 = arith.negf %461 : vector<12x8xf32>
    %463 = math.exp %462 : vector<12x8xf32>
    %cst_52 = arith.constant 1.000000e+00 : f32
    %464 = vector.broadcast %cst_52 : f32 to vector<12x8xf32>
    %465 = arith.addf %464, %463 : vector<12x8xf32>
    %466 = arith.divf %464, %465 : vector<12x8xf32>
    %467 = vector.extract_strided_slice %460 {offsets = [12, 0], sizes = [4, 8], strides = [1, 1]} : vector<16x8xf32> to vector<4x8xf32>
    %468 = math.tanh %467 : vector<4x8xf32>
    %469 = vector.extract_strided_slice %466 {offsets = [0, 0], sizes = [4, 8], strides = [1, 1]} : vector<12x8xf32> to vector<4x8xf32>
    %470 = vector.extract_strided_slice %466 {offsets = [4, 0], sizes = [4, 8], strides = [1, 1]} : vector<12x8xf32> to vector<4x8xf32>
    %471 = vector.extract_strided_slice %466 {offsets = [8, 0], sizes = [4, 8], strides = [1, 1]} : vector<12x8xf32> to vector<4x8xf32>
    %472 = arith.mulf %470, %413 : vector<4x8xf32>
    %473 = arith.mulf %469, %468 : vector<4x8xf32>
    %474 = arith.addf %472, %473 : vector<4x8xf32>
    %475 = math.tanh %474 : vector<4x8xf32>
    %476 = arith.mulf %471, %475 : vector<4x8xf32>
    %cst_53 = arith.constant 0.000000e+00 : f32
    %477 = vector.broadcast %cst_53 : f32 to vector<4x8xf32>
    %478 = arith.maximumf %476, %477 : vector<4x8xf32>
    %479 = vector.extract_strided_slice %478 {offsets = [0, 0], sizes = [2, 8], strides = [1, 1]} : vector<4x8xf32> to vector<2x8xf32>
    %c2_54 = arith.constant 2 : index
    %c0_55 = arith.constant 0 : index
    %c0_56 = arith.constant 0 : index
    %480 = vector.load %arg19[%c2_54, %c0_55, %c0_56] : memref<9x4x8xf32, #tpu.memory_space<vmem>>, vector<1x2x8xf32>
    %481 = vector.shape_cast %480 : vector<1x2x8xf32> to vector<2x8xf32>
    %482 = vector.shape_cast %479 : vector<2x8xf32> to vector<1x2x8xf32>
    tpu.vector_store %arg19[%c2_54, %c0_55, %c0_56], %482 {strides = array<i32>} : memref<9x4x8xf32, #tpu.memory_space<vmem>>, vector<1x2x8xf32>,
    %483 = vector.extract_strided_slice %478 {offsets = [2, 0], sizes = [2, 8], strides = [1, 1]} : vector<4x8xf32> to vector<2x8xf32>
    %c6 = arith.constant 6 : index
    %c2_57 = arith.constant 2 : index
    %c0_58 = arith.constant 0 : index
    %484 = vector.load %arg19[%c6, %c2_57, %c0_58] : memref<9x4x8xf32, #tpu.memory_space<vmem>>, vector<1x2x8xf32>
    %485 = vector.shape_cast %484 : vector<1x2x8xf32> to vector<2x8xf32>
    %486 = vector.shape_cast %483 : vector<2x8xf32> to vector<1x2x8xf32>
    tpu.vector_store %arg19[%c6, %c2_57, %c0_58], %486 {strides = array<i32>} : memref<9x4x8xf32, #tpu.memory_space<vmem>>, vector<1x2x8xf32>,
    %487 = vector.extract_strided_slice %297 {offsets = [3, 0], sizes = [1, 8], strides = [1, 1]} : vector<9x8xf32> to vector<1x8xf32>
    %488 = vector.broadcast %298 : vector<16x1xf32> to vector<16x8xf32>
    %489 = vector.broadcast %487 : vector<1x8xf32> to vector<16x8xf32>
    %490 = arith.mulf %488, %489 : vector<16x8xf32>
    %491 = vector.extract_strided_slice %297 {offsets = [5, 0], sizes = [1, 8], strides = [1, 1]} : vector<9x8xf32> to vector<1x8xf32>
    %492 = vector.broadcast %299 : vector<16x1xf32> to vector<16x8xf32>
    %493 = vector.broadcast %491 : vector<1x8xf32> to vector<16x8xf32>
    %494 = arith.mulf %492, %493 : vector<16x8xf32>
    %495 = arith.addf %490, %494 : vector<16x8xf32>
    %496 = vector.extract_strided_slice %300 {offsets = [0, 0], sizes = [16, 1], strides = [1, 1]} : vector<16x4xf32> to vector<16x1xf32>
    %497 = vector.extract_strided_slice %476 {offsets = [0, 0], sizes = [1, 8], strides = [1, 1]} : vector<4x8xf32> to vector<1x8xf32>
    %498 = vector.broadcast %496 : vector<16x1xf32> to vector<16x8xf32>
    %499 = vector.broadcast %497 : vector<1x8xf32> to vector<16x8xf32>
    %500 = arith.mulf %498, %499 : vector<16x8xf32>
    %501 = vector.extract_strided_slice %300 {offsets = [0, 1], sizes = [16, 1], strides = [1, 1]} : vector<16x4xf32> to vector<16x1xf32>
    %502 = vector.extract_strided_slice %476 {offsets = [1, 0], sizes = [1, 8], strides = [1, 1]} : vector<4x8xf32> to vector<1x8xf32>
    %503 = vector.broadcast %501 : vector<16x1xf32> to vector<16x8xf32>
    %504 = vector.broadcast %502 : vector<1x8xf32> to vector<16x8xf32>
    %505 = arith.mulf %503, %504 : vector<16x8xf32>
    %506 = arith.addf %500, %505 : vector<16x8xf32>
    %507 = vector.extract_strided_slice %300 {offsets = [0, 2], sizes = [16, 1], strides = [1, 1]} : vector<16x4xf32> to vector<16x1xf32>
    %508 = vector.extract_strided_slice %476 {offsets = [2, 0], sizes = [1, 8], strides = [1, 1]} : vector<4x8xf32> to vector<1x8xf32>
    %509 = vector.broadcast %507 : vector<16x1xf32> to vector<16x8xf32>
    %510 = vector.broadcast %508 : vector<1x8xf32> to vector<16x8xf32>
    %511 = arith.mulf %509, %510 : vector<16x8xf32>
    %512 = arith.addf %506, %511 : vector<16x8xf32>
    %513 = vector.extract_strided_slice %300 {offsets = [0, 3], sizes = [16, 1], strides = [1, 1]} : vector<16x4xf32> to vector<16x1xf32>
    %514 = vector.extract_strided_slice %476 {offsets = [3, 0], sizes = [1, 8], strides = [1, 1]} : vector<4x8xf32> to vector<1x8xf32>
    %515 = vector.broadcast %513 : vector<16x1xf32> to vector<16x8xf32>
    %516 = vector.broadcast %514 : vector<1x8xf32> to vector<16x8xf32>
    %517 = arith.mulf %515, %516 : vector<16x8xf32>
    %518 = arith.addf %512, %517 : vector<16x8xf32>
    %519 = arith.addf %495, %518 : vector<16x8xf32>
    %520 = vector.broadcast %301 : vector<16x1xf32> to vector<16x8xf32>
    %521 = arith.addf %519, %520 : vector<16x8xf32>
    %522 = vector.extract_strided_slice %521 {offsets = [0, 0], sizes = [12, 8], strides = [1, 1]} : vector<16x8xf32> to vector<12x8xf32>
    %523 = arith.negf %522 : vector<12x8xf32>
    %524 = math.exp %523 : vector<12x8xf32>
    %cst_59 = arith.constant 1.000000e+00 : f32
    %525 = vector.broadcast %cst_59 : f32 to vector<12x8xf32>
    %526 = arith.addf %525, %524 : vector<12x8xf32>
    %527 = arith.divf %525, %526 : vector<12x8xf32>
    %528 = vector.extract_strided_slice %521 {offsets = [12, 0], sizes = [4, 8], strides = [1, 1]} : vector<16x8xf32> to vector<4x8xf32>
    %529 = math.tanh %528 : vector<4x8xf32>
    %530 = vector.extract_strided_slice %527 {offsets = [0, 0], sizes = [4, 8], strides = [1, 1]} : vector<12x8xf32> to vector<4x8xf32>
    %531 = vector.extract_strided_slice %527 {offsets = [4, 0], sizes = [4, 8], strides = [1, 1]} : vector<12x8xf32> to vector<4x8xf32>
    %532 = vector.extract_strided_slice %527 {offsets = [8, 0], sizes = [4, 8], strides = [1, 1]} : vector<12x8xf32> to vector<4x8xf32>
    %533 = arith.mulf %531, %474 : vector<4x8xf32>
    %534 = arith.mulf %530, %529 : vector<4x8xf32>
    %535 = arith.addf %533, %534 : vector<4x8xf32>
    %536 = math.tanh %535 : vector<4x8xf32>
    %537 = arith.mulf %532, %536 : vector<4x8xf32>
    %cst_60 = arith.constant 0.000000e+00 : f32
    %538 = vector.broadcast %cst_60 : f32 to vector<4x8xf32>
    %539 = arith.maximumf %537, %538 : vector<4x8xf32>
    %540 = vector.extract_strided_slice %539 {offsets = [0, 0], sizes = [2, 8], strides = [1, 1]} : vector<4x8xf32> to vector<2x8xf32>
    %c3 = arith.constant 3 : index
    %c0_61 = arith.constant 0 : index
    %c0_62 = arith.constant 0 : index
    %541 = vector.load %arg19[%c3, %c0_61, %c0_62] : memref<9x4x8xf32, #tpu.memory_space<vmem>>, vector<1x2x8xf32>
    %542 = vector.shape_cast %541 : vector<1x2x8xf32> to vector<2x8xf32>
    %543 = vector.shape_cast %540 : vector<2x8xf32> to vector<1x2x8xf32>
    tpu.vector_store %arg19[%c3, %c0_61, %c0_62], %543 {strides = array<i32>} : memref<9x4x8xf32, #tpu.memory_space<vmem>>, vector<1x2x8xf32>,
    %544 = vector.extract_strided_slice %539 {offsets = [2, 0], sizes = [2, 8], strides = [1, 1]} : vector<4x8xf32> to vector<2x8xf32>
    %c5 = arith.constant 5 : index
    %c2_63 = arith.constant 2 : index
    %c0_64 = arith.constant 0 : index
    %545 = vector.load %arg19[%c5, %c2_63, %c0_64] : memref<9x4x8xf32, #tpu.memory_space<vmem>>, vector<1x2x8xf32>
    %546 = vector.shape_cast %545 : vector<1x2x8xf32> to vector<2x8xf32>
    %547 = vector.shape_cast %544 : vector<2x8xf32> to vector<1x2x8xf32>
    tpu.vector_store %arg19[%c5, %c2_63, %c0_64], %547 {strides = array<i32>} : memref<9x4x8xf32, #tpu.memory_space<vmem>>, vector<1x2x8xf32>,
    %548 = vector.extract_strided_slice %297 {offsets = [4, 0], sizes = [1, 8], strides = [1, 1]} : vector<9x8xf32> to vector<1x8xf32>
    %549 = vector.broadcast %298 : vector<16x1xf32> to vector<16x8xf32>
    %550 = vector.broadcast %548 : vector<1x8xf32> to vector<16x8xf32>
    %551 = arith.mulf %549, %550 : vector<16x8xf32>
    %552 = vector.extract_strided_slice %297 {offsets = [4, 0], sizes = [1, 8], strides = [1, 1]} : vector<9x8xf32> to vector<1x8xf32>
    %553 = vector.broadcast %299 : vector<16x1xf32> to vector<16x8xf32>
    %554 = vector.broadcast %552 : vector<1x8xf32> to vector<16x8xf32>
    %555 = arith.mulf %553, %554 : vector<16x8xf32>
    %556 = arith.addf %551, %555 : vector<16x8xf32>
    %557 = vector.extract_strided_slice %300 {offsets = [0, 0], sizes = [16, 1], strides = [1, 1]} : vector<16x4xf32> to vector<16x1xf32>
    %558 = vector.extract_strided_slice %537 {offsets = [0, 0], sizes = [1, 8], strides = [1, 1]} : vector<4x8xf32> to vector<1x8xf32>
    %559 = vector.broadcast %557 : vector<16x1xf32> to vector<16x8xf32>
    %560 = vector.broadcast %558 : vector<1x8xf32> to vector<16x8xf32>
    %561 = arith.mulf %559, %560 : vector<16x8xf32>
    %562 = vector.extract_strided_slice %300 {offsets = [0, 1], sizes = [16, 1], strides = [1, 1]} : vector<16x4xf32> to vector<16x1xf32>
    %563 = vector.extract_strided_slice %537 {offsets = [1, 0], sizes = [1, 8], strides = [1, 1]} : vector<4x8xf32> to vector<1x8xf32>
    %564 = vector.broadcast %562 : vector<16x1xf32> to vector<16x8xf32>
    %565 = vector.broadcast %563 : vector<1x8xf32> to vector<16x8xf32>
    %566 = arith.mulf %564, %565 : vector<16x8xf32>
    %567 = arith.addf %561, %566 : vector<16x8xf32>
    %568 = vector.extract_strided_slice %300 {offsets = [0, 2], sizes = [16, 1], strides = [1, 1]} : vector<16x4xf32> to vector<16x1xf32>
    %569 = vector.extract_strided_slice %537 {offsets = [2, 0], sizes = [1, 8], strides = [1, 1]} : vector<4x8xf32> to vector<1x8xf32>
    %570 = vector.broadcast %568 : vector<16x1xf32> to vector<16x8xf32>
    %571 = vector.broadcast %569 : vector<1x8xf32> to vector<16x8xf32>
    %572 = arith.mulf %570, %571 : vector<16x8xf32>
    %573 = arith.addf %567, %572 : vector<16x8xf32>
    %574 = vector.extract_strided_slice %300 {offsets = [0, 3], sizes = [16, 1], strides = [1, 1]} : vector<16x4xf32> to vector<16x1xf32>
    %575 = vector.extract_strided_slice %537 {offsets = [3, 0], sizes = [1, 8], strides = [1, 1]} : vector<4x8xf32> to vector<1x8xf32>
    %576 = vector.broadcast %574 : vector<16x1xf32> to vector<16x8xf32>
    %577 = vector.broadcast %575 : vector<1x8xf32> to vector<16x8xf32>
    %578 = arith.mulf %576, %577 : vector<16x8xf32>
    %579 = arith.addf %573, %578 : vector<16x8xf32>
    %580 = arith.addf %556, %579 : vector<16x8xf32>
    %581 = vector.broadcast %301 : vector<16x1xf32> to vector<16x8xf32>
    %582 = arith.addf %580, %581 : vector<16x8xf32>
    %583 = vector.extract_strided_slice %582 {offsets = [0, 0], sizes = [12, 8], strides = [1, 1]} : vector<16x8xf32> to vector<12x8xf32>
    %584 = arith.negf %583 : vector<12x8xf32>
    %585 = math.exp %584 : vector<12x8xf32>
    %cst_65 = arith.constant 1.000000e+00 : f32
    %586 = vector.broadcast %cst_65 : f32 to vector<12x8xf32>
    %587 = arith.addf %586, %585 : vector<12x8xf32>
    %588 = arith.divf %586, %587 : vector<12x8xf32>
    %589 = vector.extract_strided_slice %582 {offsets = [12, 0], sizes = [4, 8], strides = [1, 1]} : vector<16x8xf32> to vector<4x8xf32>
    %590 = math.tanh %589 : vector<4x8xf32>
    %591 = vector.extract_strided_slice %588 {offsets = [0, 0], sizes = [4, 8], strides = [1, 1]} : vector<12x8xf32> to vector<4x8xf32>
    %592 = vector.extract_strided_slice %588 {offsets = [4, 0], sizes = [4, 8], strides = [1, 1]} : vector<12x8xf32> to vector<4x8xf32>
    %593 = vector.extract_strided_slice %588 {offsets = [8, 0], sizes = [4, 8], strides = [1, 1]} : vector<12x8xf32> to vector<4x8xf32>
    %594 = arith.mulf %592, %535 : vector<4x8xf32>
    %595 = arith.mulf %591, %590 : vector<4x8xf32>
    %596 = arith.addf %594, %595 : vector<4x8xf32>
    %597 = math.tanh %596 : vector<4x8xf32>
    %598 = arith.mulf %593, %597 : vector<4x8xf32>
    %cst_66 = arith.constant 0.000000e+00 : f32
    %599 = vector.broadcast %cst_66 : f32 to vector<4x8xf32>
    %600 = arith.maximumf %598, %599 : vector<4x8xf32>
    %601 = vector.extract_strided_slice %600 {offsets = [0, 0], sizes = [2, 8], strides = [1, 1]} : vector<4x8xf32> to vector<2x8xf32>
    %c4 = arith.constant 4 : index
    %c0_67 = arith.constant 0 : index
    %c0_68 = arith.constant 0 : index
    %602 = vector.load %arg19[%c4, %c0_67, %c0_68] : memref<9x4x8xf32, #tpu.memory_space<vmem>>, vector<1x2x8xf32>
    %603 = vector.shape_cast %602 : vector<1x2x8xf32> to vector<2x8xf32>
    %604 = vector.shape_cast %601 : vector<2x8xf32> to vector<1x2x8xf32>
    tpu.vector_store %arg19[%c4, %c0_67, %c0_68], %604 {strides = array<i32>} : memref<9x4x8xf32, #tpu.memory_space<vmem>>, vector<1x2x8xf32>,
    %605 = vector.extract_strided_slice %600 {offsets = [2, 0], sizes = [2, 8], strides = [1, 1]} : vector<4x8xf32> to vector<2x8xf32>
    %c4_69 = arith.constant 4 : index
    %c2_70 = arith.constant 2 : index
    %c0_71 = arith.constant 0 : index
    %606 = vector.load %arg19[%c4_69, %c2_70, %c0_71] : memref<9x4x8xf32, #tpu.memory_space<vmem>>, vector<1x2x8xf32>
    %607 = vector.shape_cast %606 : vector<1x2x8xf32> to vector<2x8xf32>
    %608 = vector.shape_cast %605 : vector<2x8xf32> to vector<1x2x8xf32>
    tpu.vector_store %arg19[%c4_69, %c2_70, %c0_71], %608 {strides = array<i32>} : memref<9x4x8xf32, #tpu.memory_space<vmem>>, vector<1x2x8xf32>,
    %609 = vector.extract_strided_slice %297 {offsets = [5, 0], sizes = [1, 8], strides = [1, 1]} : vector<9x8xf32> to vector<1x8xf32>
    %610 = vector.broadcast %298 : vector<16x1xf32> to vector<16x8xf32>
    %611 = vector.broadcast %609 : vector<1x8xf32> to vector<16x8xf32>
    %612 = arith.mulf %610, %611 : vector<16x8xf32>
    %613 = vector.extract_strided_slice %297 {offsets = [3, 0], sizes = [1, 8], strides = [1, 1]} : vector<9x8xf32> to vector<1x8xf32>
    %614 = vector.broadcast %299 : vector<16x1xf32> to vector<16x8xf32>
    %615 = vector.broadcast %613 : vector<1x8xf32> to vector<16x8xf32>
    %616 = arith.mulf %614, %615 : vector<16x8xf32>
    %617 = arith.addf %612, %616 : vector<16x8xf32>
    %618 = vector.extract_strided_slice %300 {offsets = [0, 0], sizes = [16, 1], strides = [1, 1]} : vector<16x4xf32> to vector<16x1xf32>
    %619 = vector.extract_strided_slice %598 {offsets = [0, 0], sizes = [1, 8], strides = [1, 1]} : vector<4x8xf32> to vector<1x8xf32>
    %620 = vector.broadcast %618 : vector<16x1xf32> to vector<16x8xf32>
    %621 = vector.broadcast %619 : vector<1x8xf32> to vector<16x8xf32>
    %622 = arith.mulf %620, %621 : vector<16x8xf32>
    %623 = vector.extract_strided_slice %300 {offsets = [0, 1], sizes = [16, 1], strides = [1, 1]} : vector<16x4xf32> to vector<16x1xf32>
    %624 = vector.extract_strided_slice %598 {offsets = [1, 0], sizes = [1, 8], strides = [1, 1]} : vector<4x8xf32> to vector<1x8xf32>
    %625 = vector.broadcast %623 : vector<16x1xf32> to vector<16x8xf32>
    %626 = vector.broadcast %624 : vector<1x8xf32> to vector<16x8xf32>
    %627 = arith.mulf %625, %626 : vector<16x8xf32>
    %628 = arith.addf %622, %627 : vector<16x8xf32>
    %629 = vector.extract_strided_slice %300 {offsets = [0, 2], sizes = [16, 1], strides = [1, 1]} : vector<16x4xf32> to vector<16x1xf32>
    %630 = vector.extract_strided_slice %598 {offsets = [2, 0], sizes = [1, 8], strides = [1, 1]} : vector<4x8xf32> to vector<1x8xf32>
    %631 = vector.broadcast %629 : vector<16x1xf32> to vector<16x8xf32>
    %632 = vector.broadcast %630 : vector<1x8xf32> to vector<16x8xf32>
    %633 = arith.mulf %631, %632 : vector<16x8xf32>
    %634 = arith.addf %628, %633 : vector<16x8xf32>
    %635 = vector.extract_strided_slice %300 {offsets = [0, 3], sizes = [16, 1], strides = [1, 1]} : vector<16x4xf32> to vector<16x1xf32>
    %636 = vector.extract_strided_slice %598 {offsets = [3, 0], sizes = [1, 8], strides = [1, 1]} : vector<4x8xf32> to vector<1x8xf32>
    %637 = vector.broadcast %635 : vector<16x1xf32> to vector<16x8xf32>
    %638 = vector.broadcast %636 : vector<1x8xf32> to vector<16x8xf32>
    %639 = arith.mulf %637, %638 : vector<16x8xf32>
    %640 = arith.addf %634, %639 : vector<16x8xf32>
    %641 = arith.addf %617, %640 : vector<16x8xf32>
    %642 = vector.broadcast %301 : vector<16x1xf32> to vector<16x8xf32>
    %643 = arith.addf %641, %642 : vector<16x8xf32>
    %644 = vector.extract_strided_slice %643 {offsets = [0, 0], sizes = [12, 8], strides = [1, 1]} : vector<16x8xf32> to vector<12x8xf32>
    %645 = arith.negf %644 : vector<12x8xf32>
    %646 = math.exp %645 : vector<12x8xf32>
    %cst_72 = arith.constant 1.000000e+00 : f32
    %647 = vector.broadcast %cst_72 : f32 to vector<12x8xf32>
    %648 = arith.addf %647, %646 : vector<12x8xf32>
    %649 = arith.divf %647, %648 : vector<12x8xf32>
    %650 = vector.extract_strided_slice %643 {offsets = [12, 0], sizes = [4, 8], strides = [1, 1]} : vector<16x8xf32> to vector<4x8xf32>
    %651 = math.tanh %650 : vector<4x8xf32>
    %652 = vector.extract_strided_slice %649 {offsets = [0, 0], sizes = [4, 8], strides = [1, 1]} : vector<12x8xf32> to vector<4x8xf32>
    %653 = vector.extract_strided_slice %649 {offsets = [4, 0], sizes = [4, 8], strides = [1, 1]} : vector<12x8xf32> to vector<4x8xf32>
    %654 = vector.extract_strided_slice %649 {offsets = [8, 0], sizes = [4, 8], strides = [1, 1]} : vector<12x8xf32> to vector<4x8xf32>
    %655 = arith.mulf %653, %596 : vector<4x8xf32>
    %656 = arith.mulf %652, %651 : vector<4x8xf32>
    %657 = arith.addf %655, %656 : vector<4x8xf32>
    %658 = math.tanh %657 : vector<4x8xf32>
    %659 = arith.mulf %654, %658 : vector<4x8xf32>
    %cst_73 = arith.constant 0.000000e+00 : f32
    %660 = vector.broadcast %cst_73 : f32 to vector<4x8xf32>
    %661 = arith.maximumf %659, %660 : vector<4x8xf32>
    %662 = vector.extract_strided_slice %661 {offsets = [0, 0], sizes = [2, 8], strides = [1, 1]} : vector<4x8xf32> to vector<2x8xf32>
    %c5_74 = arith.constant 5 : index
    %c0_75 = arith.constant 0 : index
    %c0_76 = arith.constant 0 : index
    %663 = vector.load %arg19[%c5_74, %c0_75, %c0_76] : memref<9x4x8xf32, #tpu.memory_space<vmem>>, vector<1x2x8xf32>
    %664 = vector.shape_cast %663 : vector<1x2x8xf32> to vector<2x8xf32>
    %665 = vector.shape_cast %662 : vector<2x8xf32> to vector<1x2x8xf32>
    tpu.vector_store %arg19[%c5_74, %c0_75, %c0_76], %665 {strides = array<i32>} : memref<9x4x8xf32, #tpu.memory_space<vmem>>, vector<1x2x8xf32>,
    %666 = vector.extract_strided_slice %661 {offsets = [2, 0], sizes = [2, 8], strides = [1, 1]} : vector<4x8xf32> to vector<2x8xf32>
    %c3_77 = arith.constant 3 : index
    %c2_78 = arith.constant 2 : index
    %c0_79 = arith.constant 0 : index
    %667 = vector.load %arg19[%c3_77, %c2_78, %c0_79] : memref<9x4x8xf32, #tpu.memory_space<vmem>>, vector<1x2x8xf32>
    %668 = vector.shape_cast %667 : vector<1x2x8xf32> to vector<2x8xf32>
    %669 = vector.shape_cast %666 : vector<2x8xf32> to vector<1x2x8xf32>
    tpu.vector_store %arg19[%c3_77, %c2_78, %c0_79], %669 {strides = array<i32>} : memref<9x4x8xf32, #tpu.memory_space<vmem>>, vector<1x2x8xf32>,
    %670 = vector.extract_strided_slice %297 {offsets = [6, 0], sizes = [1, 8], strides = [1, 1]} : vector<9x8xf32> to vector<1x8xf32>
    %671 = vector.broadcast %298 : vector<16x1xf32> to vector<16x8xf32>
    %672 = vector.broadcast %670 : vector<1x8xf32> to vector<16x8xf32>
    %673 = arith.mulf %671, %672 : vector<16x8xf32>
    %674 = vector.extract_strided_slice %297 {offsets = [2, 0], sizes = [1, 8], strides = [1, 1]} : vector<9x8xf32> to vector<1x8xf32>
    %675 = vector.broadcast %299 : vector<16x1xf32> to vector<16x8xf32>
    %676 = vector.broadcast %674 : vector<1x8xf32> to vector<16x8xf32>
    %677 = arith.mulf %675, %676 : vector<16x8xf32>
    %678 = arith.addf %673, %677 : vector<16x8xf32>
    %679 = vector.extract_strided_slice %300 {offsets = [0, 0], sizes = [16, 1], strides = [1, 1]} : vector<16x4xf32> to vector<16x1xf32>
    %680 = vector.extract_strided_slice %659 {offsets = [0, 0], sizes = [1, 8], strides = [1, 1]} : vector<4x8xf32> to vector<1x8xf32>
    %681 = vector.broadcast %679 : vector<16x1xf32> to vector<16x8xf32>
    %682 = vector.broadcast %680 : vector<1x8xf32> to vector<16x8xf32>
    %683 = arith.mulf %681, %682 : vector<16x8xf32>
    %684 = vector.extract_strided_slice %300 {offsets = [0, 1], sizes = [16, 1], strides = [1, 1]} : vector<16x4xf32> to vector<16x1xf32>
    %685 = vector.extract_strided_slice %659 {offsets = [1, 0], sizes = [1, 8], strides = [1, 1]} : vector<4x8xf32> to vector<1x8xf32>
    %686 = vector.broadcast %684 : vector<16x1xf32> to vector<16x8xf32>
    %687 = vector.broadcast %685 : vector<1x8xf32> to vector<16x8xf32>
    %688 = arith.mulf %686, %687 : vector<16x8xf32>
    %689 = arith.addf %683, %688 : vector<16x8xf32>
    %690 = vector.extract_strided_slice %300 {offsets = [0, 2], sizes = [16, 1], strides = [1, 1]} : vector<16x4xf32> to vector<16x1xf32>
    %691 = vector.extract_strided_slice %659 {offsets = [2, 0], sizes = [1, 8], strides = [1, 1]} : vector<4x8xf32> to vector<1x8xf32>
    %692 = vector.broadcast %690 : vector<16x1xf32> to vector<16x8xf32>
    %693 = vector.broadcast %691 : vector<1x8xf32> to vector<16x8xf32>
    %694 = arith.mulf %692, %693 : vector<16x8xf32>
    %695 = arith.addf %689, %694 : vector<16x8xf32>
    %696 = vector.extract_strided_slice %300 {offsets = [0, 3], sizes = [16, 1], strides = [1, 1]} : vector<16x4xf32> to vector<16x1xf32>
    %697 = vector.extract_strided_slice %659 {offsets = [3, 0], sizes = [1, 8], strides = [1, 1]} : vector<4x8xf32> to vector<1x8xf32>
    %698 = vector.broadcast %696 : vector<16x1xf32> to vector<16x8xf32>
    %699 = vector.broadcast %697 : vector<1x8xf32> to vector<16x8xf32>
    %700 = arith.mulf %698, %699 : vector<16x8xf32>
    %701 = arith.addf %695, %700 : vector<16x8xf32>
    %702 = arith.addf %678, %701 : vector<16x8xf32>
    %703 = vector.broadcast %301 : vector<16x1xf32> to vector<16x8xf32>
    %704 = arith.addf %702, %703 : vector<16x8xf32>
    %705 = vector.extract_strided_slice %704 {offsets = [0, 0], sizes = [12, 8], strides = [1, 1]} : vector<16x8xf32> to vector<12x8xf32>
    %706 = arith.negf %705 : vector<12x8xf32>
    %707 = math.exp %706 : vector<12x8xf32>
    %cst_80 = arith.constant 1.000000e+00 : f32
    %708 = vector.broadcast %cst_80 : f32 to vector<12x8xf32>
    %709 = arith.addf %708, %707 : vector<12x8xf32>
    %710 = arith.divf %708, %709 : vector<12x8xf32>
    %711 = vector.extract_strided_slice %704 {offsets = [12, 0], sizes = [4, 8], strides = [1, 1]} : vector<16x8xf32> to vector<4x8xf32>
    %712 = math.tanh %711 : vector<4x8xf32>
    %713 = vector.extract_strided_slice %710 {offsets = [0, 0], sizes = [4, 8], strides = [1, 1]} : vector<12x8xf32> to vector<4x8xf32>
    %714 = vector.extract_strided_slice %710 {offsets = [4, 0], sizes = [4, 8], strides = [1, 1]} : vector<12x8xf32> to vector<4x8xf32>
    %715 = vector.extract_strided_slice %710 {offsets = [8, 0], sizes = [4, 8], strides = [1, 1]} : vector<12x8xf32> to vector<4x8xf32>
    %716 = arith.mulf %714, %657 : vector<4x8xf32>
    %717 = arith.mulf %713, %712 : vector<4x8xf32>
    %718 = arith.addf %716, %717 : vector<4x8xf32>
    %719 = math.tanh %718 : vector<4x8xf32>
    %720 = arith.mulf %715, %719 : vector<4x8xf32>
    %cst_81 = arith.constant 0.000000e+00 : f32
    %721 = vector.broadcast %cst_81 : f32 to vector<4x8xf32>
    %722 = arith.maximumf %720, %721 : vector<4x8xf32>
    %723 = vector.extract_strided_slice %722 {offsets = [0, 0], sizes = [2, 8], strides = [1, 1]} : vector<4x8xf32> to vector<2x8xf32>
    %c6_82 = arith.constant 6 : index
    %c0_83 = arith.constant 0 : index
    %c0_84 = arith.constant 0 : index
    %724 = vector.load %arg19[%c6_82, %c0_83, %c0_84] : memref<9x4x8xf32, #tpu.memory_space<vmem>>, vector<1x2x8xf32>
    %725 = vector.shape_cast %724 : vector<1x2x8xf32> to vector<2x8xf32>
    %726 = vector.shape_cast %723 : vector<2x8xf32> to vector<1x2x8xf32>
    tpu.vector_store %arg19[%c6_82, %c0_83, %c0_84], %726 {strides = array<i32>} : memref<9x4x8xf32, #tpu.memory_space<vmem>>, vector<1x2x8xf32>,
    %727 = vector.extract_strided_slice %722 {offsets = [2, 0], sizes = [2, 8], strides = [1, 1]} : vector<4x8xf32> to vector<2x8xf32>
    %c2_85 = arith.constant 2 : index
    %c2_86 = arith.constant 2 : index
    %c0_87 = arith.constant 0 : index
    %728 = vector.load %arg19[%c2_85, %c2_86, %c0_87] : memref<9x4x8xf32, #tpu.memory_space<vmem>>, vector<1x2x8xf32>
    %729 = vector.shape_cast %728 : vector<1x2x8xf32> to vector<2x8xf32>
    %730 = vector.shape_cast %727 : vector<2x8xf32> to vector<1x2x8xf32>
    tpu.vector_store %arg19[%c2_85, %c2_86, %c0_87], %730 {strides = array<i32>} : memref<9x4x8xf32, #tpu.memory_space<vmem>>, vector<1x2x8xf32>,
    %731 = vector.extract_strided_slice %297 {offsets = [7, 0], sizes = [1, 8], strides = [1, 1]} : vector<9x8xf32> to vector<1x8xf32>
    %732 = vector.broadcast %298 : vector<16x1xf32> to vector<16x8xf32>
    %733 = vector.broadcast %731 : vector<1x8xf32> to vector<16x8xf32>
    %734 = arith.mulf %732, %733 : vector<16x8xf32>
    %735 = vector.extract_strided_slice %297 {offsets = [1, 0], sizes = [1, 8], strides = [1, 1]} : vector<9x8xf32> to vector<1x8xf32>
    %736 = vector.broadcast %299 : vector<16x1xf32> to vector<16x8xf32>
    %737 = vector.broadcast %735 : vector<1x8xf32> to vector<16x8xf32>
    %738 = arith.mulf %736, %737 : vector<16x8xf32>
    %739 = arith.addf %734, %738 : vector<16x8xf32>
    %740 = vector.extract_strided_slice %300 {offsets = [0, 0], sizes = [16, 1], strides = [1, 1]} : vector<16x4xf32> to vector<16x1xf32>
    %741 = vector.extract_strided_slice %720 {offsets = [0, 0], sizes = [1, 8], strides = [1, 1]} : vector<4x8xf32> to vector<1x8xf32>
    %742 = vector.broadcast %740 : vector<16x1xf32> to vector<16x8xf32>
    %743 = vector.broadcast %741 : vector<1x8xf32> to vector<16x8xf32>
    %744 = arith.mulf %742, %743 : vector<16x8xf32>
    %745 = vector.extract_strided_slice %300 {offsets = [0, 1], sizes = [16, 1], strides = [1, 1]} : vector<16x4xf32> to vector<16x1xf32>
    %746 = vector.extract_strided_slice %720 {offsets = [1, 0], sizes = [1, 8], strides = [1, 1]} : vector<4x8xf32> to vector<1x8xf32>
    %747 = vector.broadcast %745 : vector<16x1xf32> to vector<16x8xf32>
    %748 = vector.broadcast %746 : vector<1x8xf32> to vector<16x8xf32>
    %749 = arith.mulf %747, %748 : vector<16x8xf32>
    %750 = arith.addf %744, %749 : vector<16x8xf32>
    %751 = vector.extract_strided_slice %300 {offsets = [0, 2], sizes = [16, 1], strides = [1, 1]} : vector<16x4xf32> to vector<16x1xf32>
    %752 = vector.extract_strided_slice %720 {offsets = [2, 0], sizes = [1, 8], strides = [1, 1]} : vector<4x8xf32> to vector<1x8xf32>
    %753 = vector.broadcast %751 : vector<16x1xf32> to vector<16x8xf32>
    %754 = vector.broadcast %752 : vector<1x8xf32> to vector<16x8xf32>
    %755 = arith.mulf %753, %754 : vector<16x8xf32>
    %756 = arith.addf %750, %755 : vector<16x8xf32>
    %757 = vector.extract_strided_slice %300 {offsets = [0, 3], sizes = [16, 1], strides = [1, 1]} : vector<16x4xf32> to vector<16x1xf32>
    %758 = vector.extract_strided_slice %720 {offsets = [3, 0], sizes = [1, 8], strides = [1, 1]} : vector<4x8xf32> to vector<1x8xf32>
    %759 = vector.broadcast %757 : vector<16x1xf32> to vector<16x8xf32>
    %760 = vector.broadcast %758 : vector<1x8xf32> to vector<16x8xf32>
    %761 = arith.mulf %759, %760 : vector<16x8xf32>
    %762 = arith.addf %756, %761 : vector<16x8xf32>
    %763 = arith.addf %739, %762 : vector<16x8xf32>
    %764 = vector.broadcast %301 : vector<16x1xf32> to vector<16x8xf32>
    %765 = arith.addf %763, %764 : vector<16x8xf32>
    %766 = vector.extract_strided_slice %765 {offsets = [0, 0], sizes = [12, 8], strides = [1, 1]} : vector<16x8xf32> to vector<12x8xf32>
    %767 = arith.negf %766 : vector<12x8xf32>
    %768 = math.exp %767 : vector<12x8xf32>
    %cst_88 = arith.constant 1.000000e+00 : f32
    %769 = vector.broadcast %cst_88 : f32 to vector<12x8xf32>
    %770 = arith.addf %769, %768 : vector<12x8xf32>
    %771 = arith.divf %769, %770 : vector<12x8xf32>
    %772 = vector.extract_strided_slice %765 {offsets = [12, 0], sizes = [4, 8], strides = [1, 1]} : vector<16x8xf32> to vector<4x8xf32>
    %773 = math.tanh %772 : vector<4x8xf32>
    %774 = vector.extract_strided_slice %771 {offsets = [0, 0], sizes = [4, 8], strides = [1, 1]} : vector<12x8xf32> to vector<4x8xf32>
    %775 = vector.extract_strided_slice %771 {offsets = [4, 0], sizes = [4, 8], strides = [1, 1]} : vector<12x8xf32> to vector<4x8xf32>
    %776 = vector.extract_strided_slice %771 {offsets = [8, 0], sizes = [4, 8], strides = [1, 1]} : vector<12x8xf32> to vector<4x8xf32>
    %777 = arith.mulf %775, %718 : vector<4x8xf32>
    %778 = arith.mulf %774, %773 : vector<4x8xf32>
    %779 = arith.addf %777, %778 : vector<4x8xf32>
    %780 = math.tanh %779 : vector<4x8xf32>
    %781 = arith.mulf %776, %780 : vector<4x8xf32>
    %cst_89 = arith.constant 0.000000e+00 : f32
    %782 = vector.broadcast %cst_89 : f32 to vector<4x8xf32>
    %783 = arith.maximumf %781, %782 : vector<4x8xf32>
    %784 = vector.extract_strided_slice %783 {offsets = [0, 0], sizes = [2, 8], strides = [1, 1]} : vector<4x8xf32> to vector<2x8xf32>
    %c7_90 = arith.constant 7 : index
    %c0_91 = arith.constant 0 : index
    %c0_92 = arith.constant 0 : index
    %785 = vector.load %arg19[%c7_90, %c0_91, %c0_92] : memref<9x4x8xf32, #tpu.memory_space<vmem>>, vector<1x2x8xf32>
    %786 = vector.shape_cast %785 : vector<1x2x8xf32> to vector<2x8xf32>
    %787 = vector.shape_cast %784 : vector<2x8xf32> to vector<1x2x8xf32>
    tpu.vector_store %arg19[%c7_90, %c0_91, %c0_92], %787 {strides = array<i32>} : memref<9x4x8xf32, #tpu.memory_space<vmem>>, vector<1x2x8xf32>,
    %788 = vector.extract_strided_slice %783 {offsets = [2, 0], sizes = [2, 8], strides = [1, 1]} : vector<4x8xf32> to vector<2x8xf32>
    %c1_93 = arith.constant 1 : index
    %c2_94 = arith.constant 2 : index
    %c0_95 = arith.constant 0 : index
    %789 = vector.load %arg19[%c1_93, %c2_94, %c0_95] : memref<9x4x8xf32, #tpu.memory_space<vmem>>, vector<1x2x8xf32>
    %790 = vector.shape_cast %789 : vector<1x2x8xf32> to vector<2x8xf32>
    %791 = vector.shape_cast %788 : vector<2x8xf32> to vector<1x2x8xf32>
    tpu.vector_store %arg19[%c1_93, %c2_94, %c0_95], %791 {strides = array<i32>} : memref<9x4x8xf32, #tpu.memory_space<vmem>>, vector<1x2x8xf32>,
    %792 = vector.extract_strided_slice %297 {offsets = [8, 0], sizes = [1, 8], strides = [1, 1]} : vector<9x8xf32> to vector<1x8xf32>
    %793 = vector.broadcast %298 : vector<16x1xf32> to vector<16x8xf32>
    %794 = vector.broadcast %792 : vector<1x8xf32> to vector<16x8xf32>
    %795 = arith.mulf %793, %794 : vector<16x8xf32>
    %796 = vector.extract_strided_slice %297 {offsets = [0, 0], sizes = [1, 8], strides = [1, 1]} : vector<9x8xf32> to vector<1x8xf32>
    %797 = vector.broadcast %299 : vector<16x1xf32> to vector<16x8xf32>
    %798 = vector.broadcast %796 : vector<1x8xf32> to vector<16x8xf32>
    %799 = arith.mulf %797, %798 : vector<16x8xf32>
    %800 = arith.addf %795, %799 : vector<16x8xf32>
    %801 = vector.extract_strided_slice %300 {offsets = [0, 0], sizes = [16, 1], strides = [1, 1]} : vector<16x4xf32> to vector<16x1xf32>
    %802 = vector.extract_strided_slice %781 {offsets = [0, 0], sizes = [1, 8], strides = [1, 1]} : vector<4x8xf32> to vector<1x8xf32>
    %803 = vector.broadcast %801 : vector<16x1xf32> to vector<16x8xf32>
    %804 = vector.broadcast %802 : vector<1x8xf32> to vector<16x8xf32>
    %805 = arith.mulf %803, %804 : vector<16x8xf32>
    %806 = vector.extract_strided_slice %300 {offsets = [0, 1], sizes = [16, 1], strides = [1, 1]} : vector<16x4xf32> to vector<16x1xf32>
    %807 = vector.extract_strided_slice %781 {offsets = [1, 0], sizes = [1, 8], strides = [1, 1]} : vector<4x8xf32> to vector<1x8xf32>
    %808 = vector.broadcast %806 : vector<16x1xf32> to vector<16x8xf32>
    %809 = vector.broadcast %807 : vector<1x8xf32> to vector<16x8xf32>
    %810 = arith.mulf %808, %809 : vector<16x8xf32>
    %811 = arith.addf %805, %810 : vector<16x8xf32>
    %812 = vector.extract_strided_slice %300 {offsets = [0, 2], sizes = [16, 1], strides = [1, 1]} : vector<16x4xf32> to vector<16x1xf32>
    %813 = vector.extract_strided_slice %781 {offsets = [2, 0], sizes = [1, 8], strides = [1, 1]} : vector<4x8xf32> to vector<1x8xf32>
    %814 = vector.broadcast %812 : vector<16x1xf32> to vector<16x8xf32>
    %815 = vector.broadcast %813 : vector<1x8xf32> to vector<16x8xf32>
    %816 = arith.mulf %814, %815 : vector<16x8xf32>
    %817 = arith.addf %811, %816 : vector<16x8xf32>
    %818 = vector.extract_strided_slice %300 {offsets = [0, 3], sizes = [16, 1], strides = [1, 1]} : vector<16x4xf32> to vector<16x1xf32>
    %819 = vector.extract_strided_slice %781 {offsets = [3, 0], sizes = [1, 8], strides = [1, 1]} : vector<4x8xf32> to vector<1x8xf32>
    %820 = vector.broadcast %818 : vector<16x1xf32> to vector<16x8xf32>
    %821 = vector.broadcast %819 : vector<1x8xf32> to vector<16x8xf32>
    %822 = arith.mulf %820, %821 : vector<16x8xf32>
    %823 = arith.addf %817, %822 : vector<16x8xf32>
    %824 = arith.addf %800, %823 : vector<16x8xf32>
    %825 = vector.broadcast %301 : vector<16x1xf32> to vector<16x8xf32>
    %826 = arith.addf %824, %825 : vector<16x8xf32>
    %827 = vector.extract_strided_slice %826 {offsets = [0, 0], sizes = [12, 8], strides = [1, 1]} : vector<16x8xf32> to vector<12x8xf32>
    %828 = arith.negf %827 : vector<12x8xf32>
    %829 = math.exp %828 : vector<12x8xf32>
    %cst_96 = arith.constant 1.000000e+00 : f32
    %830 = vector.broadcast %cst_96 : f32 to vector<12x8xf32>
    %831 = arith.addf %830, %829 : vector<12x8xf32>
    %832 = arith.divf %830, %831 : vector<12x8xf32>
    %833 = vector.extract_strided_slice %826 {offsets = [12, 0], sizes = [4, 8], strides = [1, 1]} : vector<16x8xf32> to vector<4x8xf32>
    %834 = math.tanh %833 : vector<4x8xf32>
    %835 = vector.extract_strided_slice %832 {offsets = [0, 0], sizes = [4, 8], strides = [1, 1]} : vector<12x8xf32> to vector<4x8xf32>
    %836 = vector.extract_strided_slice %832 {offsets = [4, 0], sizes = [4, 8], strides = [1, 1]} : vector<12x8xf32> to vector<4x8xf32>
    %837 = vector.extract_strided_slice %832 {offsets = [8, 0], sizes = [4, 8], strides = [1, 1]} : vector<12x8xf32> to vector<4x8xf32>
    %838 = arith.mulf %836, %779 : vector<4x8xf32>
    %839 = arith.mulf %835, %834 : vector<4x8xf32>
    %840 = arith.addf %838, %839 : vector<4x8xf32>
    %841 = math.tanh %840 : vector<4x8xf32>
    %842 = arith.mulf %837, %841 : vector<4x8xf32>
    %cst_97 = arith.constant 0.000000e+00 : f32
    %843 = vector.broadcast %cst_97 : f32 to vector<4x8xf32>
    %844 = arith.maximumf %842, %843 : vector<4x8xf32>
    %845 = vector.extract_strided_slice %844 {offsets = [0, 0], sizes = [2, 8], strides = [1, 1]} : vector<4x8xf32> to vector<2x8xf32>
    %c8_98 = arith.constant 8 : index
    %c0_99 = arith.constant 0 : index
    %c0_100 = arith.constant 0 : index
    %846 = vector.load %arg19[%c8_98, %c0_99, %c0_100] : memref<9x4x8xf32, #tpu.memory_space<vmem>>, vector<1x2x8xf32>
    %847 = vector.shape_cast %846 : vector<1x2x8xf32> to vector<2x8xf32>
    %848 = vector.shape_cast %845 : vector<2x8xf32> to vector<1x2x8xf32>
    tpu.vector_store %arg19[%c8_98, %c0_99, %c0_100], %848 {strides = array<i32>} : memref<9x4x8xf32, #tpu.memory_space<vmem>>, vector<1x2x8xf32>,
    %849 = vector.extract_strided_slice %844 {offsets = [2, 0], sizes = [2, 8], strides = [1, 1]} : vector<4x8xf32> to vector<2x8xf32>
    %c0_101 = arith.constant 0 : index
    %c2_102 = arith.constant 2 : index
    %c0_103 = arith.constant 0 : index
    %850 = vector.load %arg19[%c0_101, %c2_102, %c0_103] : memref<9x4x8xf32, #tpu.memory_space<vmem>>, vector<1x2x8xf32>
    %851 = vector.shape_cast %850 : vector<1x2x8xf32> to vector<2x8xf32>
    %852 = vector.shape_cast %849 : vector<2x8xf32> to vector<1x2x8xf32>
    tpu.vector_store %arg19[%c0_101, %c2_102, %c0_103], %852 {strides = array<i32>} : memref<9x4x8xf32, #tpu.memory_space<vmem>>, vector<1x2x8xf32>,
    %c0_104 = arith.constant 0 : index
    %c0_105 = arith.constant 0 : index
    %853 = vector.load %arg14[%c0_104, %c0_105] : memref<8x4xf32, #tpu.memory_space<vmem>>, vector<8x4xf32>
    %c0_106 = arith.constant 0 : index
    %c0_107 = arith.constant 0 : index
    %854 = vector.load %arg15[%c0_106, %c0_107] : memref<8x4xf32, #tpu.memory_space<vmem>>, vector<8x4xf32>
    %c0_108 = arith.constant 0 : index
    %c0_109 = arith.constant 0 : index
    %855 = vector.load %arg16[%c0_108, %c0_109] : memref<8x2xf32, #tpu.memory_space<vmem>>, vector<8x2xf32>
    %c0_110 = arith.constant 0 : index
    %c0_111 = arith.constant 0 : index
    %856 = vector.load %arg17[%c0_110, %c0_111] : memref<8x1xf32, #tpu.memory_space<vmem>>, vector<8x1xf32>
    %cst_112 = arith.constant 0.000000e+00 : f32
    %857 = vector.broadcast %cst_112 : f32 to vector<2x8xf32>
    %cst_113 = arith.constant 0.000000e+00 : f32
    %858 = vector.broadcast %cst_113 : f32 to vector<2x8xf32>
    %c0_114 = arith.constant 0 : index
    %c0_115 = arith.constant 0 : index
    %c0_116 = arith.constant 0 : index
    %859 = vector.load %arg19[%c0_114, %c0_115, %c0_116] : memref<9x4x8xf32, #tpu.memory_space<vmem>>, vector<1x4x8xf32>
    %860 = vector.shape_cast %859 : vector<1x4x8xf32> to vector<4x8xf32>
    %c8_117 = arith.constant 8 : index
    %c0_118 = arith.constant 0 : index
    %c0_119 = arith.constant 0 : index
    %861 = vector.load %arg19[%c8_117, %c0_118, %c0_119] : memref<9x4x8xf32, #tpu.memory_space<vmem>>, vector<1x4x8xf32>
    %862 = vector.shape_cast %861 : vector<1x4x8xf32> to vector<4x8xf32>
    %863 = vector.extract_strided_slice %853 {offsets = [0, 0], sizes = [8, 1], strides = [1, 1]} : vector<8x4xf32> to vector<8x1xf32>
    %864 = vector.extract_strided_slice %860 {offsets = [0, 0], sizes = [1, 8], strides = [1, 1]} : vector<4x8xf32> to vector<1x8xf32>
    %865 = vector.broadcast %863 : vector<8x1xf32> to vector<8x8xf32>
    %866 = vector.broadcast %864 : vector<1x8xf32> to vector<8x8xf32>
    %867 = arith.mulf %865, %866 : vector<8x8xf32>
    %868 = vector.extract_strided_slice %853 {offsets = [0, 1], sizes = [8, 1], strides = [1, 1]} : vector<8x4xf32> to vector<8x1xf32>
    %869 = vector.extract_strided_slice %860 {offsets = [1, 0], sizes = [1, 8], strides = [1, 1]} : vector<4x8xf32> to vector<1x8xf32>
    %870 = vector.broadcast %868 : vector<8x1xf32> to vector<8x8xf32>
    %871 = vector.broadcast %869 : vector<1x8xf32> to vector<8x8xf32>
    %872 = arith.mulf %870, %871 : vector<8x8xf32>
    %873 = arith.addf %867, %872 : vector<8x8xf32>
    %874 = vector.extract_strided_slice %853 {offsets = [0, 2], sizes = [8, 1], strides = [1, 1]} : vector<8x4xf32> to vector<8x1xf32>
    %875 = vector.extract_strided_slice %860 {offsets = [2, 0], sizes = [1, 8], strides = [1, 1]} : vector<4x8xf32> to vector<1x8xf32>
    %876 = vector.broadcast %874 : vector<8x1xf32> to vector<8x8xf32>
    %877 = vector.broadcast %875 : vector<1x8xf32> to vector<8x8xf32>
    %878 = arith.mulf %876, %877 : vector<8x8xf32>
    %879 = arith.addf %873, %878 : vector<8x8xf32>
    %880 = vector.extract_strided_slice %853 {offsets = [0, 3], sizes = [8, 1], strides = [1, 1]} : vector<8x4xf32> to vector<8x1xf32>
    %881 = vector.extract_strided_slice %860 {offsets = [3, 0], sizes = [1, 8], strides = [1, 1]} : vector<4x8xf32> to vector<1x8xf32>
    %882 = vector.broadcast %880 : vector<8x1xf32> to vector<8x8xf32>
    %883 = vector.broadcast %881 : vector<1x8xf32> to vector<8x8xf32>
    %884 = arith.mulf %882, %883 : vector<8x8xf32>
    %885 = arith.addf %879, %884 : vector<8x8xf32>
    %886 = vector.extract_strided_slice %854 {offsets = [0, 0], sizes = [8, 1], strides = [1, 1]} : vector<8x4xf32> to vector<8x1xf32>
    %887 = vector.extract_strided_slice %862 {offsets = [0, 0], sizes = [1, 8], strides = [1, 1]} : vector<4x8xf32> to vector<1x8xf32>
    %888 = vector.broadcast %886 : vector<8x1xf32> to vector<8x8xf32>
    %889 = vector.broadcast %887 : vector<1x8xf32> to vector<8x8xf32>
    %890 = arith.mulf %888, %889 : vector<8x8xf32>
    %891 = vector.extract_strided_slice %854 {offsets = [0, 1], sizes = [8, 1], strides = [1, 1]} : vector<8x4xf32> to vector<8x1xf32>
    %892 = vector.extract_strided_slice %862 {offsets = [1, 0], sizes = [1, 8], strides = [1, 1]} : vector<4x8xf32> to vector<1x8xf32>
    %893 = vector.broadcast %891 : vector<8x1xf32> to vector<8x8xf32>
    %894 = vector.broadcast %892 : vector<1x8xf32> to vector<8x8xf32>
    %895 = arith.mulf %893, %894 : vector<8x8xf32>
    %896 = arith.addf %890, %895 : vector<8x8xf32>
    %897 = vector.extract_strided_slice %854 {offsets = [0, 2], sizes = [8, 1], strides = [1, 1]} : vector<8x4xf32> to vector<8x1xf32>
    %898 = vector.extract_strided_slice %862 {offsets = [2, 0], sizes = [1, 8], strides = [1, 1]} : vector<4x8xf32> to vector<1x8xf32>
    %899 = vector.broadcast %897 : vector<8x1xf32> to vector<8x8xf32>
    %900 = vector.broadcast %898 : vector<1x8xf32> to vector<8x8xf32>
    %901 = arith.mulf %899, %900 : vector<8x8xf32>
    %902 = arith.addf %896, %901 : vector<8x8xf32>
    %903 = vector.extract_strided_slice %854 {offsets = [0, 3], sizes = [8, 1], strides = [1, 1]} : vector<8x4xf32> to vector<8x1xf32>
    %904 = vector.extract_strided_slice %862 {offsets = [3, 0], sizes = [1, 8], strides = [1, 1]} : vector<4x8xf32> to vector<1x8xf32>
    %905 = vector.broadcast %903 : vector<8x1xf32> to vector<8x8xf32>
    %906 = vector.broadcast %904 : vector<1x8xf32> to vector<8x8xf32>
    %907 = arith.mulf %905, %906 : vector<8x8xf32>
    %908 = arith.addf %902, %907 : vector<8x8xf32>
    %909 = arith.addf %885, %908 : vector<8x8xf32>
    %910 = vector.extract_strided_slice %855 {offsets = [0, 0], sizes = [8, 1], strides = [1, 1]} : vector<8x2xf32> to vector<8x1xf32>
    %911 = vector.extract_strided_slice %857 {offsets = [0, 0], sizes = [1, 8], strides = [1, 1]} : vector<2x8xf32> to vector<1x8xf32>
    %912 = vector.broadcast %910 : vector<8x1xf32> to vector<8x8xf32>
    %913 = vector.broadcast %911 : vector<1x8xf32> to vector<8x8xf32>
    %914 = arith.mulf %912, %913 : vector<8x8xf32>
    %915 = vector.extract_strided_slice %855 {offsets = [0, 1], sizes = [8, 1], strides = [1, 1]} : vector<8x2xf32> to vector<8x1xf32>
    %916 = vector.extract_strided_slice %857 {offsets = [1, 0], sizes = [1, 8], strides = [1, 1]} : vector<2x8xf32> to vector<1x8xf32>
    %917 = vector.broadcast %915 : vector<8x1xf32> to vector<8x8xf32>
    %918 = vector.broadcast %916 : vector<1x8xf32> to vector<8x8xf32>
    %919 = arith.mulf %917, %918 : vector<8x8xf32>
    %920 = arith.addf %914, %919 : vector<8x8xf32>
    %921 = arith.addf %909, %920 : vector<8x8xf32>
    %922 = vector.broadcast %856 : vector<8x1xf32> to vector<8x8xf32>
    %923 = arith.addf %921, %922 : vector<8x8xf32>
    %924 = vector.extract_strided_slice %923 {offsets = [0, 0], sizes = [6, 8], strides = [1, 1]} : vector<8x8xf32> to vector<6x8xf32>
    %925 = arith.negf %924 : vector<6x8xf32>
    %926 = math.exp %925 : vector<6x8xf32>
    %cst_120 = arith.constant 1.000000e+00 : f32
    %927 = vector.broadcast %cst_120 : f32 to vector<6x8xf32>
    %928 = arith.addf %927, %926 : vector<6x8xf32>
    %929 = arith.divf %927, %928 : vector<6x8xf32>
    %930 = vector.extract_strided_slice %923 {offsets = [6, 0], sizes = [2, 8], strides = [1, 1]} : vector<8x8xf32> to vector<2x8xf32>
    %931 = math.tanh %930 : vector<2x8xf32>
    %932 = vector.extract_strided_slice %929 {offsets = [0, 0], sizes = [2, 8], strides = [1, 1]} : vector<6x8xf32> to vector<2x8xf32>
    %933 = vector.extract_strided_slice %929 {offsets = [2, 0], sizes = [2, 8], strides = [1, 1]} : vector<6x8xf32> to vector<2x8xf32>
    %934 = vector.extract_strided_slice %929 {offsets = [4, 0], sizes = [2, 8], strides = [1, 1]} : vector<6x8xf32> to vector<2x8xf32>
    %935 = arith.mulf %933, %858 : vector<2x8xf32>
    %936 = arith.mulf %932, %931 : vector<2x8xf32>
    %937 = arith.addf %935, %936 : vector<2x8xf32>
    %938 = math.tanh %937 : vector<2x8xf32>
    %939 = arith.mulf %934, %938 : vector<2x8xf32>
    %940 = vector.extract_strided_slice %939 {offsets = [0, 0], sizes = [1, 8], strides = [1, 1]} : vector<2x8xf32> to vector<1x8xf32>
    %c0_121 = arith.constant 0 : index
    %c0_122 = arith.constant 0 : index
    %c0_123 = arith.constant 0 : index
    %941 = vector.load %arg18[%c0_121, %c0_122, %c0_123] : memref<2x9x8xf32, #tpu.memory_space<vmem>>, vector<1x1x8xf32>
    %942 = vector.shape_cast %941 : vector<1x1x8xf32> to vector<1x8xf32>
    %943 = vector.shape_cast %940 : vector<1x8xf32> to vector<1x1x8xf32>
    tpu.vector_store %arg18[%c0_121, %c0_122, %c0_123], %943 {strides = array<i32>} : memref<2x9x8xf32, #tpu.memory_space<vmem>>, vector<1x1x8xf32>,
    %944 = vector.extract_strided_slice %939 {offsets = [1, 0], sizes = [1, 8], strides = [1, 1]} : vector<2x8xf32> to vector<1x8xf32>
    %c1_124 = arith.constant 1 : index
    %c8_125 = arith.constant 8 : index
    %c0_126 = arith.constant 0 : index
    %945 = vector.load %arg18[%c1_124, %c8_125, %c0_126] : memref<2x9x8xf32, #tpu.memory_space<vmem>>, vector<1x1x8xf32>
    %946 = vector.shape_cast %945 : vector<1x1x8xf32> to vector<1x8xf32>
    %947 = vector.shape_cast %944 : vector<1x8xf32> to vector<1x1x8xf32>
    tpu.vector_store %arg18[%c1_124, %c8_125, %c0_126], %947 {strides = array<i32>} : memref<2x9x8xf32, #tpu.memory_space<vmem>>, vector<1x1x8xf32>,
    %c1_127 = arith.constant 1 : index
    %c0_128 = arith.constant 0 : index
    %c0_129 = arith.constant 0 : index
    %948 = vector.load %arg19[%c1_127, %c0_128, %c0_129] : memref<9x4x8xf32, #tpu.memory_space<vmem>>, vector<1x4x8xf32>
    %949 = vector.shape_cast %948 : vector<1x4x8xf32> to vector<4x8xf32>
    %c7_130 = arith.constant 7 : index
    %c0_131 = arith.constant 0 : index
    %c0_132 = arith.constant 0 : index
    %950 = vector.load %arg19[%c7_130, %c0_131, %c0_132] : memref<9x4x8xf32, #tpu.memory_space<vmem>>, vector<1x4x8xf32>
    %951 = vector.shape_cast %950 : vector<1x4x8xf32> to vector<4x8xf32>
    %952 = vector.extract_strided_slice %853 {offsets = [0, 0], sizes = [8, 1], strides = [1, 1]} : vector<8x4xf32> to vector<8x1xf32>
    %953 = vector.extract_strided_slice %949 {offsets = [0, 0], sizes = [1, 8], strides = [1, 1]} : vector<4x8xf32> to vector<1x8xf32>
    %954 = vector.broadcast %952 : vector<8x1xf32> to vector<8x8xf32>
    %955 = vector.broadcast %953 : vector<1x8xf32> to vector<8x8xf32>
    %956 = arith.mulf %954, %955 : vector<8x8xf32>
    %957 = vector.extract_strided_slice %853 {offsets = [0, 1], sizes = [8, 1], strides = [1, 1]} : vector<8x4xf32> to vector<8x1xf32>
    %958 = vector.extract_strided_slice %949 {offsets = [1, 0], sizes = [1, 8], strides = [1, 1]} : vector<4x8xf32> to vector<1x8xf32>
    %959 = vector.broadcast %957 : vector<8x1xf32> to vector<8x8xf32>
    %960 = vector.broadcast %958 : vector<1x8xf32> to vector<8x8xf32>
    %961 = arith.mulf %959, %960 : vector<8x8xf32>
    %962 = arith.addf %956, %961 : vector<8x8xf32>
    %963 = vector.extract_strided_slice %853 {offsets = [0, 2], sizes = [8, 1], strides = [1, 1]} : vector<8x4xf32> to vector<8x1xf32>
    %964 = vector.extract_strided_slice %949 {offsets = [2, 0], sizes = [1, 8], strides = [1, 1]} : vector<4x8xf32> to vector<1x8xf32>
    %965 = vector.broadcast %963 : vector<8x1xf32> to vector<8x8xf32>
    %966 = vector.broadcast %964 : vector<1x8xf32> to vector<8x8xf32>
    %967 = arith.mulf %965, %966 : vector<8x8xf32>
    %968 = arith.addf %962, %967 : vector<8x8xf32>
    %969 = vector.extract_strided_slice %853 {offsets = [0, 3], sizes = [8, 1], strides = [1, 1]} : vector<8x4xf32> to vector<8x1xf32>
    %970 = vector.extract_strided_slice %949 {offsets = [3, 0], sizes = [1, 8], strides = [1, 1]} : vector<4x8xf32> to vector<1x8xf32>
    %971 = vector.broadcast %969 : vector<8x1xf32> to vector<8x8xf32>
    %972 = vector.broadcast %970 : vector<1x8xf32> to vector<8x8xf32>
    %973 = arith.mulf %971, %972 : vector<8x8xf32>
    %974 = arith.addf %968, %973 : vector<8x8xf32>
    %975 = vector.extract_strided_slice %854 {offsets = [0, 0], sizes = [8, 1], strides = [1, 1]} : vector<8x4xf32> to vector<8x1xf32>
    %976 = vector.extract_strided_slice %951 {offsets = [0, 0], sizes = [1, 8], strides = [1, 1]} : vector<4x8xf32> to vector<1x8xf32>
    %977 = vector.broadcast %975 : vector<8x1xf32> to vector<8x8xf32>
    %978 = vector.broadcast %976 : vector<1x8xf32> to vector<8x8xf32>
    %979 = arith.mulf %977, %978 : vector<8x8xf32>
    %980 = vector.extract_strided_slice %854 {offsets = [0, 1], sizes = [8, 1], strides = [1, 1]} : vector<8x4xf32> to vector<8x1xf32>
    %981 = vector.extract_strided_slice %951 {offsets = [1, 0], sizes = [1, 8], strides = [1, 1]} : vector<4x8xf32> to vector<1x8xf32>
    %982 = vector.broadcast %980 : vector<8x1xf32> to vector<8x8xf32>
    %983 = vector.broadcast %981 : vector<1x8xf32> to vector<8x8xf32>
    %984 = arith.mulf %982, %983 : vector<8x8xf32>
    %985 = arith.addf %979, %984 : vector<8x8xf32>
    %986 = vector.extract_strided_slice %854 {offsets = [0, 2], sizes = [8, 1], strides = [1, 1]} : vector<8x4xf32> to vector<8x1xf32>
    %987 = vector.extract_strided_slice %951 {offsets = [2, 0], sizes = [1, 8], strides = [1, 1]} : vector<4x8xf32> to vector<1x8xf32>
    %988 = vector.broadcast %986 : vector<8x1xf32> to vector<8x8xf32>
    %989 = vector.broadcast %987 : vector<1x8xf32> to vector<8x8xf32>
    %990 = arith.mulf %988, %989 : vector<8x8xf32>
    %991 = arith.addf %985, %990 : vector<8x8xf32>
    %992 = vector.extract_strided_slice %854 {offsets = [0, 3], sizes = [8, 1], strides = [1, 1]} : vector<8x4xf32> to vector<8x1xf32>
    %993 = vector.extract_strided_slice %951 {offsets = [3, 0], sizes = [1, 8], strides = [1, 1]} : vector<4x8xf32> to vector<1x8xf32>
    %994 = vector.broadcast %992 : vector<8x1xf32> to vector<8x8xf32>
    %995 = vector.broadcast %993 : vector<1x8xf32> to vector<8x8xf32>
    %996 = arith.mulf %994, %995 : vector<8x8xf32>
    %997 = arith.addf %991, %996 : vector<8x8xf32>
    %998 = arith.addf %974, %997 : vector<8x8xf32>
    %999 = vector.extract_strided_slice %855 {offsets = [0, 0], sizes = [8, 1], strides = [1, 1]} : vector<8x2xf32> to vector<8x1xf32>
    %1000 = vector.extract_strided_slice %939 {offsets = [0, 0], sizes = [1, 8], strides = [1, 1]} : vector<2x8xf32> to vector<1x8xf32>
    %1001 = vector.broadcast %999 : vector<8x1xf32> to vector<8x8xf32>
    %1002 = vector.broadcast %1000 : vector<1x8xf32> to vector<8x8xf32>
    %1003 = arith.mulf %1001, %1002 : vector<8x8xf32>
    %1004 = vector.extract_strided_slice %855 {offsets = [0, 1], sizes = [8, 1], strides = [1, 1]} : vector<8x2xf32> to vector<8x1xf32>
    %1005 = vector.extract_strided_slice %939 {offsets = [1, 0], sizes = [1, 8], strides = [1, 1]} : vector<2x8xf32> to vector<1x8xf32>
    %1006 = vector.broadcast %1004 : vector<8x1xf32> to vector<8x8xf32>
    %1007 = vector.broadcast %1005 : vector<1x8xf32> to vector<8x8xf32>
    %1008 = arith.mulf %1006, %1007 : vector<8x8xf32>
    %1009 = arith.addf %1003, %1008 : vector<8x8xf32>
    %1010 = arith.addf %998, %1009 : vector<8x8xf32>
    %1011 = vector.broadcast %856 : vector<8x1xf32> to vector<8x8xf32>
    %1012 = arith.addf %1010, %1011 : vector<8x8xf32>
    %1013 = vector.extract_strided_slice %1012 {offsets = [0, 0], sizes = [6, 8], strides = [1, 1]} : vector<8x8xf32> to vector<6x8xf32>
    %1014 = arith.negf %1013 : vector<6x8xf32>
    %1015 = math.exp %1014 : vector<6x8xf32>
    %cst_133 = arith.constant 1.000000e+00 : f32
    %1016 = vector.broadcast %cst_133 : f32 to vector<6x8xf32>
    %1017 = arith.addf %1016, %1015 : vector<6x8xf32>
    %1018 = arith.divf %1016, %1017 : vector<6x8xf32>
    %1019 = vector.extract_strided_slice %1012 {offsets = [6, 0], sizes = [2, 8], strides = [1, 1]} : vector<8x8xf32> to vector<2x8xf32>
    %1020 = math.tanh %1019 : vector<2x8xf32>
    %1021 = vector.extract_strided_slice %1018 {offsets = [0, 0], sizes = [2, 8], strides = [1, 1]} : vector<6x8xf32> to vector<2x8xf32>
    %1022 = vector.extract_strided_slice %1018 {offsets = [2, 0], sizes = [2, 8], strides = [1, 1]} : vector<6x8xf32> to vector<2x8xf32>
    %1023 = vector.extract_strided_slice %1018 {offsets = [4, 0], sizes = [2, 8], strides = [1, 1]} : vector<6x8xf32> to vector<2x8xf32>
    %1024 = arith.mulf %1022, %937 : vector<2x8xf32>
    %1025 = arith.mulf %1021, %1020 : vector<2x8xf32>
    %1026 = arith.addf %1024, %1025 : vector<2x8xf32>
    %1027 = math.tanh %1026 : vector<2x8xf32>
    %1028 = arith.mulf %1023, %1027 : vector<2x8xf32>
    %1029 = vector.extract_strided_slice %1028 {offsets = [0, 0], sizes = [1, 8], strides = [1, 1]} : vector<2x8xf32> to vector<1x8xf32>
    %c0_134 = arith.constant 0 : index
    %c1_135 = arith.constant 1 : index
    %c0_136 = arith.constant 0 : index
    %1030 = vector.load %arg18[%c0_134, %c1_135, %c0_136] : memref<2x9x8xf32, #tpu.memory_space<vmem>>, vector<1x1x8xf32>
    %1031 = vector.shape_cast %1030 : vector<1x1x8xf32> to vector<1x8xf32>
    %1032 = vector.shape_cast %1029 : vector<1x8xf32> to vector<1x1x8xf32>
    tpu.vector_store %arg18[%c0_134, %c1_135, %c0_136], %1032 {strides = array<i32>} : memref<2x9x8xf32, #tpu.memory_space<vmem>>, vector<1x1x8xf32>,
    %1033 = vector.extract_strided_slice %1028 {offsets = [1, 0], sizes = [1, 8], strides = [1, 1]} : vector<2x8xf32> to vector<1x8xf32>
    %c1_137 = arith.constant 1 : index
    %c7_138 = arith.constant 7 : index
    %c0_139 = arith.constant 0 : index
    %1034 = vector.load %arg18[%c1_137, %c7_138, %c0_139] : memref<2x9x8xf32, #tpu.memory_space<vmem>>, vector<1x1x8xf32>
    %1035 = vector.shape_cast %1034 : vector<1x1x8xf32> to vector<1x8xf32>
    %1036 = vector.shape_cast %1033 : vector<1x8xf32> to vector<1x1x8xf32>
    tpu.vector_store %arg18[%c1_137, %c7_138, %c0_139], %1036 {strides = array<i32>} : memref<2x9x8xf32, #tpu.memory_space<vmem>>, vector<1x1x8xf32>,
    %c2_140 = arith.constant 2 : index
    %c0_141 = arith.constant 0 : index
    %c0_142 = arith.constant 0 : index
    %1037 = vector.load %arg19[%c2_140, %c0_141, %c0_142] : memref<9x4x8xf32, #tpu.memory_space<vmem>>, vector<1x4x8xf32>
    %1038 = vector.shape_cast %1037 : vector<1x4x8xf32> to vector<4x8xf32>
    %c6_143 = arith.constant 6 : index
    %c0_144 = arith.constant 0 : index
    %c0_145 = arith.constant 0 : index
    %1039 = vector.load %arg19[%c6_143, %c0_144, %c0_145] : memref<9x4x8xf32, #tpu.memory_space<vmem>>, vector<1x4x8xf32>
    %1040 = vector.shape_cast %1039 : vector<1x4x8xf32> to vector<4x8xf32>
    %1041 = vector.extract_strided_slice %853 {offsets = [0, 0], sizes = [8, 1], strides = [1, 1]} : vector<8x4xf32> to vector<8x1xf32>
    %1042 = vector.extract_strided_slice %1038 {offsets = [0, 0], sizes = [1, 8], strides = [1, 1]} : vector<4x8xf32> to vector<1x8xf32>
    %1043 = vector.broadcast %1041 : vector<8x1xf32> to vector<8x8xf32>
    %1044 = vector.broadcast %1042 : vector<1x8xf32> to vector<8x8xf32>
    %1045 = arith.mulf %1043, %1044 : vector<8x8xf32>
    %1046 = vector.extract_strided_slice %853 {offsets = [0, 1], sizes = [8, 1], strides = [1, 1]} : vector<8x4xf32> to vector<8x1xf32>
    %1047 = vector.extract_strided_slice %1038 {offsets = [1, 0], sizes = [1, 8], strides = [1, 1]} : vector<4x8xf32> to vector<1x8xf32>
    %1048 = vector.broadcast %1046 : vector<8x1xf32> to vector<8x8xf32>
    %1049 = vector.broadcast %1047 : vector<1x8xf32> to vector<8x8xf32>
    %1050 = arith.mulf %1048, %1049 : vector<8x8xf32>
    %1051 = arith.addf %1045, %1050 : vector<8x8xf32>
    %1052 = vector.extract_strided_slice %853 {offsets = [0, 2], sizes = [8, 1], strides = [1, 1]} : vector<8x4xf32> to vector<8x1xf32>
    %1053 = vector.extract_strided_slice %1038 {offsets = [2, 0], sizes = [1, 8], strides = [1, 1]} : vector<4x8xf32> to vector<1x8xf32>
    %1054 = vector.broadcast %1052 : vector<8x1xf32> to vector<8x8xf32>
    %1055 = vector.broadcast %1053 : vector<1x8xf32> to vector<8x8xf32>
    %1056 = arith.mulf %1054, %1055 : vector<8x8xf32>
    %1057 = arith.addf %1051, %1056 : vector<8x8xf32>
    %1058 = vector.extract_strided_slice %853 {offsets = [0, 3], sizes = [8, 1], strides = [1, 1]} : vector<8x4xf32> to vector<8x1xf32>
    %1059 = vector.extract_strided_slice %1038 {offsets = [3, 0], sizes = [1, 8], strides = [1, 1]} : vector<4x8xf32> to vector<1x8xf32>
    %1060 = vector.broadcast %1058 : vector<8x1xf32> to vector<8x8xf32>
    %1061 = vector.broadcast %1059 : vector<1x8xf32> to vector<8x8xf32>
    %1062 = arith.mulf %1060, %1061 : vector<8x8xf32>
    %1063 = arith.addf %1057, %1062 : vector<8x8xf32>
    %1064 = vector.extract_strided_slice %854 {offsets = [0, 0], sizes = [8, 1], strides = [1, 1]} : vector<8x4xf32> to vector<8x1xf32>
    %1065 = vector.extract_strided_slice %1040 {offsets = [0, 0], sizes = [1, 8], strides = [1, 1]} : vector<4x8xf32> to vector<1x8xf32>
    %1066 = vector.broadcast %1064 : vector<8x1xf32> to vector<8x8xf32>
    %1067 = vector.broadcast %1065 : vector<1x8xf32> to vector<8x8xf32>
    %1068 = arith.mulf %1066, %1067 : vector<8x8xf32>
    %1069 = vector.extract_strided_slice %854 {offsets = [0, 1], sizes = [8, 1], strides = [1, 1]} : vector<8x4xf32> to vector<8x1xf32>
    %1070 = vector.extract_strided_slice %1040 {offsets = [1, 0], sizes = [1, 8], strides = [1, 1]} : vector<4x8xf32> to vector<1x8xf32>
    %1071 = vector.broadcast %1069 : vector<8x1xf32> to vector<8x8xf32>
    %1072 = vector.broadcast %1070 : vector<1x8xf32> to vector<8x8xf32>
    %1073 = arith.mulf %1071, %1072 : vector<8x8xf32>
    %1074 = arith.addf %1068, %1073 : vector<8x8xf32>
    %1075 = vector.extract_strided_slice %854 {offsets = [0, 2], sizes = [8, 1], strides = [1, 1]} : vector<8x4xf32> to vector<8x1xf32>
    %1076 = vector.extract_strided_slice %1040 {offsets = [2, 0], sizes = [1, 8], strides = [1, 1]} : vector<4x8xf32> to vector<1x8xf32>
    %1077 = vector.broadcast %1075 : vector<8x1xf32> to vector<8x8xf32>
    %1078 = vector.broadcast %1076 : vector<1x8xf32> to vector<8x8xf32>
    %1079 = arith.mulf %1077, %1078 : vector<8x8xf32>
    %1080 = arith.addf %1074, %1079 : vector<8x8xf32>
    %1081 = vector.extract_strided_slice %854 {offsets = [0, 3], sizes = [8, 1], strides = [1, 1]} : vector<8x4xf32> to vector<8x1xf32>
    %1082 = vector.extract_strided_slice %1040 {offsets = [3, 0], sizes = [1, 8], strides = [1, 1]} : vector<4x8xf32> to vector<1x8xf32>
    %1083 = vector.broadcast %1081 : vector<8x1xf32> to vector<8x8xf32>
    %1084 = vector.broadcast %1082 : vector<1x8xf32> to vector<8x8xf32>
    %1085 = arith.mulf %1083, %1084 : vector<8x8xf32>
    %1086 = arith.addf %1080, %1085 : vector<8x8xf32>
    %1087 = arith.addf %1063, %1086 : vector<8x8xf32>
    %1088 = vector.extract_strided_slice %855 {offsets = [0, 0], sizes = [8, 1], strides = [1, 1]} : vector<8x2xf32> to vector<8x1xf32>
    %1089 = vector.extract_strided_slice %1028 {offsets = [0, 0], sizes = [1, 8], strides = [1, 1]} : vector<2x8xf32> to vector<1x8xf32>
    %1090 = vector.broadcast %1088 : vector<8x1xf32> to vector<8x8xf32>
    %1091 = vector.broadcast %1089 : vector<1x8xf32> to vector<8x8xf32>
    %1092 = arith.mulf %1090, %1091 : vector<8x8xf32>
    %1093 = vector.extract_strided_slice %855 {offsets = [0, 1], sizes = [8, 1], strides = [1, 1]} : vector<8x2xf32> to vector<8x1xf32>
    %1094 = vector.extract_strided_slice %1028 {offsets = [1, 0], sizes = [1, 8], strides = [1, 1]} : vector<2x8xf32> to vector<1x8xf32>
    %1095 = vector.broadcast %1093 : vector<8x1xf32> to vector<8x8xf32>
    %1096 = vector.broadcast %1094 : vector<1x8xf32> to vector<8x8xf32>
    %1097 = arith.mulf %1095, %1096 : vector<8x8xf32>
    %1098 = arith.addf %1092, %1097 : vector<8x8xf32>
    %1099 = arith.addf %1087, %1098 : vector<8x8xf32>
    %1100 = vector.broadcast %856 : vector<8x1xf32> to vector<8x8xf32>
    %1101 = arith.addf %1099, %1100 : vector<8x8xf32>
    %1102 = vector.extract_strided_slice %1101 {offsets = [0, 0], sizes = [6, 8], strides = [1, 1]} : vector<8x8xf32> to vector<6x8xf32>
    %1103 = arith.negf %1102 : vector<6x8xf32>
    %1104 = math.exp %1103 : vector<6x8xf32>
    %cst_146 = arith.constant 1.000000e+00 : f32
    %1105 = vector.broadcast %cst_146 : f32 to vector<6x8xf32>
    %1106 = arith.addf %1105, %1104 : vector<6x8xf32>
    %1107 = arith.divf %1105, %1106 : vector<6x8xf32>
    %1108 = vector.extract_strided_slice %1101 {offsets = [6, 0], sizes = [2, 8], strides = [1, 1]} : vector<8x8xf32> to vector<2x8xf32>
    %1109 = math.tanh %1108 : vector<2x8xf32>
    %1110 = vector.extract_strided_slice %1107 {offsets = [0, 0], sizes = [2, 8], strides = [1, 1]} : vector<6x8xf32> to vector<2x8xf32>
    %1111 = vector.extract_strided_slice %1107 {offsets = [2, 0], sizes = [2, 8], strides = [1, 1]} : vector<6x8xf32> to vector<2x8xf32>
    %1112 = vector.extract_strided_slice %1107 {offsets = [4, 0], sizes = [2, 8], strides = [1, 1]} : vector<6x8xf32> to vector<2x8xf32>
    %1113 = arith.mulf %1111, %1026 : vector<2x8xf32>
    %1114 = arith.mulf %1110, %1109 : vector<2x8xf32>
    %1115 = arith.addf %1113, %1114 : vector<2x8xf32>
    %1116 = math.tanh %1115 : vector<2x8xf32>
    %1117 = arith.mulf %1112, %1116 : vector<2x8xf32>
    %1118 = vector.extract_strided_slice %1117 {offsets = [0, 0], sizes = [1, 8], strides = [1, 1]} : vector<2x8xf32> to vector<1x8xf32>
    %c0_147 = arith.constant 0 : index
    %c2_148 = arith.constant 2 : index
    %c0_149 = arith.constant 0 : index
    %1119 = vector.load %arg18[%c0_147, %c2_148, %c0_149] : memref<2x9x8xf32, #tpu.memory_space<vmem>>, vector<1x1x8xf32>
    %1120 = vector.shape_cast %1119 : vector<1x1x8xf32> to vector<1x8xf32>
    %1121 = vector.shape_cast %1118 : vector<1x8xf32> to vector<1x1x8xf32>
    tpu.vector_store %arg18[%c0_147, %c2_148, %c0_149], %1121 {strides = array<i32>} : memref<2x9x8xf32, #tpu.memory_space<vmem>>, vector<1x1x8xf32>,
    %1122 = vector.extract_strided_slice %1117 {offsets = [1, 0], sizes = [1, 8], strides = [1, 1]} : vector<2x8xf32> to vector<1x8xf32>
    %c1_150 = arith.constant 1 : index
    %c6_151 = arith.constant 6 : index
    %c0_152 = arith.constant 0 : index
    %1123 = vector.load %arg18[%c1_150, %c6_151, %c0_152] : memref<2x9x8xf32, #tpu.memory_space<vmem>>, vector<1x1x8xf32>
    %1124 = vector.shape_cast %1123 : vector<1x1x8xf32> to vector<1x8xf32>
    %1125 = vector.shape_cast %1122 : vector<1x8xf32> to vector<1x1x8xf32>
    tpu.vector_store %arg18[%c1_150, %c6_151, %c0_152], %1125 {strides = array<i32>} : memref<2x9x8xf32, #tpu.memory_space<vmem>>, vector<1x1x8xf32>,
    %c3_153 = arith.constant 3 : index
    %c0_154 = arith.constant 0 : index
    %c0_155 = arith.constant 0 : index
    %1126 = vector.load %arg19[%c3_153, %c0_154, %c0_155] : memref<9x4x8xf32, #tpu.memory_space<vmem>>, vector<1x4x8xf32>
    %1127 = vector.shape_cast %1126 : vector<1x4x8xf32> to vector<4x8xf32>
    %c5_156 = arith.constant 5 : index
    %c0_157 = arith.constant 0 : index
    %c0_158 = arith.constant 0 : index
    %1128 = vector.load %arg19[%c5_156, %c0_157, %c0_158] : memref<9x4x8xf32, #tpu.memory_space<vmem>>, vector<1x4x8xf32>
    %1129 = vector.shape_cast %1128 : vector<1x4x8xf32> to vector<4x8xf32>
    %1130 = vector.extract_strided_slice %853 {offsets = [0, 0], sizes = [8, 1], strides = [1, 1]} : vector<8x4xf32> to vector<8x1xf32>
    %1131 = vector.extract_strided_slice %1127 {offsets = [0, 0], sizes = [1, 8], strides = [1, 1]} : vector<4x8xf32> to vector<1x8xf32>
    %1132 = vector.broadcast %1130 : vector<8x1xf32> to vector<8x8xf32>
    %1133 = vector.broadcast %1131 : vector<1x8xf32> to vector<8x8xf32>
    %1134 = arith.mulf %1132, %1133 : vector<8x8xf32>
    %1135 = vector.extract_strided_slice %853 {offsets = [0, 1], sizes = [8, 1], strides = [1, 1]} : vector<8x4xf32> to vector<8x1xf32>
    %1136 = vector.extract_strided_slice %1127 {offsets = [1, 0], sizes = [1, 8], strides = [1, 1]} : vector<4x8xf32> to vector<1x8xf32>
    %1137 = vector.broadcast %1135 : vector<8x1xf32> to vector<8x8xf32>
    %1138 = vector.broadcast %1136 : vector<1x8xf32> to vector<8x8xf32>
    %1139 = arith.mulf %1137, %1138 : vector<8x8xf32>
    %1140 = arith.addf %1134, %1139 : vector<8x8xf32>
    %1141 = vector.extract_strided_slice %853 {offsets = [0, 2], sizes = [8, 1], strides = [1, 1]} : vector<8x4xf32> to vector<8x1xf32>
    %1142 = vector.extract_strided_slice %1127 {offsets = [2, 0], sizes = [1, 8], strides = [1, 1]} : vector<4x8xf32> to vector<1x8xf32>
    %1143 = vector.broadcast %1141 : vector<8x1xf32> to vector<8x8xf32>
    %1144 = vector.broadcast %1142 : vector<1x8xf32> to vector<8x8xf32>
    %1145 = arith.mulf %1143, %1144 : vector<8x8xf32>
    %1146 = arith.addf %1140, %1145 : vector<8x8xf32>
    %1147 = vector.extract_strided_slice %853 {offsets = [0, 3], sizes = [8, 1], strides = [1, 1]} : vector<8x4xf32> to vector<8x1xf32>
    %1148 = vector.extract_strided_slice %1127 {offsets = [3, 0], sizes = [1, 8], strides = [1, 1]} : vector<4x8xf32> to vector<1x8xf32>
    %1149 = vector.broadcast %1147 : vector<8x1xf32> to vector<8x8xf32>
    %1150 = vector.broadcast %1148 : vector<1x8xf32> to vector<8x8xf32>
    %1151 = arith.mulf %1149, %1150 : vector<8x8xf32>
    %1152 = arith.addf %1146, %1151 : vector<8x8xf32>
    %1153 = vector.extract_strided_slice %854 {offsets = [0, 0], sizes = [8, 1], strides = [1, 1]} : vector<8x4xf32> to vector<8x1xf32>
    %1154 = vector.extract_strided_slice %1129 {offsets = [0, 0], sizes = [1, 8], strides = [1, 1]} : vector<4x8xf32> to vector<1x8xf32>
    %1155 = vector.broadcast %1153 : vector<8x1xf32> to vector<8x8xf32>
    %1156 = vector.broadcast %1154 : vector<1x8xf32> to vector<8x8xf32>
    %1157 = arith.mulf %1155, %1156 : vector<8x8xf32>
    %1158 = vector.extract_strided_slice %854 {offsets = [0, 1], sizes = [8, 1], strides = [1, 1]} : vector<8x4xf32> to vector<8x1xf32>
    %1159 = vector.extract_strided_slice %1129 {offsets = [1, 0], sizes = [1, 8], strides = [1, 1]} : vector<4x8xf32> to vector<1x8xf32>
    %1160 = vector.broadcast %1158 : vector<8x1xf32> to vector<8x8xf32>
    %1161 = vector.broadcast %1159 : vector<1x8xf32> to vector<8x8xf32>
    %1162 = arith.mulf %1160, %1161 : vector<8x8xf32>
    %1163 = arith.addf %1157, %1162 : vector<8x8xf32>
    %1164 = vector.extract_strided_slice %854 {offsets = [0, 2], sizes = [8, 1], strides = [1, 1]} : vector<8x4xf32> to vector<8x1xf32>
    %1165 = vector.extract_strided_slice %1129 {offsets = [2, 0], sizes = [1, 8], strides = [1, 1]} : vector<4x8xf32> to vector<1x8xf32>
    %1166 = vector.broadcast %1164 : vector<8x1xf32> to vector<8x8xf32>
    %1167 = vector.broadcast %1165 : vector<1x8xf32> to vector<8x8xf32>
    %1168 = arith.mulf %1166, %1167 : vector<8x8xf32>
    %1169 = arith.addf %1163, %1168 : vector<8x8xf32>
    %1170 = vector.extract_strided_slice %854 {offsets = [0, 3], sizes = [8, 1], strides = [1, 1]} : vector<8x4xf32> to vector<8x1xf32>
    %1171 = vector.extract_strided_slice %1129 {offsets = [3, 0], sizes = [1, 8], strides = [1, 1]} : vector<4x8xf32> to vector<1x8xf32>
    %1172 = vector.broadcast %1170 : vector<8x1xf32> to vector<8x8xf32>
    %1173 = vector.broadcast %1171 : vector<1x8xf32> to vector<8x8xf32>
    %1174 = arith.mulf %1172, %1173 : vector<8x8xf32>
    %1175 = arith.addf %1169, %1174 : vector<8x8xf32>
    %1176 = arith.addf %1152, %1175 : vector<8x8xf32>
    %1177 = vector.extract_strided_slice %855 {offsets = [0, 0], sizes = [8, 1], strides = [1, 1]} : vector<8x2xf32> to vector<8x1xf32>
    %1178 = vector.extract_strided_slice %1117 {offsets = [0, 0], sizes = [1, 8], strides = [1, 1]} : vector<2x8xf32> to vector<1x8xf32>
    %1179 = vector.broadcast %1177 : vector<8x1xf32> to vector<8x8xf32>
    %1180 = vector.broadcast %1178 : vector<1x8xf32> to vector<8x8xf32>
    %1181 = arith.mulf %1179, %1180 : vector<8x8xf32>
    %1182 = vector.extract_strided_slice %855 {offsets = [0, 1], sizes = [8, 1], strides = [1, 1]} : vector<8x2xf32> to vector<8x1xf32>
    %1183 = vector.extract_strided_slice %1117 {offsets = [1, 0], sizes = [1, 8], strides = [1, 1]} : vector<2x8xf32> to vector<1x8xf32>
    %1184 = vector.broadcast %1182 : vector<8x1xf32> to vector<8x8xf32>
    %1185 = vector.broadcast %1183 : vector<1x8xf32> to vector<8x8xf32>
    %1186 = arith.mulf %1184, %1185 : vector<8x8xf32>
    %1187 = arith.addf %1181, %1186 : vector<8x8xf32>
    %1188 = arith.addf %1176, %1187 : vector<8x8xf32>
    %1189 = vector.broadcast %856 : vector<8x1xf32> to vector<8x8xf32>
    %1190 = arith.addf %1188, %1189 : vector<8x8xf32>
    %1191 = vector.extract_strided_slice %1190 {offsets = [0, 0], sizes = [6, 8], strides = [1, 1]} : vector<8x8xf32> to vector<6x8xf32>
    %1192 = arith.negf %1191 : vector<6x8xf32>
    %1193 = math.exp %1192 : vector<6x8xf32>
    %cst_159 = arith.constant 1.000000e+00 : f32
    %1194 = vector.broadcast %cst_159 : f32 to vector<6x8xf32>
    %1195 = arith.addf %1194, %1193 : vector<6x8xf32>
    %1196 = arith.divf %1194, %1195 : vector<6x8xf32>
    %1197 = vector.extract_strided_slice %1190 {offsets = [6, 0], sizes = [2, 8], strides = [1, 1]} : vector<8x8xf32> to vector<2x8xf32>
    %1198 = math.tanh %1197 : vector<2x8xf32>
    %1199 = vector.extract_strided_slice %1196 {offsets = [0, 0], sizes = [2, 8], strides = [1, 1]} : vector<6x8xf32> to vector<2x8xf32>
    %1200 = vector.extract_strided_slice %1196 {offsets = [2, 0], sizes = [2, 8], strides = [1, 1]} : vector<6x8xf32> to vector<2x8xf32>
    %1201 = vector.extract_strided_slice %1196 {offsets = [4, 0], sizes = [2, 8], strides = [1, 1]} : vector<6x8xf32> to vector<2x8xf32>
    %1202 = arith.mulf %1200, %1115 : vector<2x8xf32>
    %1203 = arith.mulf %1199, %1198 : vector<2x8xf32>
    %1204 = arith.addf %1202, %1203 : vector<2x8xf32>
    %1205 = math.tanh %1204 : vector<2x8xf32>
    %1206 = arith.mulf %1201, %1205 : vector<2x8xf32>
    %1207 = vector.extract_strided_slice %1206 {offsets = [0, 0], sizes = [1, 8], strides = [1, 1]} : vector<2x8xf32> to vector<1x8xf32>
    %c0_160 = arith.constant 0 : index
    %c3_161 = arith.constant 3 : index
    %c0_162 = arith.constant 0 : index
    %1208 = vector.load %arg18[%c0_160, %c3_161, %c0_162] : memref<2x9x8xf32, #tpu.memory_space<vmem>>, vector<1x1x8xf32>
    %1209 = vector.shape_cast %1208 : vector<1x1x8xf32> to vector<1x8xf32>
    %1210 = vector.shape_cast %1207 : vector<1x8xf32> to vector<1x1x8xf32>
    tpu.vector_store %arg18[%c0_160, %c3_161, %c0_162], %1210 {strides = array<i32>} : memref<2x9x8xf32, #tpu.memory_space<vmem>>, vector<1x1x8xf32>,
    %1211 = vector.extract_strided_slice %1206 {offsets = [1, 0], sizes = [1, 8], strides = [1, 1]} : vector<2x8xf32> to vector<1x8xf32>
    %c1_163 = arith.constant 1 : index
    %c5_164 = arith.constant 5 : index
    %c0_165 = arith.constant 0 : index
    %1212 = vector.load %arg18[%c1_163, %c5_164, %c0_165] : memref<2x9x8xf32, #tpu.memory_space<vmem>>, vector<1x1x8xf32>
    %1213 = vector.shape_cast %1212 : vector<1x1x8xf32> to vector<1x8xf32>
    %1214 = vector.shape_cast %1211 : vector<1x8xf32> to vector<1x1x8xf32>
    tpu.vector_store %arg18[%c1_163, %c5_164, %c0_165], %1214 {strides = array<i32>} : memref<2x9x8xf32, #tpu.memory_space<vmem>>, vector<1x1x8xf32>,
    %c4_166 = arith.constant 4 : index
    %c0_167 = arith.constant 0 : index
    %c0_168 = arith.constant 0 : index
    %1215 = vector.load %arg19[%c4_166, %c0_167, %c0_168] : memref<9x4x8xf32, #tpu.memory_space<vmem>>, vector<1x4x8xf32>
    %1216 = vector.shape_cast %1215 : vector<1x4x8xf32> to vector<4x8xf32>
    %c4_169 = arith.constant 4 : index
    %c0_170 = arith.constant 0 : index
    %c0_171 = arith.constant 0 : index
    %1217 = vector.load %arg19[%c4_169, %c0_170, %c0_171] : memref<9x4x8xf32, #tpu.memory_space<vmem>>, vector<1x4x8xf32>
    %1218 = vector.shape_cast %1217 : vector<1x4x8xf32> to vector<4x8xf32>
    %1219 = vector.extract_strided_slice %853 {offsets = [0, 0], sizes = [8, 1], strides = [1, 1]} : vector<8x4xf32> to vector<8x1xf32>
    %1220 = vector.extract_strided_slice %1216 {offsets = [0, 0], sizes = [1, 8], strides = [1, 1]} : vector<4x8xf32> to vector<1x8xf32>
    %1221 = vector.broadcast %1219 : vector<8x1xf32> to vector<8x8xf32>
    %1222 = vector.broadcast %1220 : vector<1x8xf32> to vector<8x8xf32>
    %1223 = arith.mulf %1221, %1222 : vector<8x8xf32>
    %1224 = vector.extract_strided_slice %853 {offsets = [0, 1], sizes = [8, 1], strides = [1, 1]} : vector<8x4xf32> to vector<8x1xf32>
    %1225 = vector.extract_strided_slice %1216 {offsets = [1, 0], sizes = [1, 8], strides = [1, 1]} : vector<4x8xf32> to vector<1x8xf32>
    %1226 = vector.broadcast %1224 : vector<8x1xf32> to vector<8x8xf32>
    %1227 = vector.broadcast %1225 : vector<1x8xf32> to vector<8x8xf32>
    %1228 = arith.mulf %1226, %1227 : vector<8x8xf32>
    %1229 = arith.addf %1223, %1228 : vector<8x8xf32>
    %1230 = vector.extract_strided_slice %853 {offsets = [0, 2], sizes = [8, 1], strides = [1, 1]} : vector<8x4xf32> to vector<8x1xf32>
    %1231 = vector.extract_strided_slice %1216 {offsets = [2, 0], sizes = [1, 8], strides = [1, 1]} : vector<4x8xf32> to vector<1x8xf32>
    %1232 = vector.broadcast %1230 : vector<8x1xf32> to vector<8x8xf32>
    %1233 = vector.broadcast %1231 : vector<1x8xf32> to vector<8x8xf32>
    %1234 = arith.mulf %1232, %1233 : vector<8x8xf32>
    %1235 = arith.addf %1229, %1234 : vector<8x8xf32>
    %1236 = vector.extract_strided_slice %853 {offsets = [0, 3], sizes = [8, 1], strides = [1, 1]} : vector<8x4xf32> to vector<8x1xf32>
    %1237 = vector.extract_strided_slice %1216 {offsets = [3, 0], sizes = [1, 8], strides = [1, 1]} : vector<4x8xf32> to vector<1x8xf32>
    %1238 = vector.broadcast %1236 : vector<8x1xf32> to vector<8x8xf32>
    %1239 = vector.broadcast %1237 : vector<1x8xf32> to vector<8x8xf32>
    %1240 = arith.mulf %1238, %1239 : vector<8x8xf32>
    %1241 = arith.addf %1235, %1240 : vector<8x8xf32>
    %1242 = vector.extract_strided_slice %854 {offsets = [0, 0], sizes = [8, 1], strides = [1, 1]} : vector<8x4xf32> to vector<8x1xf32>
    %1243 = vector.extract_strided_slice %1218 {offsets = [0, 0], sizes = [1, 8], strides = [1, 1]} : vector<4x8xf32> to vector<1x8xf32>
    %1244 = vector.broadcast %1242 : vector<8x1xf32> to vector<8x8xf32>
    %1245 = vector.broadcast %1243 : vector<1x8xf32> to vector<8x8xf32>
    %1246 = arith.mulf %1244, %1245 : vector<8x8xf32>
    %1247 = vector.extract_strided_slice %854 {offsets = [0, 1], sizes = [8, 1], strides = [1, 1]} : vector<8x4xf32> to vector<8x1xf32>
    %1248 = vector.extract_strided_slice %1218 {offsets = [1, 0], sizes = [1, 8], strides = [1, 1]} : vector<4x8xf32> to vector<1x8xf32>
    %1249 = vector.broadcast %1247 : vector<8x1xf32> to vector<8x8xf32>
    %1250 = vector.broadcast %1248 : vector<1x8xf32> to vector<8x8xf32>
    %1251 = arith.mulf %1249, %1250 : vector<8x8xf32>
    %1252 = arith.addf %1246, %1251 : vector<8x8xf32>
    %1253 = vector.extract_strided_slice %854 {offsets = [0, 2], sizes = [8, 1], strides = [1, 1]} : vector<8x4xf32> to vector<8x1xf32>
    %1254 = vector.extract_strided_slice %1218 {offsets = [2, 0], sizes = [1, 8], strides = [1, 1]} : vector<4x8xf32> to vector<1x8xf32>
    %1255 = vector.broadcast %1253 : vector<8x1xf32> to vector<8x8xf32>
    %1256 = vector.broadcast %1254 : vector<1x8xf32> to vector<8x8xf32>
    %1257 = arith.mulf %1255, %1256 : vector<8x8xf32>
    %1258 = arith.addf %1252, %1257 : vector<8x8xf32>
    %1259 = vector.extract_strided_slice %854 {offsets = [0, 3], sizes = [8, 1], strides = [1, 1]} : vector<8x4xf32> to vector<8x1xf32>
    %1260 = vector.extract_strided_slice %1218 {offsets = [3, 0], sizes = [1, 8], strides = [1, 1]} : vector<4x8xf32> to vector<1x8xf32>
    %1261 = vector.broadcast %1259 : vector<8x1xf32> to vector<8x8xf32>
    %1262 = vector.broadcast %1260 : vector<1x8xf32> to vector<8x8xf32>
    %1263 = arith.mulf %1261, %1262 : vector<8x8xf32>
    %1264 = arith.addf %1258, %1263 : vector<8x8xf32>
    %1265 = arith.addf %1241, %1264 : vector<8x8xf32>
    %1266 = vector.extract_strided_slice %855 {offsets = [0, 0], sizes = [8, 1], strides = [1, 1]} : vector<8x2xf32> to vector<8x1xf32>
    %1267 = vector.extract_strided_slice %1206 {offsets = [0, 0], sizes = [1, 8], strides = [1, 1]} : vector<2x8xf32> to vector<1x8xf32>
    %1268 = vector.broadcast %1266 : vector<8x1xf32> to vector<8x8xf32>
    %1269 = vector.broadcast %1267 : vector<1x8xf32> to vector<8x8xf32>
    %1270 = arith.mulf %1268, %1269 : vector<8x8xf32>
    %1271 = vector.extract_strided_slice %855 {offsets = [0, 1], sizes = [8, 1], strides = [1, 1]} : vector<8x2xf32> to vector<8x1xf32>
    %1272 = vector.extract_strided_slice %1206 {offsets = [1, 0], sizes = [1, 8], strides = [1, 1]} : vector<2x8xf32> to vector<1x8xf32>
    %1273 = vector.broadcast %1271 : vector<8x1xf32> to vector<8x8xf32>
    %1274 = vector.broadcast %1272 : vector<1x8xf32> to vector<8x8xf32>
    %1275 = arith.mulf %1273, %1274 : vector<8x8xf32>
    %1276 = arith.addf %1270, %1275 : vector<8x8xf32>
    %1277 = arith.addf %1265, %1276 : vector<8x8xf32>
    %1278 = vector.broadcast %856 : vector<8x1xf32> to vector<8x8xf32>
    %1279 = arith.addf %1277, %1278 : vector<8x8xf32>
    %1280 = vector.extract_strided_slice %1279 {offsets = [0, 0], sizes = [6, 8], strides = [1, 1]} : vector<8x8xf32> to vector<6x8xf32>
    %1281 = arith.negf %1280 : vector<6x8xf32>
    %1282 = math.exp %1281 : vector<6x8xf32>
    %cst_172 = arith.constant 1.000000e+00 : f32
    %1283 = vector.broadcast %cst_172 : f32 to vector<6x8xf32>
    %1284 = arith.addf %1283, %1282 : vector<6x8xf32>
    %1285 = arith.divf %1283, %1284 : vector<6x8xf32>
    %1286 = vector.extract_strided_slice %1279 {offsets = [6, 0], sizes = [2, 8], strides = [1, 1]} : vector<8x8xf32> to vector<2x8xf32>
    %1287 = math.tanh %1286 : vector<2x8xf32>
    %1288 = vector.extract_strided_slice %1285 {offsets = [0, 0], sizes = [2, 8], strides = [1, 1]} : vector<6x8xf32> to vector<2x8xf32>
    %1289 = vector.extract_strided_slice %1285 {offsets = [2, 0], sizes = [2, 8], strides = [1, 1]} : vector<6x8xf32> to vector<2x8xf32>
    %1290 = vector.extract_strided_slice %1285 {offsets = [4, 0], sizes = [2, 8], strides = [1, 1]} : vector<6x8xf32> to vector<2x8xf32>
    %1291 = arith.mulf %1289, %1204 : vector<2x8xf32>
    %1292 = arith.mulf %1288, %1287 : vector<2x8xf32>
    %1293 = arith.addf %1291, %1292 : vector<2x8xf32>
    %1294 = math.tanh %1293 : vector<2x8xf32>
    %1295 = arith.mulf %1290, %1294 : vector<2x8xf32>
    %1296 = vector.extract_strided_slice %1295 {offsets = [0, 0], sizes = [1, 8], strides = [1, 1]} : vector<2x8xf32> to vector<1x8xf32>
    %c0_173 = arith.constant 0 : index
    %c4_174 = arith.constant 4 : index
    %c0_175 = arith.constant 0 : index
    %1297 = vector.load %arg18[%c0_173, %c4_174, %c0_175] : memref<2x9x8xf32, #tpu.memory_space<vmem>>, vector<1x1x8xf32>
    %1298 = vector.shape_cast %1297 : vector<1x1x8xf32> to vector<1x8xf32>
    %1299 = vector.shape_cast %1296 : vector<1x8xf32> to vector<1x1x8xf32>
    tpu.vector_store %arg18[%c0_173, %c4_174, %c0_175], %1299 {strides = array<i32>} : memref<2x9x8xf32, #tpu.memory_space<vmem>>, vector<1x1x8xf32>,
    %1300 = vector.extract_strided_slice %1295 {offsets = [1, 0], sizes = [1, 8], strides = [1, 1]} : vector<2x8xf32> to vector<1x8xf32>
    %c1_176 = arith.constant 1 : index
    %c4_177 = arith.constant 4 : index
    %c0_178 = arith.constant 0 : index
    %1301 = vector.load %arg18[%c1_176, %c4_177, %c0_178] : memref<2x9x8xf32, #tpu.memory_space<vmem>>, vector<1x1x8xf32>
    %1302 = vector.shape_cast %1301 : vector<1x1x8xf32> to vector<1x8xf32>
    %1303 = vector.shape_cast %1300 : vector<1x8xf32> to vector<1x1x8xf32>
    tpu.vector_store %arg18[%c1_176, %c4_177, %c0_178], %1303 {strides = array<i32>} : memref<2x9x8xf32, #tpu.memory_space<vmem>>, vector<1x1x8xf32>,
    %c5_179 = arith.constant 5 : index
    %c0_180 = arith.constant 0 : index
    %c0_181 = arith.constant 0 : index
    %1304 = vector.load %arg19[%c5_179, %c0_180, %c0_181] : memref<9x4x8xf32, #tpu.memory_space<vmem>>, vector<1x4x8xf32>
    %1305 = vector.shape_cast %1304 : vector<1x4x8xf32> to vector<4x8xf32>
    %c3_182 = arith.constant 3 : index
    %c0_183 = arith.constant 0 : index
    %c0_184 = arith.constant 0 : index
    %1306 = vector.load %arg19[%c3_182, %c0_183, %c0_184] : memref<9x4x8xf32, #tpu.memory_space<vmem>>, vector<1x4x8xf32>
    %1307 = vector.shape_cast %1306 : vector<1x4x8xf32> to vector<4x8xf32>
    %1308 = vector.extract_strided_slice %853 {offsets = [0, 0], sizes = [8, 1], strides = [1, 1]} : vector<8x4xf32> to vector<8x1xf32>
    %1309 = vector.extract_strided_slice %1305 {offsets = [0, 0], sizes = [1, 8], strides = [1, 1]} : vector<4x8xf32> to vector<1x8xf32>
    %1310 = vector.broadcast %1308 : vector<8x1xf32> to vector<8x8xf32>
    %1311 = vector.broadcast %1309 : vector<1x8xf32> to vector<8x8xf32>
    %1312 = arith.mulf %1310, %1311 : vector<8x8xf32>
    %1313 = vector.extract_strided_slice %853 {offsets = [0, 1], sizes = [8, 1], strides = [1, 1]} : vector<8x4xf32> to vector<8x1xf32>
    %1314 = vector.extract_strided_slice %1305 {offsets = [1, 0], sizes = [1, 8], strides = [1, 1]} : vector<4x8xf32> to vector<1x8xf32>
    %1315 = vector.broadcast %1313 : vector<8x1xf32> to vector<8x8xf32>
    %1316 = vector.broadcast %1314 : vector<1x8xf32> to vector<8x8xf32>
    %1317 = arith.mulf %1315, %1316 : vector<8x8xf32>
    %1318 = arith.addf %1312, %1317 : vector<8x8xf32>
    %1319 = vector.extract_strided_slice %853 {offsets = [0, 2], sizes = [8, 1], strides = [1, 1]} : vector<8x4xf32> to vector<8x1xf32>
    %1320 = vector.extract_strided_slice %1305 {offsets = [2, 0], sizes = [1, 8], strides = [1, 1]} : vector<4x8xf32> to vector<1x8xf32>
    %1321 = vector.broadcast %1319 : vector<8x1xf32> to vector<8x8xf32>
    %1322 = vector.broadcast %1320 : vector<1x8xf32> to vector<8x8xf32>
    %1323 = arith.mulf %1321, %1322 : vector<8x8xf32>
    %1324 = arith.addf %1318, %1323 : vector<8x8xf32>
    %1325 = vector.extract_strided_slice %853 {offsets = [0, 3], sizes = [8, 1], strides = [1, 1]} : vector<8x4xf32> to vector<8x1xf32>
    %1326 = vector.extract_strided_slice %1305 {offsets = [3, 0], sizes = [1, 8], strides = [1, 1]} : vector<4x8xf32> to vector<1x8xf32>
    %1327 = vector.broadcast %1325 : vector<8x1xf32> to vector<8x8xf32>
    %1328 = vector.broadcast %1326 : vector<1x8xf32> to vector<8x8xf32>
    %1329 = arith.mulf %1327, %1328 : vector<8x8xf32>
    %1330 = arith.addf %1324, %1329 : vector<8x8xf32>
    %1331 = vector.extract_strided_slice %854 {offsets = [0, 0], sizes = [8, 1], strides = [1, 1]} : vector<8x4xf32> to vector<8x1xf32>
    %1332 = vector.extract_strided_slice %1307 {offsets = [0, 0], sizes = [1, 8], strides = [1, 1]} : vector<4x8xf32> to vector<1x8xf32>
    %1333 = vector.broadcast %1331 : vector<8x1xf32> to vector<8x8xf32>
    %1334 = vector.broadcast %1332 : vector<1x8xf32> to vector<8x8xf32>
    %1335 = arith.mulf %1333, %1334 : vector<8x8xf32>
    %1336 = vector.extract_strided_slice %854 {offsets = [0, 1], sizes = [8, 1], strides = [1, 1]} : vector<8x4xf32> to vector<8x1xf32>
    %1337 = vector.extract_strided_slice %1307 {offsets = [1, 0], sizes = [1, 8], strides = [1, 1]} : vector<4x8xf32> to vector<1x8xf32>
    %1338 = vector.broadcast %1336 : vector<8x1xf32> to vector<8x8xf32>
    %1339 = vector.broadcast %1337 : vector<1x8xf32> to vector<8x8xf32>
    %1340 = arith.mulf %1338, %1339 : vector<8x8xf32>
    %1341 = arith.addf %1335, %1340 : vector<8x8xf32>
    %1342 = vector.extract_strided_slice %854 {offsets = [0, 2], sizes = [8, 1], strides = [1, 1]} : vector<8x4xf32> to vector<8x1xf32>
    %1343 = vector.extract_strided_slice %1307 {offsets = [2, 0], sizes = [1, 8], strides = [1, 1]} : vector<4x8xf32> to vector<1x8xf32>
    %1344 = vector.broadcast %1342 : vector<8x1xf32> to vector<8x8xf32>
    %1345 = vector.broadcast %1343 : vector<1x8xf32> to vector<8x8xf32>
    %1346 = arith.mulf %1344, %1345 : vector<8x8xf32>
    %1347 = arith.addf %1341, %1346 : vector<8x8xf32>
    %1348 = vector.extract_strided_slice %854 {offsets = [0, 3], sizes = [8, 1], strides = [1, 1]} : vector<8x4xf32> to vector<8x1xf32>
    %1349 = vector.extract_strided_slice %1307 {offsets = [3, 0], sizes = [1, 8], strides = [1, 1]} : vector<4x8xf32> to vector<1x8xf32>
    %1350 = vector.broadcast %1348 : vector<8x1xf32> to vector<8x8xf32>
    %1351 = vector.broadcast %1349 : vector<1x8xf32> to vector<8x8xf32>
    %1352 = arith.mulf %1350, %1351 : vector<8x8xf32>
    %1353 = arith.addf %1347, %1352 : vector<8x8xf32>
    %1354 = arith.addf %1330, %1353 : vector<8x8xf32>
    %1355 = vector.extract_strided_slice %855 {offsets = [0, 0], sizes = [8, 1], strides = [1, 1]} : vector<8x2xf32> to vector<8x1xf32>
    %1356 = vector.extract_strided_slice %1295 {offsets = [0, 0], sizes = [1, 8], strides = [1, 1]} : vector<2x8xf32> to vector<1x8xf32>
    %1357 = vector.broadcast %1355 : vector<8x1xf32> to vector<8x8xf32>
    %1358 = vector.broadcast %1356 : vector<1x8xf32> to vector<8x8xf32>
    %1359 = arith.mulf %1357, %1358 : vector<8x8xf32>
    %1360 = vector.extract_strided_slice %855 {offsets = [0, 1], sizes = [8, 1], strides = [1, 1]} : vector<8x2xf32> to vector<8x1xf32>
    %1361 = vector.extract_strided_slice %1295 {offsets = [1, 0], sizes = [1, 8], strides = [1, 1]} : vector<2x8xf32> to vector<1x8xf32>
    %1362 = vector.broadcast %1360 : vector<8x1xf32> to vector<8x8xf32>
    %1363 = vector.broadcast %1361 : vector<1x8xf32> to vector<8x8xf32>
    %1364 = arith.mulf %1362, %1363 : vector<8x8xf32>
    %1365 = arith.addf %1359, %1364 : vector<8x8xf32>
    %1366 = arith.addf %1354, %1365 : vector<8x8xf32>
    %1367 = vector.broadcast %856 : vector<8x1xf32> to vector<8x8xf32>
    %1368 = arith.addf %1366, %1367 : vector<8x8xf32>
    %1369 = vector.extract_strided_slice %1368 {offsets = [0, 0], sizes = [6, 8], strides = [1, 1]} : vector<8x8xf32> to vector<6x8xf32>
    %1370 = arith.negf %1369 : vector<6x8xf32>
    %1371 = math.exp %1370 : vector<6x8xf32>
    %cst_185 = arith.constant 1.000000e+00 : f32
    %1372 = vector.broadcast %cst_185 : f32 to vector<6x8xf32>
    %1373 = arith.addf %1372, %1371 : vector<6x8xf32>
    %1374 = arith.divf %1372, %1373 : vector<6x8xf32>
    %1375 = vector.extract_strided_slice %1368 {offsets = [6, 0], sizes = [2, 8], strides = [1, 1]} : vector<8x8xf32> to vector<2x8xf32>
    %1376 = math.tanh %1375 : vector<2x8xf32>
    %1377 = vector.extract_strided_slice %1374 {offsets = [0, 0], sizes = [2, 8], strides = [1, 1]} : vector<6x8xf32> to vector<2x8xf32>
    %1378 = vector.extract_strided_slice %1374 {offsets = [2, 0], sizes = [2, 8], strides = [1, 1]} : vector<6x8xf32> to vector<2x8xf32>
    %1379 = vector.extract_strided_slice %1374 {offsets = [4, 0], sizes = [2, 8], strides = [1, 1]} : vector<6x8xf32> to vector<2x8xf32>
    %1380 = arith.mulf %1378, %1293 : vector<2x8xf32>
    %1381 = arith.mulf %1377, %1376 : vector<2x8xf32>
    %1382 = arith.addf %1380, %1381 : vector<2x8xf32>
    %1383 = math.tanh %1382 : vector<2x8xf32>
    %1384 = arith.mulf %1379, %1383 : vector<2x8xf32>
    %1385 = vector.extract_strided_slice %1384 {offsets = [0, 0], sizes = [1, 8], strides = [1, 1]} : vector<2x8xf32> to vector<1x8xf32>
    %c0_186 = arith.constant 0 : index
    %c5_187 = arith.constant 5 : index
    %c0_188 = arith.constant 0 : index
    %1386 = vector.load %arg18[%c0_186, %c5_187, %c0_188] : memref<2x9x8xf32, #tpu.memory_space<vmem>>, vector<1x1x8xf32>
    %1387 = vector.shape_cast %1386 : vector<1x1x8xf32> to vector<1x8xf32>
    %1388 = vector.shape_cast %1385 : vector<1x8xf32> to vector<1x1x8xf32>
    tpu.vector_store %arg18[%c0_186, %c5_187, %c0_188], %1388 {strides = array<i32>} : memref<2x9x8xf32, #tpu.memory_space<vmem>>, vector<1x1x8xf32>,
    %1389 = vector.extract_strided_slice %1384 {offsets = [1, 0], sizes = [1, 8], strides = [1, 1]} : vector<2x8xf32> to vector<1x8xf32>
    %c1_189 = arith.constant 1 : index
    %c3_190 = arith.constant 3 : index
    %c0_191 = arith.constant 0 : index
    %1390 = vector.load %arg18[%c1_189, %c3_190, %c0_191] : memref<2x9x8xf32, #tpu.memory_space<vmem>>, vector<1x1x8xf32>
    %1391 = vector.shape_cast %1390 : vector<1x1x8xf32> to vector<1x8xf32>
    %1392 = vector.shape_cast %1389 : vector<1x8xf32> to vector<1x1x8xf32>
    tpu.vector_store %arg18[%c1_189, %c3_190, %c0_191], %1392 {strides = array<i32>} : memref<2x9x8xf32, #tpu.memory_space<vmem>>, vector<1x1x8xf32>,
    %c6_192 = arith.constant 6 : index
    %c0_193 = arith.constant 0 : index
    %c0_194 = arith.constant 0 : index
    %1393 = vector.load %arg19[%c6_192, %c0_193, %c0_194] : memref<9x4x8xf32, #tpu.memory_space<vmem>>, vector<1x4x8xf32>
    %1394 = vector.shape_cast %1393 : vector<1x4x8xf32> to vector<4x8xf32>
    %c2_195 = arith.constant 2 : index
    %c0_196 = arith.constant 0 : index
    %c0_197 = arith.constant 0 : index
    %1395 = vector.load %arg19[%c2_195, %c0_196, %c0_197] : memref<9x4x8xf32, #tpu.memory_space<vmem>>, vector<1x4x8xf32>
    %1396 = vector.shape_cast %1395 : vector<1x4x8xf32> to vector<4x8xf32>
    %1397 = vector.extract_strided_slice %853 {offsets = [0, 0], sizes = [8, 1], strides = [1, 1]} : vector<8x4xf32> to vector<8x1xf32>
    %1398 = vector.extract_strided_slice %1394 {offsets = [0, 0], sizes = [1, 8], strides = [1, 1]} : vector<4x8xf32> to vector<1x8xf32>
    %1399 = vector.broadcast %1397 : vector<8x1xf32> to vector<8x8xf32>
    %1400 = vector.broadcast %1398 : vector<1x8xf32> to vector<8x8xf32>
    %1401 = arith.mulf %1399, %1400 : vector<8x8xf32>
    %1402 = vector.extract_strided_slice %853 {offsets = [0, 1], sizes = [8, 1], strides = [1, 1]} : vector<8x4xf32> to vector<8x1xf32>
    %1403 = vector.extract_strided_slice %1394 {offsets = [1, 0], sizes = [1, 8], strides = [1, 1]} : vector<4x8xf32> to vector<1x8xf32>
    %1404 = vector.broadcast %1402 : vector<8x1xf32> to vector<8x8xf32>
    %1405 = vector.broadcast %1403 : vector<1x8xf32> to vector<8x8xf32>
    %1406 = arith.mulf %1404, %1405 : vector<8x8xf32>
    %1407 = arith.addf %1401, %1406 : vector<8x8xf32>
    %1408 = vector.extract_strided_slice %853 {offsets = [0, 2], sizes = [8, 1], strides = [1, 1]} : vector<8x4xf32> to vector<8x1xf32>
    %1409 = vector.extract_strided_slice %1394 {offsets = [2, 0], sizes = [1, 8], strides = [1, 1]} : vector<4x8xf32> to vector<1x8xf32>
    %1410 = vector.broadcast %1408 : vector<8x1xf32> to vector<8x8xf32>
    %1411 = vector.broadcast %1409 : vector<1x8xf32> to vector<8x8xf32>
    %1412 = arith.mulf %1410, %1411 : vector<8x8xf32>
    %1413 = arith.addf %1407, %1412 : vector<8x8xf32>
    %1414 = vector.extract_strided_slice %853 {offsets = [0, 3], sizes = [8, 1], strides = [1, 1]} : vector<8x4xf32> to vector<8x1xf32>
    %1415 = vector.extract_strided_slice %1394 {offsets = [3, 0], sizes = [1, 8], strides = [1, 1]} : vector<4x8xf32> to vector<1x8xf32>
    %1416 = vector.broadcast %1414 : vector<8x1xf32> to vector<8x8xf32>
    %1417 = vector.broadcast %1415 : vector<1x8xf32> to vector<8x8xf32>
    %1418 = arith.mulf %1416, %1417 : vector<8x8xf32>
    %1419 = arith.addf %1413, %1418 : vector<8x8xf32>
    %1420 = vector.extract_strided_slice %854 {offsets = [0, 0], sizes = [8, 1], strides = [1, 1]} : vector<8x4xf32> to vector<8x1xf32>
    %1421 = vector.extract_strided_slice %1396 {offsets = [0, 0], sizes = [1, 8], strides = [1, 1]} : vector<4x8xf32> to vector<1x8xf32>
    %1422 = vector.broadcast %1420 : vector<8x1xf32> to vector<8x8xf32>
    %1423 = vector.broadcast %1421 : vector<1x8xf32> to vector<8x8xf32>
    %1424 = arith.mulf %1422, %1423 : vector<8x8xf32>
    %1425 = vector.extract_strided_slice %854 {offsets = [0, 1], sizes = [8, 1], strides = [1, 1]} : vector<8x4xf32> to vector<8x1xf32>
    %1426 = vector.extract_strided_slice %1396 {offsets = [1, 0], sizes = [1, 8], strides = [1, 1]} : vector<4x8xf32> to vector<1x8xf32>
    %1427 = vector.broadcast %1425 : vector<8x1xf32> to vector<8x8xf32>
    %1428 = vector.broadcast %1426 : vector<1x8xf32> to vector<8x8xf32>
    %1429 = arith.mulf %1427, %1428 : vector<8x8xf32>
    %1430 = arith.addf %1424, %1429 : vector<8x8xf32>
    %1431 = vector.extract_strided_slice %854 {offsets = [0, 2], sizes = [8, 1], strides = [1, 1]} : vector<8x4xf32> to vector<8x1xf32>
    %1432 = vector.extract_strided_slice %1396 {offsets = [2, 0], sizes = [1, 8], strides = [1, 1]} : vector<4x8xf32> to vector<1x8xf32>
    %1433 = vector.broadcast %1431 : vector<8x1xf32> to vector<8x8xf32>
    %1434 = vector.broadcast %1432 : vector<1x8xf32> to vector<8x8xf32>
    %1435 = arith.mulf %1433, %1434 : vector<8x8xf32>
    %1436 = arith.addf %1430, %1435 : vector<8x8xf32>
    %1437 = vector.extract_strided_slice %854 {offsets = [0, 3], sizes = [8, 1], strides = [1, 1]} : vector<8x4xf32> to vector<8x1xf32>
    %1438 = vector.extract_strided_slice %1396 {offsets = [3, 0], sizes = [1, 8], strides = [1, 1]} : vector<4x8xf32> to vector<1x8xf32>
    %1439 = vector.broadcast %1437 : vector<8x1xf32> to vector<8x8xf32>
    %1440 = vector.broadcast %1438 : vector<1x8xf32> to vector<8x8xf32>
    %1441 = arith.mulf %1439, %1440 : vector<8x8xf32>
    %1442 = arith.addf %1436, %1441 : vector<8x8xf32>
    %1443 = arith.addf %1419, %1442 : vector<8x8xf32>
    %1444 = vector.extract_strided_slice %855 {offsets = [0, 0], sizes = [8, 1], strides = [1, 1]} : vector<8x2xf32> to vector<8x1xf32>
    %1445 = vector.extract_strided_slice %1384 {offsets = [0, 0], sizes = [1, 8], strides = [1, 1]} : vector<2x8xf32> to vector<1x8xf32>
    %1446 = vector.broadcast %1444 : vector<8x1xf32> to vector<8x8xf32>
    %1447 = vector.broadcast %1445 : vector<1x8xf32> to vector<8x8xf32>
    %1448 = arith.mulf %1446, %1447 : vector<8x8xf32>
    %1449 = vector.extract_strided_slice %855 {offsets = [0, 1], sizes = [8, 1], strides = [1, 1]} : vector<8x2xf32> to vector<8x1xf32>
    %1450 = vector.extract_strided_slice %1384 {offsets = [1, 0], sizes = [1, 8], strides = [1, 1]} : vector<2x8xf32> to vector<1x8xf32>
    %1451 = vector.broadcast %1449 : vector<8x1xf32> to vector<8x8xf32>
    %1452 = vector.broadcast %1450 : vector<1x8xf32> to vector<8x8xf32>
    %1453 = arith.mulf %1451, %1452 : vector<8x8xf32>
    %1454 = arith.addf %1448, %1453 : vector<8x8xf32>
    %1455 = arith.addf %1443, %1454 : vector<8x8xf32>
    %1456 = vector.broadcast %856 : vector<8x1xf32> to vector<8x8xf32>
    %1457 = arith.addf %1455, %1456 : vector<8x8xf32>
    %1458 = vector.extract_strided_slice %1457 {offsets = [0, 0], sizes = [6, 8], strides = [1, 1]} : vector<8x8xf32> to vector<6x8xf32>
    %1459 = arith.negf %1458 : vector<6x8xf32>
    %1460 = math.exp %1459 : vector<6x8xf32>
    %cst_198 = arith.constant 1.000000e+00 : f32
    %1461 = vector.broadcast %cst_198 : f32 to vector<6x8xf32>
    %1462 = arith.addf %1461, %1460 : vector<6x8xf32>
    %1463 = arith.divf %1461, %1462 : vector<6x8xf32>
    %1464 = vector.extract_strided_slice %1457 {offsets = [6, 0], sizes = [2, 8], strides = [1, 1]} : vector<8x8xf32> to vector<2x8xf32>
    %1465 = math.tanh %1464 : vector<2x8xf32>
    %1466 = vector.extract_strided_slice %1463 {offsets = [0, 0], sizes = [2, 8], strides = [1, 1]} : vector<6x8xf32> to vector<2x8xf32>
    %1467 = vector.extract_strided_slice %1463 {offsets = [2, 0], sizes = [2, 8], strides = [1, 1]} : vector<6x8xf32> to vector<2x8xf32>
    %1468 = vector.extract_strided_slice %1463 {offsets = [4, 0], sizes = [2, 8], strides = [1, 1]} : vector<6x8xf32> to vector<2x8xf32>
    %1469 = arith.mulf %1467, %1382 : vector<2x8xf32>
    %1470 = arith.mulf %1466, %1465 : vector<2x8xf32>
    %1471 = arith.addf %1469, %1470 : vector<2x8xf32>
    %1472 = math.tanh %1471 : vector<2x8xf32>
    %1473 = arith.mulf %1468, %1472 : vector<2x8xf32>
    %1474 = vector.extract_strided_slice %1473 {offsets = [0, 0], sizes = [1, 8], strides = [1, 1]} : vector<2x8xf32> to vector<1x8xf32>
    %c0_199 = arith.constant 0 : index
    %c6_200 = arith.constant 6 : index
    %c0_201 = arith.constant 0 : index
    %1475 = vector.load %arg18[%c0_199, %c6_200, %c0_201] : memref<2x9x8xf32, #tpu.memory_space<vmem>>, vector<1x1x8xf32>
    %1476 = vector.shape_cast %1475 : vector<1x1x8xf32> to vector<1x8xf32>
    %1477 = vector.shape_cast %1474 : vector<1x8xf32> to vector<1x1x8xf32>
    tpu.vector_store %arg18[%c0_199, %c6_200, %c0_201], %1477 {strides = array<i32>} : memref<2x9x8xf32, #tpu.memory_space<vmem>>, vector<1x1x8xf32>,
    %1478 = vector.extract_strided_slice %1473 {offsets = [1, 0], sizes = [1, 8], strides = [1, 1]} : vector<2x8xf32> to vector<1x8xf32>
    %c1_202 = arith.constant 1 : index
    %c2_203 = arith.constant 2 : index
    %c0_204 = arith.constant 0 : index
    %1479 = vector.load %arg18[%c1_202, %c2_203, %c0_204] : memref<2x9x8xf32, #tpu.memory_space<vmem>>, vector<1x1x8xf32>
    %1480 = vector.shape_cast %1479 : vector<1x1x8xf32> to vector<1x8xf32>
    %1481 = vector.shape_cast %1478 : vector<1x8xf32> to vector<1x1x8xf32>
    tpu.vector_store %arg18[%c1_202, %c2_203, %c0_204], %1481 {strides = array<i32>} : memref<2x9x8xf32, #tpu.memory_space<vmem>>, vector<1x1x8xf32>,
    %c7_205 = arith.constant 7 : index
    %c0_206 = arith.constant 0 : index
    %c0_207 = arith.constant 0 : index
    %1482 = vector.load %arg19[%c7_205, %c0_206, %c0_207] : memref<9x4x8xf32, #tpu.memory_space<vmem>>, vector<1x4x8xf32>
    %1483 = vector.shape_cast %1482 : vector<1x4x8xf32> to vector<4x8xf32>
    %c1_208 = arith.constant 1 : index
    %c0_209 = arith.constant 0 : index
    %c0_210 = arith.constant 0 : index
    %1484 = vector.load %arg19[%c1_208, %c0_209, %c0_210] : memref<9x4x8xf32, #tpu.memory_space<vmem>>, vector<1x4x8xf32>
    %1485 = vector.shape_cast %1484 : vector<1x4x8xf32> to vector<4x8xf32>
    %1486 = vector.extract_strided_slice %853 {offsets = [0, 0], sizes = [8, 1], strides = [1, 1]} : vector<8x4xf32> to vector<8x1xf32>
    %1487 = vector.extract_strided_slice %1483 {offsets = [0, 0], sizes = [1, 8], strides = [1, 1]} : vector<4x8xf32> to vector<1x8xf32>
    %1488 = vector.broadcast %1486 : vector<8x1xf32> to vector<8x8xf32>
    %1489 = vector.broadcast %1487 : vector<1x8xf32> to vector<8x8xf32>
    %1490 = arith.mulf %1488, %1489 : vector<8x8xf32>
    %1491 = vector.extract_strided_slice %853 {offsets = [0, 1], sizes = [8, 1], strides = [1, 1]} : vector<8x4xf32> to vector<8x1xf32>
    %1492 = vector.extract_strided_slice %1483 {offsets = [1, 0], sizes = [1, 8], strides = [1, 1]} : vector<4x8xf32> to vector<1x8xf32>
    %1493 = vector.broadcast %1491 : vector<8x1xf32> to vector<8x8xf32>
    %1494 = vector.broadcast %1492 : vector<1x8xf32> to vector<8x8xf32>
    %1495 = arith.mulf %1493, %1494 : vector<8x8xf32>
    %1496 = arith.addf %1490, %1495 : vector<8x8xf32>
    %1497 = vector.extract_strided_slice %853 {offsets = [0, 2], sizes = [8, 1], strides = [1, 1]} : vector<8x4xf32> to vector<8x1xf32>
    %1498 = vector.extract_strided_slice %1483 {offsets = [2, 0], sizes = [1, 8], strides = [1, 1]} : vector<4x8xf32> to vector<1x8xf32>
    %1499 = vector.broadcast %1497 : vector<8x1xf32> to vector<8x8xf32>
    %1500 = vector.broadcast %1498 : vector<1x8xf32> to vector<8x8xf32>
    %1501 = arith.mulf %1499, %1500 : vector<8x8xf32>
    %1502 = arith.addf %1496, %1501 : vector<8x8xf32>
    %1503 = vector.extract_strided_slice %853 {offsets = [0, 3], sizes = [8, 1], strides = [1, 1]} : vector<8x4xf32> to vector<8x1xf32>
    %1504 = vector.extract_strided_slice %1483 {offsets = [3, 0], sizes = [1, 8], strides = [1, 1]} : vector<4x8xf32> to vector<1x8xf32>
    %1505 = vector.broadcast %1503 : vector<8x1xf32> to vector<8x8xf32>
    %1506 = vector.broadcast %1504 : vector<1x8xf32> to vector<8x8xf32>
    %1507 = arith.mulf %1505, %1506 : vector<8x8xf32>
    %1508 = arith.addf %1502, %1507 : vector<8x8xf32>
    %1509 = vector.extract_strided_slice %854 {offsets = [0, 0], sizes = [8, 1], strides = [1, 1]} : vector<8x4xf32> to vector<8x1xf32>
    %1510 = vector.extract_strided_slice %1485 {offsets = [0, 0], sizes = [1, 8], strides = [1, 1]} : vector<4x8xf32> to vector<1x8xf32>
    %1511 = vector.broadcast %1509 : vector<8x1xf32> to vector<8x8xf32>
    %1512 = vector.broadcast %1510 : vector<1x8xf32> to vector<8x8xf32>
    %1513 = arith.mulf %1511, %1512 : vector<8x8xf32>
    %1514 = vector.extract_strided_slice %854 {offsets = [0, 1], sizes = [8, 1], strides = [1, 1]} : vector<8x4xf32> to vector<8x1xf32>
    %1515 = vector.extract_strided_slice %1485 {offsets = [1, 0], sizes = [1, 8], strides = [1, 1]} : vector<4x8xf32> to vector<1x8xf32>
    %1516 = vector.broadcast %1514 : vector<8x1xf32> to vector<8x8xf32>
    %1517 = vector.broadcast %1515 : vector<1x8xf32> to vector<8x8xf32>
    %1518 = arith.mulf %1516, %1517 : vector<8x8xf32>
    %1519 = arith.addf %1513, %1518 : vector<8x8xf32>
    %1520 = vector.extract_strided_slice %854 {offsets = [0, 2], sizes = [8, 1], strides = [1, 1]} : vector<8x4xf32> to vector<8x1xf32>
    %1521 = vector.extract_strided_slice %1485 {offsets = [2, 0], sizes = [1, 8], strides = [1, 1]} : vector<4x8xf32> to vector<1x8xf32>
    %1522 = vector.broadcast %1520 : vector<8x1xf32> to vector<8x8xf32>
    %1523 = vector.broadcast %1521 : vector<1x8xf32> to vector<8x8xf32>
    %1524 = arith.mulf %1522, %1523 : vector<8x8xf32>
    %1525 = arith.addf %1519, %1524 : vector<8x8xf32>
    %1526 = vector.extract_strided_slice %854 {offsets = [0, 3], sizes = [8, 1], strides = [1, 1]} : vector<8x4xf32> to vector<8x1xf32>
    %1527 = vector.extract_strided_slice %1485 {offsets = [3, 0], sizes = [1, 8], strides = [1, 1]} : vector<4x8xf32> to vector<1x8xf32>
    %1528 = vector.broadcast %1526 : vector<8x1xf32> to vector<8x8xf32>
    %1529 = vector.broadcast %1527 : vector<1x8xf32> to vector<8x8xf32>
    %1530 = arith.mulf %1528, %1529 : vector<8x8xf32>
    %1531 = arith.addf %1525, %1530 : vector<8x8xf32>
    %1532 = arith.addf %1508, %1531 : vector<8x8xf32>
    %1533 = vector.extract_strided_slice %855 {offsets = [0, 0], sizes = [8, 1], strides = [1, 1]} : vector<8x2xf32> to vector<8x1xf32>
    %1534 = vector.extract_strided_slice %1473 {offsets = [0, 0], sizes = [1, 8], strides = [1, 1]} : vector<2x8xf32> to vector<1x8xf32>
    %1535 = vector.broadcast %1533 : vector<8x1xf32> to vector<8x8xf32>
    %1536 = vector.broadcast %1534 : vector<1x8xf32> to vector<8x8xf32>
    %1537 = arith.mulf %1535, %1536 : vector<8x8xf32>
    %1538 = vector.extract_strided_slice %855 {offsets = [0, 1], sizes = [8, 1], strides = [1, 1]} : vector<8x2xf32> to vector<8x1xf32>
    %1539 = vector.extract_strided_slice %1473 {offsets = [1, 0], sizes = [1, 8], strides = [1, 1]} : vector<2x8xf32> to vector<1x8xf32>
    %1540 = vector.broadcast %1538 : vector<8x1xf32> to vector<8x8xf32>
    %1541 = vector.broadcast %1539 : vector<1x8xf32> to vector<8x8xf32>
    %1542 = arith.mulf %1540, %1541 : vector<8x8xf32>
    %1543 = arith.addf %1537, %1542 : vector<8x8xf32>
    %1544 = arith.addf %1532, %1543 : vector<8x8xf32>
    %1545 = vector.broadcast %856 : vector<8x1xf32> to vector<8x8xf32>
    %1546 = arith.addf %1544, %1545 : vector<8x8xf32>
    %1547 = vector.extract_strided_slice %1546 {offsets = [0, 0], sizes = [6, 8], strides = [1, 1]} : vector<8x8xf32> to vector<6x8xf32>
    %1548 = arith.negf %1547 : vector<6x8xf32>
    %1549 = math.exp %1548 : vector<6x8xf32>
    %cst_211 = arith.constant 1.000000e+00 : f32
    %1550 = vector.broadcast %cst_211 : f32 to vector<6x8xf32>
    %1551 = arith.addf %1550, %1549 : vector<6x8xf32>
    %1552 = arith.divf %1550, %1551 : vector<6x8xf32>
    %1553 = vector.extract_strided_slice %1546 {offsets = [6, 0], sizes = [2, 8], strides = [1, 1]} : vector<8x8xf32> to vector<2x8xf32>
    %1554 = math.tanh %1553 : vector<2x8xf32>
    %1555 = vector.extract_strided_slice %1552 {offsets = [0, 0], sizes = [2, 8], strides = [1, 1]} : vector<6x8xf32> to vector<2x8xf32>
    %1556 = vector.extract_strided_slice %1552 {offsets = [2, 0], sizes = [2, 8], strides = [1, 1]} : vector<6x8xf32> to vector<2x8xf32>
    %1557 = vector.extract_strided_slice %1552 {offsets = [4, 0], sizes = [2, 8], strides = [1, 1]} : vector<6x8xf32> to vector<2x8xf32>
    %1558 = arith.mulf %1556, %1471 : vector<2x8xf32>
    %1559 = arith.mulf %1555, %1554 : vector<2x8xf32>
    %1560 = arith.addf %1558, %1559 : vector<2x8xf32>
    %1561 = math.tanh %1560 : vector<2x8xf32>
    %1562 = arith.mulf %1557, %1561 : vector<2x8xf32>
    %1563 = vector.extract_strided_slice %1562 {offsets = [0, 0], sizes = [1, 8], strides = [1, 1]} : vector<2x8xf32> to vector<1x8xf32>
    %c0_212 = arith.constant 0 : index
    %c7_213 = arith.constant 7 : index
    %c0_214 = arith.constant 0 : index
    %1564 = vector.load %arg18[%c0_212, %c7_213, %c0_214] : memref<2x9x8xf32, #tpu.memory_space<vmem>>, vector<1x1x8xf32>
    %1565 = vector.shape_cast %1564 : vector<1x1x8xf32> to vector<1x8xf32>
    %1566 = vector.shape_cast %1563 : vector<1x8xf32> to vector<1x1x8xf32>
    tpu.vector_store %arg18[%c0_212, %c7_213, %c0_214], %1566 {strides = array<i32>} : memref<2x9x8xf32, #tpu.memory_space<vmem>>, vector<1x1x8xf32>,
    %1567 = vector.extract_strided_slice %1562 {offsets = [1, 0], sizes = [1, 8], strides = [1, 1]} : vector<2x8xf32> to vector<1x8xf32>
    %c1_215 = arith.constant 1 : index
    %c1_216 = arith.constant 1 : index
    %c0_217 = arith.constant 0 : index
    %1568 = vector.load %arg18[%c1_215, %c1_216, %c0_217] : memref<2x9x8xf32, #tpu.memory_space<vmem>>, vector<1x1x8xf32>
    %1569 = vector.shape_cast %1568 : vector<1x1x8xf32> to vector<1x8xf32>
    %1570 = vector.shape_cast %1567 : vector<1x8xf32> to vector<1x1x8xf32>
    tpu.vector_store %arg18[%c1_215, %c1_216, %c0_217], %1570 {strides = array<i32>} : memref<2x9x8xf32, #tpu.memory_space<vmem>>, vector<1x1x8xf32>,
    %c8_218 = arith.constant 8 : index
    %c0_219 = arith.constant 0 : index
    %c0_220 = arith.constant 0 : index
    %1571 = vector.load %arg19[%c8_218, %c0_219, %c0_220] : memref<9x4x8xf32, #tpu.memory_space<vmem>>, vector<1x4x8xf32>
    %1572 = vector.shape_cast %1571 : vector<1x4x8xf32> to vector<4x8xf32>
    %c0_221 = arith.constant 0 : index
    %c0_222 = arith.constant 0 : index
    %c0_223 = arith.constant 0 : index
    %1573 = vector.load %arg19[%c0_221, %c0_222, %c0_223] : memref<9x4x8xf32, #tpu.memory_space<vmem>>, vector<1x4x8xf32>
    %1574 = vector.shape_cast %1573 : vector<1x4x8xf32> to vector<4x8xf32>
    %1575 = vector.extract_strided_slice %853 {offsets = [0, 0], sizes = [8, 1], strides = [1, 1]} : vector<8x4xf32> to vector<8x1xf32>
    %1576 = vector.extract_strided_slice %1572 {offsets = [0, 0], sizes = [1, 8], strides = [1, 1]} : vector<4x8xf32> to vector<1x8xf32>
    %1577 = vector.broadcast %1575 : vector<8x1xf32> to vector<8x8xf32>
    %1578 = vector.broadcast %1576 : vector<1x8xf32> to vector<8x8xf32>
    %1579 = arith.mulf %1577, %1578 : vector<8x8xf32>
    %1580 = vector.extract_strided_slice %853 {offsets = [0, 1], sizes = [8, 1], strides = [1, 1]} : vector<8x4xf32> to vector<8x1xf32>
    %1581 = vector.extract_strided_slice %1572 {offsets = [1, 0], sizes = [1, 8], strides = [1, 1]} : vector<4x8xf32> to vector<1x8xf32>
    %1582 = vector.broadcast %1580 : vector<8x1xf32> to vector<8x8xf32>
    %1583 = vector.broadcast %1581 : vector<1x8xf32> to vector<8x8xf32>
    %1584 = arith.mulf %1582, %1583 : vector<8x8xf32>
    %1585 = arith.addf %1579, %1584 : vector<8x8xf32>
    %1586 = vector.extract_strided_slice %853 {offsets = [0, 2], sizes = [8, 1], strides = [1, 1]} : vector<8x4xf32> to vector<8x1xf32>
    %1587 = vector.extract_strided_slice %1572 {offsets = [2, 0], sizes = [1, 8], strides = [1, 1]} : vector<4x8xf32> to vector<1x8xf32>
    %1588 = vector.broadcast %1586 : vector<8x1xf32> to vector<8x8xf32>
    %1589 = vector.broadcast %1587 : vector<1x8xf32> to vector<8x8xf32>
    %1590 = arith.mulf %1588, %1589 : vector<8x8xf32>
    %1591 = arith.addf %1585, %1590 : vector<8x8xf32>
    %1592 = vector.extract_strided_slice %853 {offsets = [0, 3], sizes = [8, 1], strides = [1, 1]} : vector<8x4xf32> to vector<8x1xf32>
    %1593 = vector.extract_strided_slice %1572 {offsets = [3, 0], sizes = [1, 8], strides = [1, 1]} : vector<4x8xf32> to vector<1x8xf32>
    %1594 = vector.broadcast %1592 : vector<8x1xf32> to vector<8x8xf32>
    %1595 = vector.broadcast %1593 : vector<1x8xf32> to vector<8x8xf32>
    %1596 = arith.mulf %1594, %1595 : vector<8x8xf32>
    %1597 = arith.addf %1591, %1596 : vector<8x8xf32>
    %1598 = vector.extract_strided_slice %854 {offsets = [0, 0], sizes = [8, 1], strides = [1, 1]} : vector<8x4xf32> to vector<8x1xf32>
    %1599 = vector.extract_strided_slice %1574 {offsets = [0, 0], sizes = [1, 8], strides = [1, 1]} : vector<4x8xf32> to vector<1x8xf32>
    %1600 = vector.broadcast %1598 : vector<8x1xf32> to vector<8x8xf32>
    %1601 = vector.broadcast %1599 : vector<1x8xf32> to vector<8x8xf32>
    %1602 = arith.mulf %1600, %1601 : vector<8x8xf32>
    %1603 = vector.extract_strided_slice %854 {offsets = [0, 1], sizes = [8, 1], strides = [1, 1]} : vector<8x4xf32> to vector<8x1xf32>
    %1604 = vector.extract_strided_slice %1574 {offsets = [1, 0], sizes = [1, 8], strides = [1, 1]} : vector<4x8xf32> to vector<1x8xf32>
    %1605 = vector.broadcast %1603 : vector<8x1xf32> to vector<8x8xf32>
    %1606 = vector.broadcast %1604 : vector<1x8xf32> to vector<8x8xf32>
    %1607 = arith.mulf %1605, %1606 : vector<8x8xf32>
    %1608 = arith.addf %1602, %1607 : vector<8x8xf32>
    %1609 = vector.extract_strided_slice %854 {offsets = [0, 2], sizes = [8, 1], strides = [1, 1]} : vector<8x4xf32> to vector<8x1xf32>
    %1610 = vector.extract_strided_slice %1574 {offsets = [2, 0], sizes = [1, 8], strides = [1, 1]} : vector<4x8xf32> to vector<1x8xf32>
    %1611 = vector.broadcast %1609 : vector<8x1xf32> to vector<8x8xf32>
    %1612 = vector.broadcast %1610 : vector<1x8xf32> to vector<8x8xf32>
    %1613 = arith.mulf %1611, %1612 : vector<8x8xf32>
    %1614 = arith.addf %1608, %1613 : vector<8x8xf32>
    %1615 = vector.extract_strided_slice %854 {offsets = [0, 3], sizes = [8, 1], strides = [1, 1]} : vector<8x4xf32> to vector<8x1xf32>
    %1616 = vector.extract_strided_slice %1574 {offsets = [3, 0], sizes = [1, 8], strides = [1, 1]} : vector<4x8xf32> to vector<1x8xf32>
    %1617 = vector.broadcast %1615 : vector<8x1xf32> to vector<8x8xf32>
    %1618 = vector.broadcast %1616 : vector<1x8xf32> to vector<8x8xf32>
    %1619 = arith.mulf %1617, %1618 : vector<8x8xf32>
    %1620 = arith.addf %1614, %1619 : vector<8x8xf32>
    %1621 = arith.addf %1597, %1620 : vector<8x8xf32>
    %1622 = vector.extract_strided_slice %855 {offsets = [0, 0], sizes = [8, 1], strides = [1, 1]} : vector<8x2xf32> to vector<8x1xf32>
    %1623 = vector.extract_strided_slice %1562 {offsets = [0, 0], sizes = [1, 8], strides = [1, 1]} : vector<2x8xf32> to vector<1x8xf32>
    %1624 = vector.broadcast %1622 : vector<8x1xf32> to vector<8x8xf32>
    %1625 = vector.broadcast %1623 : vector<1x8xf32> to vector<8x8xf32>
    %1626 = arith.mulf %1624, %1625 : vector<8x8xf32>
    %1627 = vector.extract_strided_slice %855 {offsets = [0, 1], sizes = [8, 1], strides = [1, 1]} : vector<8x2xf32> to vector<8x1xf32>
    %1628 = vector.extract_strided_slice %1562 {offsets = [1, 0], sizes = [1, 8], strides = [1, 1]} : vector<2x8xf32> to vector<1x8xf32>
    %1629 = vector.broadcast %1627 : vector<8x1xf32> to vector<8x8xf32>
    %1630 = vector.broadcast %1628 : vector<1x8xf32> to vector<8x8xf32>
    %1631 = arith.mulf %1629, %1630 : vector<8x8xf32>
    %1632 = arith.addf %1626, %1631 : vector<8x8xf32>
    %1633 = arith.addf %1621, %1632 : vector<8x8xf32>
    %1634 = vector.broadcast %856 : vector<8x1xf32> to vector<8x8xf32>
    %1635 = arith.addf %1633, %1634 : vector<8x8xf32>
    %1636 = vector.extract_strided_slice %1635 {offsets = [0, 0], sizes = [6, 8], strides = [1, 1]} : vector<8x8xf32> to vector<6x8xf32>
    %1637 = arith.negf %1636 : vector<6x8xf32>
    %1638 = math.exp %1637 : vector<6x8xf32>
    %cst_224 = arith.constant 1.000000e+00 : f32
    %1639 = vector.broadcast %cst_224 : f32 to vector<6x8xf32>
    %1640 = arith.addf %1639, %1638 : vector<6x8xf32>
    %1641 = arith.divf %1639, %1640 : vector<6x8xf32>
    %1642 = vector.extract_strided_slice %1635 {offsets = [6, 0], sizes = [2, 8], strides = [1, 1]} : vector<8x8xf32> to vector<2x8xf32>
    %1643 = math.tanh %1642 : vector<2x8xf32>
    %1644 = vector.extract_strided_slice %1641 {offsets = [0, 0], sizes = [2, 8], strides = [1, 1]} : vector<6x8xf32> to vector<2x8xf32>
    %1645 = vector.extract_strided_slice %1641 {offsets = [2, 0], sizes = [2, 8], strides = [1, 1]} : vector<6x8xf32> to vector<2x8xf32>
    %1646 = vector.extract_strided_slice %1641 {offsets = [4, 0], sizes = [2, 8], strides = [1, 1]} : vector<6x8xf32> to vector<2x8xf32>
    %1647 = arith.mulf %1645, %1560 : vector<2x8xf32>
    %1648 = arith.mulf %1644, %1643 : vector<2x8xf32>
    %1649 = arith.addf %1647, %1648 : vector<2x8xf32>
    %1650 = math.tanh %1649 : vector<2x8xf32>
    %1651 = arith.mulf %1646, %1650 : vector<2x8xf32>
    %1652 = vector.extract_strided_slice %1651 {offsets = [0, 0], sizes = [1, 8], strides = [1, 1]} : vector<2x8xf32> to vector<1x8xf32>
    %c0_225 = arith.constant 0 : index
    %c8_226 = arith.constant 8 : index
    %c0_227 = arith.constant 0 : index
    %1653 = vector.load %arg18[%c0_225, %c8_226, %c0_227] : memref<2x9x8xf32, #tpu.memory_space<vmem>>, vector<1x1x8xf32>
    %1654 = vector.shape_cast %1653 : vector<1x1x8xf32> to vector<1x8xf32>
    %1655 = vector.shape_cast %1652 : vector<1x8xf32> to vector<1x1x8xf32>
    tpu.vector_store %arg18[%c0_225, %c8_226, %c0_227], %1655 {strides = array<i32>} : memref<2x9x8xf32, #tpu.memory_space<vmem>>, vector<1x1x8xf32>,
    %1656 = vector.extract_strided_slice %1651 {offsets = [1, 0], sizes = [1, 8], strides = [1, 1]} : vector<2x8xf32> to vector<1x8xf32>
    %c1_228 = arith.constant 1 : index
    %c0_229 = arith.constant 0 : index
    %c0_230 = arith.constant 0 : index
    %1657 = vector.load %arg18[%c1_228, %c0_229, %c0_230] : memref<2x9x8xf32, #tpu.memory_space<vmem>>, vector<1x1x8xf32>
    %1658 = vector.shape_cast %1657 : vector<1x1x8xf32> to vector<1x8xf32>
    %1659 = vector.shape_cast %1656 : vector<1x8xf32> to vector<1x1x8xf32>
    tpu.vector_store %arg18[%c1_228, %c0_229, %c0_230], %1659 {strides = array<i32>} : memref<2x9x8xf32, #tpu.memory_space<vmem>>, vector<1x1x8xf32>,
    return
  }
}

</mosaic_0001>

<llo_original>
// kernel: tpu_custom_call.1
$region0: #{tpu_custom_call.1}
  #allocation0 [shape = 'u32[]', space=smem, size = 0x4, offset = 0x4, fixed_abs, tag = 'smem constant byte address 0x4 - core index']
  #allocation1 [shape = 'u32[144,128]{1,0:T(1,128)}', space=vmem, size = 0x12000, scoped, tag = 'internal scratch']
  #allocation2 [shape = 'f32[9,4,8]{2,1,0:T(4,128)}', space=vmem, size = 0x4800, scoped, tag = 'scratch operand']
  %s0 = inlined_call_operand.vmem [shape: f32[8,8], index: 0, kind: input, shape index: {}]
  %s1 = inlined_call_operand.vmem [shape: f32[2,8], index: 1, kind: input, shape index: {}]
  %s2 = inlined_call_operand.vmem [shape: f32[18,9], index: 2, kind: input, shape index: {}]
  %s3 = inlined_call_operand.vmem [shape: f32[18,1], index: 3, kind: input, shape index: {}]
  %s4 = inlined_call_operand.vmem [shape: f32[18,1], index: 4, kind: input, shape index: {}]
  %s5 = inlined_call_operand.vmem [shape: f32[18,1], index: 5, kind: input, shape index: {}]
  %s6 = inlined_call_operand.vmem [shape: f32[9,18], index: 6, kind: input, shape index: {}]
  %s7 = inlined_call_operand.vmem [shape: f32[9,1], index: 7, kind: input, shape index: {}]
  %s8 = inlined_call_operand.vmem [shape: f32[9,1], index: 8, kind: input, shape index: {}]
  %s9 = inlined_call_operand.vmem [shape: f32[9,1], index: 9, kind: input, shape index: {}]
  %s10 = inlined_call_operand.vmem [shape: f32[16,1], index: 10, kind: input, shape index: {}]
  %s11 = inlined_call_operand.vmem [shape: f32[16,1], index: 11, kind: input, shape index: {}]
  %s12 = inlined_call_operand.vmem [shape: f32[16,4], index: 12, kind: input, shape index: {}]
  %s13 = inlined_call_operand.vmem [shape: f32[16,1], index: 13, kind: input, shape index: {}]
  %s14 = inlined_call_operand.vmem [shape: f32[8,4], index: 14, kind: input, shape index: {}]
  %s15 = inlined_call_operand.vmem [shape: f32[8,4], index: 15, kind: input, shape index: {}]
  %s16 = inlined_call_operand.vmem [shape: f32[8,2], index: 16, kind: input, shape index: {}]
  %s17 = inlined_call_operand.vmem [shape: f32[8,1], index: 17, kind: input, shape index: {}]
  %s18 = inlined_call_operand.vmem [shape: f32[2,9,8], index: 18, kind: output, shape index: {}]
  %s19 = sld [smem:[#allocation0]]
  $region82: #{tpu_custom_call.1} parent=0
    _
  %s21 = ssub.s32 1, %s19
  %s22 = scalar_select 0, %s21, %s19
  // Predicated region
  $region2: #{tpu_custom_call.1} parent=0 // pred_check
    _
  $region3: #{tpu_custom_call.1} parent=0 // pred_check_branch
    %24 = sbr.rel (0) target = $region5
  $region4: #{tpu_custom_call.1} parent=0 // pred_region
    _
  $region5: #{tpu_custom_call.1} parent=0 // pred_fallthru
    _
  // Predicated region
  $region6: #{tpu_custom_call.1} parent=0 // pred_check
    _
  $region7: #{tpu_custom_call.1} parent=0 // pred_check_branch
    %26 = sbr.rel (0) target = $region9
  $region8: #{tpu_custom_call.1} parent=0 // pred_region
    _
  $region9: #{tpu_custom_call.1} parent=0 // pred_fallthru
    _
  // Predicated region
  $region10: #{tpu_custom_call.1} parent=0 // pred_check
    _
  $region11: #{tpu_custom_call.1} parent=0 // pred_check_branch
    %28 = sbr.rel (0) target = $region13
  $region12: #{tpu_custom_call.1} parent=0 // pred_region
    _
  $region13: #{tpu_custom_call.1} parent=0 // pred_fallthru
    _
  // Predicated region
  $region14: #{tpu_custom_call.1} parent=0 // pred_check
    _
  $region15: #{tpu_custom_call.1} parent=0 // pred_check_branch
    %30 = sbr.rel (0) target = $region17
  $region16: #{tpu_custom_call.1} parent=0 // pred_region
    _
  $region17: #{tpu_custom_call.1} parent=0 // pred_fallthru
    _
  // Predicated region
  $region18: #{tpu_custom_call.1} parent=0 // pred_check
    _
  $region19: #{tpu_custom_call.1} parent=0 // pred_check_branch
    %32 = sbr.rel (0) target = $region21
  $region20: #{tpu_custom_call.1} parent=0 // pred_region
    _
  $region21: #{tpu_custom_call.1} parent=0 // pred_fallthru
    _
  // Predicated region
  $region22: #{tpu_custom_call.1} parent=0 // pred_check
    _
  $region23: #{tpu_custom_call.1} parent=0 // pred_check_branch
    %34 = sbr.rel (0) target = $region25
  $region24: #{tpu_custom_call.1} parent=0 // pred_region
    _
  $region25: #{tpu_custom_call.1} parent=0 // pred_fallthru
    _
  // Predicated region
  $region26: #{tpu_custom_call.1} parent=0 // pred_check
    _
  $region27: #{tpu_custom_call.1} parent=0 // pred_check_branch
    %36 = sbr.rel (0) target = $region29
  $region28: #{tpu_custom_call.1} parent=0 // pred_region
    _
  $region29: #{tpu_custom_call.1} parent=0 // pred_fallthru
    _
  // Predicated region
  $region30: #{tpu_custom_call.1} parent=0 // pred_check
    _
  $region31: #{tpu_custom_call.1} parent=0 // pred_check_branch
    %38 = sbr.rel (0) target = $region33
  $region32: #{tpu_custom_call.1} parent=0 // pred_region
    _
  $region33: #{tpu_custom_call.1} parent=0 // pred_fallthru
    _
  // Predicated region
  $region34: #{tpu_custom_call.1} parent=0 // pred_check
    _
  $region35: #{tpu_custom_call.1} parent=0 // pred_check_branch
    %40 = sbr.rel (0) target = $region37
  $region36: #{tpu_custom_call.1} parent=0 // pred_region
    _
  $region37: #{tpu_custom_call.1} parent=0 // pred_fallthru
    _
  // Predicated region
  $region38: #{tpu_custom_call.1} parent=0 // pred_check
    _
  $region39: #{tpu_custom_call.1} parent=0 // pred_check_branch
    %42 = sbr.rel (0) target = $region41
  $region40: #{tpu_custom_call.1} parent=0 // pred_region
    _
  $region41: #{tpu_custom_call.1} parent=0 // pred_fallthru
    _
  // Predicated region
  $region42: #{tpu_custom_call.1} parent=0 // pred_check
    _
  $region43: #{tpu_custom_call.1} parent=0 // pred_check_branch
    %44 = sbr.rel (0) target = $region45
  $region44: #{tpu_custom_call.1} parent=0 // pred_region
    _
  $region45: #{tpu_custom_call.1} parent=0 // pred_fallthru
    _
  // Predicated region
  $region46: #{tpu_custom_call.1} parent=0 // pred_check
    _
  $region47: #{tpu_custom_call.1} parent=0 // pred_check_branch
    %46 = sbr.rel (0) target = $region49
  $region48: #{tpu_custom_call.1} parent=0 // pred_region
    _
  $region49: #{tpu_custom_call.1} parent=0 // pred_fallthru
    _
  // Predicated region
  $region50: #{tpu_custom_call.1} parent=0 // pred_check
    _
  $region51: #{tpu_custom_call.1} parent=0 // pred_check_branch
    %48 = sbr.rel (0) target = $region53
  $region52: #{tpu_custom_call.1} parent=0 // pred_region
    _
  $region53: #{tpu_custom_call.1} parent=0 // pred_fallthru
    _
  // Predicated region
  $region54: #{tpu_custom_call.1} parent=0 // pred_check
    _
  $region55: #{tpu_custom_call.1} parent=0 // pred_check_branch
    %50 = sbr.rel (0) target = $region57
  $region56: #{tpu_custom_call.1} parent=0 // pred_region
    _
  $region57: #{tpu_custom_call.1} parent=0 // pred_fallthru
    _
  // Predicated region
  $region58: #{tpu_custom_call.1} parent=0 // pred_check
    _
  $region59: #{tpu_custom_call.1} parent=0 // pred_check_branch
    %52 = sbr.rel (0) target = $region61
  $region60: #{tpu_custom_call.1} parent=0 // pred_region
    _
  $region61: #{tpu_custom_call.1} parent=0 // pred_fallthru
    _
  // Predicated region
  $region62: #{tpu_custom_call.1} parent=0 // pred_check
    _
  $region63: #{tpu_custom_call.1} parent=0 // pred_check_branch
    %54 = sbr.rel (0) target = $region65
  $region64: #{tpu_custom_call.1} parent=0 // pred_region
    _
  $region65: #{tpu_custom_call.1} parent=0 // pred_fallthru
    _
  // Predicated region
  $region66: #{tpu_custom_call.1} parent=0 // pred_check
    _
  $region67: #{tpu_custom_call.1} parent=0 // pred_check_branch
    %56 = sbr.rel (0) target = $region69
  $region68: #{tpu_custom_call.1} parent=0 // pred_region
    _
  $region69: #{tpu_custom_call.1} parent=0 // pred_fallthru
    _
  // Predicated region
  $region70: #{tpu_custom_call.1} parent=0 // pred_check
    _
  $region71: #{tpu_custom_call.1} parent=0 // pred_check_branch
    %58 = sbr.rel (0) target = $region73
  $region72: #{tpu_custom_call.1} parent=0 // pred_region
    _
  $region73: #{tpu_custom_call.1} parent=0 // pred_fallthru
    _
  %v59 = vld [vmem:[%s0] sm:$0xff]
  %v60 = vcvt.f32.s32.to.zero.pseudo %v59
  %v61 = vld [vmem:[%s1] sm:$0x3]
  %vm62 = vcmp.eq.s32.totalorder %v60, 0
  %v63 = vsel %vm62, 1, 0
  %v64 = vcvt.s32.f32 %v63
  %v65 = vlaneseq
  %v66 = vshrl.u32 %v65, 7
  %v67 = vsub.s32 0, %v66
  %v68 = vrot.slane %v64, %v67
  %70 = vset.pattern.permute.xlu0 0
  %71 = vperm.xlu0 %70, %v61
  %v72 = vpop.permute.xlu0 %71
  %v74 = vmul.f32 %v68, %v72
  %vm75 = vcmp.eq.s32.totalorder %v60, 1
  %v76 = vsel %vm75, 1, 0
  %v77 = vcvt.s32.f32 %v76
  %v78 = vlaneseq
  %v79 = vshrl.u32 %v78, 7
  %v80 = vsub.s32 0, %v79
  %v81 = vrot.slane %v77, %v80
  %82 = vset.pattern.permute.xlu0 1
  %83 = vperm.xlu0 %82, %v61
  %v84 = vpop.permute.xlu0 %83
  %v86 = vmul.f32 %v81, %v84
  %v87 = vadd.f32 %v74, %v86
  %vm88 = vcmp.eq.s32.totalorder %v60, 2
  %v89 = vsel %vm88, 1, 0
  %v90 = vcvt.s32.f32 %v89
  %v91 = vlaneseq
  %v92 = vshrl.u32 %v91, 7
  %v93 = vsub.s32 0, %v92
  %v94 = vrot.slane %v90, %v93
  %95 = vset.pattern.permute.xlu0 2
  %96 = vperm.xlu0 %95, %v61
  %v97 = vpop.permute.xlu0 %96
  %v99 = vmul.f32 %v94, %v97
  %v100 = vadd.f32 %v87, %v99
  %vm101 = vcmp.eq.s32.totalorder %v60, 3
  %v102 = vsel %vm101, 1, 0
  %v103 = vcvt.s32.f32 %v102
  %v104 = vlaneseq
  %v105 = vshrl.u32 %v104, 7
  %v106 = vsub.s32 0, %v105
  %v107 = vrot.slane %v103, %v106
  %108 = vset.pattern.permute.xlu0 3
  %109 = vperm.xlu0 %108, %v61
  %v110 = vpop.permute.xlu0 %109
  %v112 = vmul.f32 %v107, %v110
  %v113 = vadd.f32 %v100, %v112
  %vm114 = vcmp.eq.s32.totalorder %v60, 4
  %v115 = vsel %vm114, 1, 0
  %v116 = vcvt.s32.f32 %v115
  %v117 = vlaneseq
  %v118 = vshrl.u32 %v117, 7
  %v119 = vsub.s32 0, %v118
  %v120 = vrot.slane %v116, %v119
  %121 = vset.pattern.permute.xlu0 4
  %122 = vperm.xlu0 %121, %v61
  %v123 = vpop.permute.xlu0 %122
  %v125 = vmul.f32 %v120, %v123
  %v126 = vadd.f32 %v113, %v125
  %vm127 = vcmp.eq.s32.totalorder %v60, 5
  %v128 = vsel %vm127, 1, 0
  %v129 = vcvt.s32.f32 %v128
  %v130 = vlaneseq
  %v131 = vshrl.u32 %v130, 7
  %v132 = vsub.s32 0, %v131
  %v133 = vrot.slane %v129, %v132
  %134 = vset.pattern.permute.xlu0 5
  %135 = vperm.xlu0 %134, %v61
  %v136 = vpop.permute.xlu0 %135
  %v138 = vmul.f32 %v133, %v136
  %v139 = vadd.f32 %v126, %v138
  %vm140 = vcmp.eq.s32.totalorder %v60, 6
  %v141 = vsel %vm140, 1, 0
  %v142 = vcvt.s32.f32 %v141
  %v143 = vlaneseq
  %v144 = vshrl.u32 %v143, 7
  %v145 = vsub.s32 0, %v144
  %v146 = vrot.slane %v142, %v145
  %147 = vset.pattern.permute.xlu0 6
  %148 = vperm.xlu0 %147, %v61
  %v149 = vpop.permute.xlu0 %148
  %v151 = vmul.f32 %v146, %v149
  %v152 = vadd.f32 %v139, %v151
  %vm153 = vcmp.eq.s32.totalorder %v60, 7
  %v154 = vsel %vm153, 1, 0
  %v155 = vcvt.s32.f32 %v154
  %v156 = vlaneseq
  %v157 = vshrl.u32 %v156, 7
  %v158 = vsub.s32 0, %v157
  %v159 = vrot.slane %v155, %v158
  %160 = vset.pattern.permute.xlu0 7
  %161 = vperm.xlu0 %160, %v61
  %v162 = vpop.permute.xlu0 %161
  %v164 = vmul.f32 %v159, %v162
  %v165 = vadd.f32 %v152, %v164
  %v166 = vld [vmem:[%s2] sm:$0xff]
  %v167 = vld [vmem:[%s2 + $0x8] sm:$0xff]
  %v168 = vld [vmem:[%s2 + $0x10] sm:$0x3]
  %170 = vset.pattern.permute.xlu0 0
  %171 = vperm.xlu0 %170, %v166
  %v172 = vpop.permute.xlu0 %171
  %175 = vset.pattern.permute.xlu0 0
  %176 = vperm.xlu0 %175, %v167
  %v177 = vpop.permute.xlu0 %176
  %180 = vset.pattern.permute.xlu0 0
  %181 = vperm.xlu0 %180, %v168
  %v182 = vpop.permute.xlu0 %181
  %v184 = vlaneseq
  %v185 = vshrl.u32 %v184, 7
  %v186 = vsub.s32 0, %v185
  %v187 = vrot.slane %v165, %v186
  %v188 = vmul.f32 %v172, %v187
  %v189 = vmul.f32 %v177, %v187
  %v190 = vmul.f32 %v182, %v187
  %191 = vset.pattern.permute.xlu0 1
  %192 = vperm.xlu0 %191, %v166
  %v193 = vpop.permute.xlu0 %192
  %195 = vset.pattern.permute.xlu0 1
  %196 = vperm.xlu0 %195, %v167
  %v197 = vpop.permute.xlu0 %196
  %199 = vset.pattern.permute.xlu0 1
  %200 = vperm.xlu0 %199, %v168
  %v201 = vpop.permute.xlu0 %200
  %v203 = vlaneseq
  %v204 = vshrl.u32 %v203, 7
  %v205 = vsub.s32 1, %v204
  %v206 = vrot.slane %v165, %v205
  %v207 = vmul.f32 %v193, %v206
  %v208 = vmul.f32 %v197, %v206
  %v209 = vmul.f32 %v201, %v206
  %v210 = vadd.f32 %v188, %v207
  %v211 = vadd.f32 %v189, %v208
  %v212 = vadd.f32 %v190, %v209
  %213 = vset.pattern.permute.xlu0 2
  %214 = vperm.xlu0 %213, %v166
  %v215 = vpop.permute.xlu0 %214
  %217 = vset.pattern.permute.xlu0 2
  %218 = vperm.xlu0 %217, %v167
  %v219 = vpop.permute.xlu0 %218
  %221 = vset.pattern.permute.xlu0 2
  %222 = vperm.xlu0 %221, %v168
  %v223 = vpop.permute.xlu0 %222
  %v225 = vlaneseq
  %v226 = vshrl.u32 %v225, 7
  %v227 = vsub.s32 1, %v226
  %v228 = vrot.slane %v59, %v227
  %v229 = vmul.f32 %v215, %v228
  %v230 = vmul.f32 %v219, %v228
  %v231 = vmul.f32 %v223, %v228
  %232 = vset.pattern.permute.xlu0 3
  %233 = vperm.xlu0 %232, %v166
  %v234 = vpop.permute.xlu0 %233
  %236 = vset.pattern.permute.xlu0 3
  %237 = vperm.xlu0 %236, %v167
  %v238 = vpop.permute.xlu0 %237
  %240 = vset.pattern.permute.xlu0 3
  %241 = vperm.xlu0 %240, %v168
  %v242 = vpop.permute.xlu0 %241
  %v244 = vlaneseq
  %v245 = vshrl.u32 %v244, 7
  %v246 = vsub.s32 2, %v245
  %v247 = vrot.slane %v59, %v246
  %v248 = vmul.f32 %v234, %v247
  %v249 = vmul.f32 %v238, %v247
  %v250 = vmul.f32 %v242, %v247
  %v251 = vadd.f32 %v229, %v248
  %v252 = vadd.f32 %v230, %v249
  %v253 = vadd.f32 %v231, %v250
  %254 = vset.pattern.permute.xlu0 4
  %255 = vperm.xlu0 %254, %v166
  %v256 = vpop.permute.xlu0 %255
  %258 = vset.pattern.permute.xlu0 4
  %259 = vperm.xlu0 %258, %v167
  %v260 = vpop.permute.xlu0 %259
  %262 = vset.pattern.permute.xlu0 4
  %263 = vperm.xlu0 %262, %v168
  %v264 = vpop.permute.xlu0 %263
  %v266 = vlaneseq
  %v267 = vshrl.u32 %v266, 7
  %v268 = vsub.s32 3, %v267
  %v269 = vrot.slane %v59, %v268
  %v270 = vmul.f32 %v256, %v269
  %v271 = vmul.f32 %v260, %v269
  %v272 = vmul.f32 %v264, %v269
  %v273 = vadd.f32 %v251, %v270
  %v274 = vadd.f32 %v252, %v271
  %v275 = vadd.f32 %v253, %v272
  %276 = vset.pattern.permute.xlu0 5
  %277 = vperm.xlu0 %276, %v166
  %v278 = vpop.permute.xlu0 %277
  %280 = vset.pattern.permute.xlu0 5
  %281 = vperm.xlu0 %280, %v167
  %v282 = vpop.permute.xlu0 %281
  %284 = vset.pattern.permute.xlu0 5
  %285 = vperm.xlu0 %284, %v168
  %v286 = vpop.permute.xlu0 %285
  %v288 = vlaneseq
  %v289 = vshrl.u32 %v288, 7
  %v290 = vsub.s32 4, %v289
  %v291 = vrot.slane %v59, %v290
  %v292 = vmul.f32 %v278, %v291
  %v293 = vmul.f32 %v282, %v291
  %v294 = vmul.f32 %v286, %v291
  %v295 = vadd.f32 %v273, %v292
  %v296 = vadd.f32 %v274, %v293
  %v297 = vadd.f32 %v275, %v294
  %298 = vset.pattern.permute.xlu0 6
  %299 = vperm.xlu0 %298, %v166
  %v300 = vpop.permute.xlu0 %299
  %302 = vset.pattern.permute.xlu0 6
  %303 = vperm.xlu0 %302, %v167
  %v304 = vpop.permute.xlu0 %303
  %306 = vset.pattern.permute.xlu0 6
  %307 = vperm.xlu0 %306, %v168
  %v308 = vpop.permute.xlu0 %307
  %v310 = vlaneseq
  %v311 = vshrl.u32 %v310, 7
  %v312 = vsub.s32 5, %v311
  %v313 = vrot.slane %v59, %v312
  %v314 = vmul.f32 %v300, %v313
  %v315 = vmul.f32 %v304, %v313
  %v316 = vmul.f32 %v308, %v313
  %v317 = vadd.f32 %v295, %v314
  %v318 = vadd.f32 %v296, %v315
  %v319 = vadd.f32 %v297, %v316
  %320 = vset.pattern.permute.xlu0 7
  %321 = vperm.xlu0 %320, %v166
  %v322 = vpop.permute.xlu0 %321
  %324 = vset.pattern.permute.xlu0 7
  %325 = vperm.xlu0 %324, %v167
  %v326 = vpop.permute.xlu0 %325
  %328 = vset.pattern.permute.xlu0 7
  %329 = vperm.xlu0 %328, %v168
  %v330 = vpop.permute.xlu0 %329
  %v332 = vlaneseq
  %v333 = vshrl.u32 %v332, 7
  %v334 = vsub.s32 6, %v333
  %v335 = vrot.slane %v59, %v334
  %v336 = vmul.f32 %v322, %v335
  %v337 = vmul.f32 %v326, %v335
  %v338 = vmul.f32 %v330, %v335
  %v339 = vadd.f32 %v317, %v336
  %v340 = vadd.f32 %v318, %v337
  %v341 = vadd.f32 %v319, %v338
  %342 = vset.pattern.permute.xlu0 8
  %343 = vperm.xlu0 %342, %v166
  %v344 = vpop.permute.xlu0 %343
  %346 = vset.pattern.permute.xlu0 8
  %347 = vperm.xlu0 %346, %v167
  %v348 = vpop.permute.xlu0 %347
  %350 = vset.pattern.permute.xlu0 8
  %351 = vperm.xlu0 %350, %v168
  %v352 = vpop.permute.xlu0 %351
  %v354 = vlaneseq
  %v355 = vshrl.u32 %v354, 7
  %v356 = vsub.s32 7, %v355
  %v357 = vrot.slane %v59, %v356
  %v358 = vmul.f32 %v344, %v357
  %v359 = vmul.f32 %v348, %v357
  %v360 = vmul.f32 %v352, %v357
  %v361 = vadd.f32 %v339, %v358
  %v362 = vadd.f32 %v340, %v359
  %v363 = vadd.f32 %v341, %v360
  %v364 = vadd.f32 %v210, %v361
  %v365 = vadd.f32 %v211, %v362
  %v366 = vadd.f32 %v212, %v363
  %v367 = vld [vmem:[%s3] sm:$0xff]
  %v368 = vld [vmem:[%s3 + $0x8] sm:$0xff]
  %v369 = vld [vmem:[%s3 + $0x10] sm:$0x3]
  %371 = vset.pattern.permute.xlu0 0
  %372 = vperm.xlu0 %371, %v367
  %v373 = vpop.permute.xlu0 %372
  %376 = vset.pattern.permute.xlu0 0
  %377 = vperm.xlu0 %376, %v368
  %v378 = vpop.permute.xlu0 %377
  %381 = vset.pattern.permute.xlu0 0
  %382 = vperm.xlu0 %381, %v369
  %v383 = vpop.permute.xlu0 %382
  %v385 = vadd.f32 %v364, %v373
  %v386 = vadd.f32 %v365, %v378
  %v387 = vadd.f32 %v366, %v383
  %vm388 = vcmask 64512
  %v389 = vsel %vm388, %v385, 0.0
  %390 = vadd.xlane.f32.xlu0 %v389
  %v391 = vpop.xlane.xlu0 %390
  %v392 = vsel %vm388, %v386, 0.0
  %393 = vadd.xlane.f32.xlu0 %v392
  %v394 = vpop.xlane.xlu0 %393
  %vm395 = vcmask 58368
  %v396 = vsel %vm395, %v387, 0.0
  %397 = vadd.xlane.f32.xlu0 %v396
  %v398 = vpop.xlane.xlu0 %397
  %v399 = vrcp.pop 8.0
  %v400 = vmul.f32 %v391, %v399
  %v401 = vmul.f32 %v394, %v399
  %v402 = vmul.f32 %v398, %v399
  %v403 = vsub.f32 %v385, %v400
  %v404 = vsub.f32 %v386, %v401
  %v405 = vsub.f32 %v387, %v402
  %v406 = vmul.f32 %v403, %v403
  %v407 = vmul.f32 %v404, %v404
  %v408 = vmul.f32 %v405, %v405
  %v409 = vsel %vm388, %v406, 0.0
  %410 = vadd.xlane.f32.xlu0 %v409
  %v411 = vpop.xlane.xlu0 %410
  %v412 = vsel %vm388, %v407, 0.0
  %413 = vadd.xlane.f32.xlu0 %v412
  %v414 = vpop.xlane.xlu0 %413
  %v415 = vsel %vm395, %v408, 0.0
  %416 = vadd.xlane.f32.xlu0 %v415
  %v417 = vpop.xlane.xlu0 %416
  %v418 = vmul.f32 %v411, %v399
  %v419 = vmul.f32 %v414, %v399
  %v420 = vmul.f32 %v417, %v399
  %v421 = vadd.f32 %v418, 1e-05
  %v422 = vadd.f32 %v419, 1e-05
  %v423 = vadd.f32 %v420, 1e-05
  %v424 = vrsqrt.pop %v421
  %v425 = vrsqrt.pop %v422
  %v426 = vrsqrt.pop %v423
  %v427 = vmul.f32 %v403, %v424
  %v428 = vmul.f32 %v404, %v425
  %v429 = vmul.f32 %v405, %v426
  %v430 = vld [vmem:[%s4] sm:$0xff]
  %v431 = vld [vmem:[%s4 + $0x8] sm:$0xff]
  %v432 = vld [vmem:[%s4 + $0x10] sm:$0x3]
  %434 = vset.pattern.permute.xlu0 0
  %435 = vperm.xlu0 %434, %v430
  %v436 = vpop.permute.xlu0 %435
  %439 = vset.pattern.permute.xlu0 0
  %440 = vperm.xlu0 %439, %v431
  %v441 = vpop.permute.xlu0 %440
  %444 = vset.pattern.permute.xlu0 0
  %445 = vperm.xlu0 %444, %v432
  %v446 = vpop.permute.xlu0 %445
  %v448 = vmul.f32 %v427, %v436
  %v449 = vmul.f32 %v428, %v441
  %v450 = vmul.f32 %v429, %v446
  %v451 = vld [vmem:[%s5] sm:$0xff]
  %v452 = vld [vmem:[%s5 + $0x8] sm:$0xff]
  %v453 = vld [vmem:[%s5 + $0x10] sm:$0x3]
  %455 = vset.pattern.permute.xlu0 0
  %456 = vperm.xlu0 %455, %v451
  %v457 = vpop.permute.xlu0 %456
  %460 = vset.pattern.permute.xlu0 0
  %461 = vperm.xlu0 %460, %v452
  %v462 = vpop.permute.xlu0 %461
  %465 = vset.pattern.permute.xlu0 0
  %466 = vperm.xlu0 %465, %v453
  %v467 = vpop.permute.xlu0 %466
  %v469 = vadd.f32 %v448, %v457
  %v470 = vadd.f32 %v449, %v462
  %v471 = vadd.f32 %v450, %v467
  %v472 = vmax.f32 %v469, 0.0
  %v473 = vmax.f32 %v470, 0.0
  %v474 = vmax.f32 %v471, 0.0
  %v475 = vld [vmem:[%s6] sm:$0xff]
  %v476 = vld [vmem:[%s6 + $0x8] sm:$0x1]
  %478 = vset.pattern.permute.xlu0 0
  %479 = vperm.xlu0 %478, %v475
  %v480 = vpop.permute.xlu0 %479
  %483 = vset.pattern.permute.xlu0 0
  %484 = vperm.xlu0 %483, %v476
  %v485 = vpop.permute.xlu0 %484
  %v487 = vlaneseq
  %v488 = vshrl.u32 %v487, 7
  %v489 = vsub.s32 0, %v488
  %v490 = vrot.slane %v472, %v489
  %v491 = vmul.f32 %v480, %v490
  %v492 = vmul.f32 %v485, %v490
  %493 = vset.pattern.permute.xlu0 1
  %494 = vperm.xlu0 %493, %v475
  %v495 = vpop.permute.xlu0 %494
  %497 = vset.pattern.permute.xlu0 1
  %498 = vperm.xlu0 %497, %v476
  %v499 = vpop.permute.xlu0 %498
  %v501 = vlaneseq
  %v502 = vshrl.u32 %v501, 7
  %v503 = vsub.s32 1, %v502
  %v504 = vrot.slane %v472, %v503
  %v505 = vmul.f32 %v495, %v504
  %v506 = vmul.f32 %v499, %v504
  %v507 = vadd.f32 %v491, %v505
  %v508 = vadd.f32 %v492, %v506
  %509 = vset.pattern.permute.xlu0 2
  %510 = vperm.xlu0 %509, %v475
  %v511 = vpop.permute.xlu0 %510
  %513 = vset.pattern.permute.xlu0 2
  %514 = vperm.xlu0 %513, %v476
  %v515 = vpop.permute.xlu0 %514
  %v517 = vlaneseq
  %v518 = vshrl.u32 %v517, 7
  %v519 = vsub.s32 2, %v518
  %v520 = vrot.slane %v472, %v519
  %v521 = vmul.f32 %v511, %v520
  %v522 = vmul.f32 %v515, %v520
  %v523 = vadd.f32 %v507, %v521
  %v524 = vadd.f32 %v508, %v522
  %525 = vset.pattern.permute.xlu0 3
  %526 = vperm.xlu0 %525, %v475
  %v527 = vpop.permute.xlu0 %526
  %529 = vset.pattern.permute.xlu0 3
  %530 = vperm.xlu0 %529, %v476
  %v531 = vpop.permute.xlu0 %530
  %v533 = vlaneseq
  %v534 = vshrl.u32 %v533, 7
  %v535 = vsub.s32 3, %v534
  %v536 = vrot.slane %v472, %v535
  %v537 = vmul.f32 %v527, %v536
  %v538 = vmul.f32 %v531, %v536
  %v539 = vadd.f32 %v523, %v537
  %v540 = vadd.f32 %v524, %v538
  %541 = vset.pattern.permute.xlu0 4
  %542 = vperm.xlu0 %541, %v475
  %v543 = vpop.permute.xlu0 %542
  %545 = vset.pattern.permute.xlu0 4
  %546 = vperm.xlu0 %545, %v476
  %v547 = vpop.permute.xlu0 %546
  %v549 = vlaneseq
  %v550 = vshrl.u32 %v549, 7
  %v551 = vsub.s32 4, %v550
  %v552 = vrot.slane %v472, %v551
  %v553 = vmul.f32 %v543, %v552
  %v554 = vmul.f32 %v547, %v552
  %v555 = vadd.f32 %v539, %v553
  %v556 = vadd.f32 %v540, %v554
  %557 = vset.pattern.permute.xlu0 5
  %558 = vperm.xlu0 %557, %v475
  %v559 = vpop.permute.xlu0 %558
  %561 = vset.pattern.permute.xlu0 5
  %562 = vperm.xlu0 %561, %v476
  %v563 = vpop.permute.xlu0 %562
  %v565 = vlaneseq
  %v566 = vshrl.u32 %v565, 7
  %v567 = vsub.s32 5, %v566
  %v568 = vrot.slane %v472, %v567
  %v569 = vmul.f32 %v559, %v568
  %v570 = vmul.f32 %v563, %v568
  %v571 = vadd.f32 %v555, %v569
  %v572 = vadd.f32 %v556, %v570
  %573 = vset.pattern.permute.xlu0 6
  %574 = vperm.xlu0 %573, %v475
  %v575 = vpop.permute.xlu0 %574
  %577 = vset.pattern.permute.xlu0 6
  %578 = vperm.xlu0 %577, %v476
  %v579 = vpop.permute.xlu0 %578
  %v581 = vlaneseq
  %v582 = vshrl.u32 %v581, 7
  %v583 = vsub.s32 6, %v582
  %v584 = vrot.slane %v472, %v583
  %v585 = vmul.f32 %v575, %v584
  %v586 = vmul.f32 %v579, %v584
  %v587 = vadd.f32 %v571, %v585
  %v588 = vadd.f32 %v572, %v586
  %589 = vset.pattern.permute.xlu0 7
  %590 = vperm.xlu0 %589, %v475
  %v591 = vpop.permute.xlu0 %590
  %593 = vset.pattern.permute.xlu0 7
  %594 = vperm.xlu0 %593, %v476
  %v595 = vpop.permute.xlu0 %594
  %v597 = vlaneseq
  %v598 = vshrl.u32 %v597, 7
  %v599 = vsub.s32 7, %v598
  %v600 = vrot.slane %v472, %v599
  %v601 = vmul.f32 %v591, %v600
  %v602 = vmul.f32 %v595, %v600
  %v603 = vadd.f32 %v587, %v601
  %v604 = vadd.f32 %v588, %v602
  %605 = vset.pattern.permute.xlu0 8
  %606 = vperm.xlu0 %605, %v475
  %v607 = vpop.permute.xlu0 %606
  %609 = vset.pattern.permute.xlu0 8
  %610 = vperm.xlu0 %609, %v476
  %v611 = vpop.permute.xlu0 %610
  %v613 = vlaneseq
  %v614 = vshrl.u32 %v613, 7
  %v615 = vsub.s32 0, %v614
  %v616 = vrot.slane %v473, %v615
  %v617 = vmul.f32 %v607, %v616
  %v618 = vmul.f32 %v611, %v616
  %v619 = vadd.f32 %v603, %v617
  %v620 = vadd.f32 %v604, %v618
  %621 = vset.pattern.permute.xlu0 9
  %622 = vperm.xlu0 %621, %v475
  %v623 = vpop.permute.xlu0 %622
  %625 = vset.pattern.permute.xlu0 9
  %626 = vperm.xlu0 %625, %v476
  %v627 = vpop.permute.xlu0 %626
  %v629 = vlaneseq
  %v630 = vshrl.u32 %v629, 7
  %v631 = vsub.s32 1, %v630
  %v632 = vrot.slane %v473, %v631
  %v633 = vmul.f32 %v623, %v632
  %v634 = vmul.f32 %v627, %v632
  %v635 = vadd.f32 %v619, %v633
  %v636 = vadd.f32 %v620, %v634
  %637 = vset.pattern.permute.xlu0 10
  %638 = vperm.xlu0 %637, %v475
  %v639 = vpop.permute.xlu0 %638
  %641 = vset.pattern.permute.xlu0 10
  %642 = vperm.xlu0 %641, %v476
  %v643 = vpop.permute.xlu0 %642
  %v645 = vlaneseq
  %v646 = vshrl.u32 %v645, 7
  %v647 = vsub.s32 2, %v646
  %v648 = vrot.slane %v473, %v647
  %v649 = vmul.f32 %v639, %v648
  %v650 = vmul.f32 %v643, %v648
  %v651 = vadd.f32 %v635, %v649
  %v652 = vadd.f32 %v636, %v650
  %653 = vset.pattern.permute.xlu0 11
  %654 = vperm.xlu0 %653, %v475
  %v655 = vpop.permute.xlu0 %654
  %657 = vset.pattern.permute.xlu0 11
  %658 = vperm.xlu0 %657, %v476
  %v659 = vpop.permute.xlu0 %658
  %v661 = vlaneseq
  %v662 = vshrl.u32 %v661, 7
  %v663 = vsub.s32 3, %v662
  %v664 = vrot.slane %v473, %v663
  %v665 = vmul.f32 %v655, %v664
  %v666 = vmul.f32 %v659, %v664
  %v667 = vadd.f32 %v651, %v665
  %v668 = vadd.f32 %v652, %v666
  %669 = vset.pattern.permute.xlu0 12
  %670 = vperm.xlu0 %669, %v475
  %v671 = vpop.permute.xlu0 %670
  %673 = vset.pattern.permute.xlu0 12
  %674 = vperm.xlu0 %673, %v476
  %v675 = vpop.permute.xlu0 %674
  %v677 = vlaneseq
  %v678 = vshrl.u32 %v677, 7
  %v679 = vsub.s32 4, %v678
  %v680 = vrot.slane %v473, %v679
  %v681 = vmul.f32 %v671, %v680
  %v682 = vmul.f32 %v675, %v680
  %v683 = vadd.f32 %v667, %v681
  %v684 = vadd.f32 %v668, %v682
  %685 = vset.pattern.permute.xlu0 13
  %686 = vperm.xlu0 %685, %v475
  %v687 = vpop.permute.xlu0 %686
  %689 = vset.pattern.permute.xlu0 13
  %690 = vperm.xlu0 %689, %v476
  %v691 = vpop.permute.xlu0 %690
  %v693 = vlaneseq
  %v694 = vshrl.u32 %v693, 7
  %v695 = vsub.s32 5, %v694
  %v696 = vrot.slane %v473, %v695
  %v697 = vmul.f32 %v687, %v696
  %v698 = vmul.f32 %v691, %v696
  %v699 = vadd.f32 %v683, %v697
  %v700 = vadd.f32 %v684, %v698
  %701 = vset.pattern.permute.xlu0 14
  %702 = vperm.xlu0 %701, %v475
  %v703 = vpop.permute.xlu0 %702
  %705 = vset.pattern.permute.xlu0 14
  %706 = vperm.xlu0 %705, %v476
  %v707 = vpop.permute.xlu0 %706
  %v709 = vlaneseq
  %v710 = vshrl.u32 %v709, 7
  %v711 = vsub.s32 6, %v710
  %v712 = vrot.slane %v473, %v711
  %v713 = vmul.f32 %v703, %v712
  %v714 = vmul.f32 %v707, %v712
  %v715 = vadd.f32 %v699, %v713
  %v716 = vadd.f32 %v700, %v714
  %717 = vset.pattern.permute.xlu0 15
  %718 = vperm.xlu0 %717, %v475
  %v719 = vpop.permute.xlu0 %718
  %721 = vset.pattern.permute.xlu0 15
  %722 = vperm.xlu0 %721, %v476
  %v723 = vpop.permute.xlu0 %722
  %v725 = vlaneseq
  %v726 = vshrl.u32 %v725, 7
  %v727 = vsub.s32 7, %v726
  %v728 = vrot.slane %v473, %v727
  %v729 = vmul.f32 %v719, %v728
  %v730 = vmul.f32 %v723, %v728
  %v731 = vadd.f32 %v715, %v729
  %v732 = vadd.f32 %v716, %v730
  %733 = vset.pattern.permute.xlu0 16
  %734 = vperm.xlu0 %733, %v475
  %v735 = vpop.permute.xlu0 %734
  %737 = vset.pattern.permute.xlu0 16
  %738 = vperm.xlu0 %737, %v476
  %v739 = vpop.permute.xlu0 %738
  %v741 = vlaneseq
  %v742 = vshrl.u32 %v741, 7
  %v743 = vsub.s32 0, %v742
  %v744 = vrot.slane %v474, %v743
  %v745 = vmul.f32 %v735, %v744
  %v746 = vmul.f32 %v739, %v744
  %v747 = vadd.f32 %v731, %v745
  %v748 = vadd.f32 %v732, %v746
  %749 = vset.pattern.permute.xlu0 17
  %750 = vperm.xlu0 %749, %v475
  %v751 = vpop.permute.xlu0 %750
  %753 = vset.pattern.permute.xlu0 17
  %754 = vperm.xlu0 %753, %v476
  %v755 = vpop.permute.xlu0 %754
  %v757 = vlaneseq
  %v758 = vshrl.u32 %v757, 7
  %v759 = vsub.s32 1, %v758
  %v760 = vrot.slane %v474, %v759
  %v761 = vmul.f32 %v751, %v760
  %v762 = vmul.f32 %v755, %v760
  %v763 = vadd.f32 %v747, %v761
  %v764 = vadd.f32 %v748, %v762
  %v765 = vld [vmem:[%s7] sm:$0xff]
  %v766 = vld [vmem:[%s7 + $0x8] sm:$0x1]
  %768 = vset.pattern.permute.xlu0 0
  %769 = vperm.xlu0 %768, %v765
  %v770 = vpop.permute.xlu0 %769
  %773 = vset.pattern.permute.xlu0 0
  %774 = vperm.xlu0 %773, %v766
  %v775 = vpop.permute.xlu0 %774
  %v777 = vadd.f32 %v763, %v770
  %v778 = vadd.f32 %v764, %v775
  %v779 = vsel %vm388, %v777, 0.0
  %780 = vadd.xlane.f32.xlu0 %v779
  %v781 = vpop.xlane.xlu0 %780
  %vm782 = vcmask 57344
  %v783 = vsel %vm782, %v778, 0.0
  %784 = vadd.xlane.f32.xlu0 %v783
  %v785 = vpop.xlane.xlu0 %784
  %v786 = vmul.f32 %v781, %v399
  %v787 = vmul.f32 %v785, %v399
  %v788 = vsub.f32 %v777, %v786
  %v789 = vsub.f32 %v778, %v787
  %v790 = vmul.f32 %v788, %v788
  %v791 = vmul.f32 %v789, %v789
  %v792 = vsel %vm388, %v790, 0.0
  %793 = vadd.xlane.f32.xlu0 %v792
  %v794 = vpop.xlane.xlu0 %793
  %v795 = vsel %vm782, %v791, 0.0
  %796 = vadd.xlane.f32.xlu0 %v795
  %v797 = vpop.xlane.xlu0 %796
  %v798 = vmul.f32 %v794, %v399
  %v799 = vmul.f32 %v797, %v399
  %v800 = vadd.f32 %v798, 1e-05
  %v801 = vadd.f32 %v799, 1e-05
  %v802 = vrsqrt.pop %v800
  %v803 = vrsqrt.pop %v801
  %v804 = vmul.f32 %v788, %v802
  %v805 = vmul.f32 %v789, %v803
  %v806 = vld [vmem:[%s8] sm:$0xff]
  %v807 = vld [vmem:[%s8 + $0x8] sm:$0x1]
  %809 = vset.pattern.permute.xlu0 0
  %810 = vperm.xlu0 %809, %v806
  %v811 = vpop.permute.xlu0 %810
  %814 = vset.pattern.permute.xlu0 0
  %815 = vperm.xlu0 %814, %v807
  %v816 = vpop.permute.xlu0 %815
  %v818 = vmul.f32 %v804, %v811
  %v819 = vmul.f32 %v805, %v816
  %v820 = vld [vmem:[%s9] sm:$0xff]
  %v821 = vld [vmem:[%s9 + $0x8] sm:$0x1]
  %823 = vset.pattern.permute.xlu0 0
  %824 = vperm.xlu0 %823, %v820
  %v825 = vpop.permute.xlu0 %824
  %828 = vset.pattern.permute.xlu0 0
  %829 = vperm.xlu0 %828, %v821
  %v830 = vpop.permute.xlu0 %829
  %v832 = vadd.f32 %v818, %v825
  %v833 = vadd.f32 %v819, %v830
  %v834 = vmax.f32 %v832, 0.0
  %v835 = vmax.f32 %v833, 0.0
  %v836 = vld [vmem:[%s10] sm:$0xff]
  %v837 = vld [vmem:[%s10 + $0x8] sm:$0xff]
  %v838 = vld [vmem:[%s11] sm:$0xff]
  %v839 = vld [vmem:[%s11 + $0x8] sm:$0xff]
  %v840 = vld [vmem:[%s12] sm:$0xff]
  %v841 = vld [vmem:[%s12 + $0x8] sm:$0xff]
  %v842 = vld [vmem:[%s13] sm:$0xff]
  %v843 = vld [vmem:[%s13 + $0x8] sm:$0xff]
  %845 = vset.pattern.permute.xlu0 0
  %846 = vperm.xlu0 %845, %v836
  %v847 = vpop.permute.xlu0 %846
  %850 = vset.pattern.permute.xlu0 0
  %851 = vperm.xlu0 %850, %v837
  %v852 = vpop.permute.xlu0 %851
  %v854 = vlaneseq
  %v855 = vshrl.u32 %v854, 7
  %v856 = vsub.s32 0, %v855
  %v857 = vrot.slane %v834, %v856
  %v858 = vmul.f32 %v847, %v857
  %v859 = vmul.f32 %v852, %v857
  %861 = vset.pattern.permute.xlu0 0
  %862 = vperm.xlu0 %861, %v838
  %v863 = vpop.permute.xlu0 %862
  %866 = vset.pattern.permute.xlu0 0
  %867 = vperm.xlu0 %866, %v839
  %v868 = vpop.permute.xlu0 %867
  %v870 = vlaneseq
  %v871 = vshrl.u32 %v870, 7
  %v872 = vsub.s32 0, %v871
  %v873 = vrot.slane %v835, %v872
  %v874 = vmul.f32 %v863, %v873
  %v875 = vmul.f32 %v868, %v873
  %v876 = vadd.f32 %v858, %v874
  %v877 = vadd.f32 %v859, %v875
  %879 = vset.pattern.permute.xlu0 0
  %880 = vperm.xlu0 %879, %v840
  %v881 = vpop.permute.xlu0 %880
  %884 = vset.pattern.permute.xlu0 0
  %885 = vperm.xlu0 %884, %v841
  %v886 = vpop.permute.xlu0 %885
  %v888 = vmul.f32 %v881, 0.0
  %v889 = vmul.f32 %v886, 0.0
  %890 = vset.pattern.permute.xlu0 1
  %891 = vperm.xlu0 %890, %v840
  %v892 = vpop.permute.xlu0 %891
  %894 = vset.pattern.permute.xlu0 1
  %895 = vperm.xlu0 %894, %v841
  %v896 = vpop.permute.xlu0 %895
  %v898 = vmul.f32 %v892, 0.0
  %v899 = vmul.f32 %v896, 0.0
  %v900 = vadd.f32 %v888, %v898
  %v901 = vadd.f32 %v889, %v899
  %902 = vset.pattern.permute.xlu0 2
  %903 = vperm.xlu0 %902, %v840
  %v904 = vpop.permute.xlu0 %903
  %906 = vset.pattern.permute.xlu0 2
  %907 = vperm.xlu0 %906, %v841
  %v908 = vpop.permute.xlu0 %907
  %v910 = vmul.f32 %v904, 0.0
  %v911 = vmul.f32 %v908, 0.0
  %v912 = vadd.f32 %v900, %v910
  %v913 = vadd.f32 %v901, %v911
  %914 = vset.pattern.permute.xlu0 3
  %915 = vperm.xlu0 %914, %v840
  %v916 = vpop.permute.xlu0 %915
  %918 = vset.pattern.permute.xlu0 3
  %919 = vperm.xlu0 %918, %v841
  %v920 = vpop.permute.xlu0 %919
  %v922 = vmul.f32 %v916, 0.0
  %v923 = vmul.f32 %v920, 0.0
  %v924 = vadd.f32 %v912, %v922
  %v925 = vadd.f32 %v913, %v923
  %v926 = vadd.f32 %v876, %v924
  %v927 = vadd.f32 %v877, %v925
  %929 = vset.pattern.permute.xlu0 0
  %930 = vperm.xlu0 %929, %v842
  %v931 = vpop.permute.xlu0 %930
  %934 = vset.pattern.permute.xlu0 0
  %935 = vperm.xlu0 %934, %v843
  %v936 = vpop.permute.xlu0 %935
  %v938 = vadd.f32 %v926, %v931
  %v939 = vadd.f32 %v927, %v936
  %v940 = vxor.u32 %v938, 2147483648
  %v941 = vxor.u32 %v939, 2147483648
  %v942 = vmul.f32 %v940, 1.442695
  %v943 = vpow.pop %v942
  %v944 = vmul.f32 %v941, 1.442695
  %v945 = vpow.pop %v944
  %v946 = vadd.f32 %v943, 1.0
  %v947 = vadd.f32 %v945, 1.0
  %v948 = vrcp.pop %v946
  %v949 = vmul.f32 1.0, %v948
  %v950 = vrcp.pop %v947
  %v951 = vmul.f32 1.0, %v950
  %v952 = vtanh.pop %v939
  %v953 = vmul.f32 %v949, 0.0
  %v955 = vrot.slane %v952, 4
  %v957 = vmul.f32 %v949, %v955
  %v959 = vrot.slane %v957, 4
  %v961 = vadd.f32 %v953, %v959
  %v962 = vtanh.pop %v961
  %v964 = vrot.slane %v962, 4
  %v966 = vmul.f32 %v951, %v964
  %v967 = vmax.f32 %v966, 0.0
  %968 = vst.msk [vmem:[#allocation2] sm:$0x3] %vm395, %v967
  %s969 = scalar_lea.vmem [#allocation2], 32
  %vm970 = vcmask 60418
  %971 = vst.msk [vmem:[%s969] sm:$0xc] %vm970, %v967
  %v972 = vlaneseq
  %v973 = vshrl.u32 %v972, 7
  %v974 = vsub.s32 1, %v973
  %v975 = vrot.slane %v834, %v974
  %v976 = vmul.f32 %v847, %v975
  %v977 = vmul.f32 %v852, %v975
  %v978 = vlaneseq
  %v979 = vshrl.u32 %v978, 7
  %v980 = vsub.s32 7, %v979
  %v981 = vrot.slane %v834, %v980
  %v982 = vmul.f32 %v863, %v981
  %v983 = vmul.f32 %v868, %v981
  %v984 = vadd.f32 %v976, %v982
  %v985 = vadd.f32 %v977, %v983
  %v986 = vlaneseq
  %v987 = vshrl.u32 %v986, 7
  %v988 = vsub.s32 0, %v987
  %v989 = vrot.slane %v966, %v988
  %v990 = vmul.f32 %v881, %v989
  %v991 = vmul.f32 %v886, %v989
  %v992 = vlaneseq
  %v993 = vshrl.u32 %v992, 7
  %v994 = vsub.s32 1, %v993
  %v995 = vrot.slane %v966, %v994
  %v996 = vmul.f32 %v892, %v995
  %v997 = vmul.f32 %v896, %v995
  %v998 = vadd.f32 %v990, %v996
  %v999 = vadd.f32 %v991, %v997
  %v1000 = vlaneseq
  %v1001 = vshrl.u32 %v1000, 7
  %v1002 = vsub.s32 2, %v1001
  %v1003 = vrot.slane %v966, %v1002
  %v1004 = vmul.f32 %v904, %v1003
  %v1005 = vmul.f32 %v908, %v1003
  %v1006 = vadd.f32 %v998, %v1004
  %v1007 = vadd.f32 %v999, %v1005
  %v1008 = vlaneseq
  %v1009 = vshrl.u32 %v1008, 7
  %v1010 = vsub.s32 3, %v1009
  %v1011 = vrot.slane %v966, %v1010
  %v1012 = vmul.f32 %v916, %v1011
  %v1013 = vmul.f32 %v920, %v1011
  %v1014 = vadd.f32 %v1006, %v1012
  %v1015 = vadd.f32 %v1007, %v1013
  %v1016 = vadd.f32 %v984, %v1014
  %v1017 = vadd.f32 %v985, %v1015
  %v1018 = vadd.f32 %v1016, %v931
  %v1019 = vadd.f32 %v1017, %v936
  %v1020 = vxor.u32 %v1018, 2147483648
  %v1021 = vxor.u32 %v1019, 2147483648
  %v1022 = vmul.f32 %v1020, 1.442695
  %v1023 = vpow.pop %v1022
  %v1024 = vmul.f32 %v1021, 1.442695
  %v1025 = vpow.pop %v1024
  %v1026 = vadd.f32 %v1023, 1.0
  %v1027 = vadd.f32 %v1025, 1.0
  %v1028 = vrcp.pop %v1026
  %v1029 = vmul.f32 1.0, %v1028
  %v1030 = vrcp.pop %v1027
  %v1031 = vmul.f32 1.0, %v1030
  %v1032 = vtanh.pop %v1019
  %v1033 = vmul.f32 %v1029, %v961
  %v1035 = vrot.slane %v1032, 4
  %v1037 = vmul.f32 %v1029, %v1035
  %v1039 = vrot.slane %v1037, 4
  %v1041 = vadd.f32 %v1033, %v1039
  %v1042 = vtanh.pop %v1041
  %v1044 = vrot.slane %v1042, 4
  %v1046 = vmul.f32 %v1031, %v1044
  %v1047 = vmax.f32 %v1046, 0.0
  %s1048 = scalar_lea.vmem [#allocation2], 4
  %1049 = vst.msk [vmem:[%s1048] sm:$0x3] %vm395, %v1047
  %s1050 = scalar_lea.vmem [#allocation2], 28
  %1051 = vst.msk [vmem:[%s1050] sm:$0xc] %vm970, %v1047
  %v1052 = vlaneseq
  %v1053 = vshrl.u32 %v1052, 7
  %v1054 = vsub.s32 2, %v1053
  %v1055 = vrot.slane %v834, %v1054
  %v1056 = vmul.f32 %v847, %v1055
  %v1057 = vmul.f32 %v852, %v1055
  %v1058 = vlaneseq
  %v1059 = vshrl.u32 %v1058, 7
  %v1060 = vsub.s32 6, %v1059
  %v1061 = vrot.slane %v834, %v1060
  %v1062 = vmul.f32 %v863, %v1061
  %v1063 = vmul.f32 %v868, %v1061
  %v1064 = vadd.f32 %v1056, %v1062
  %v1065 = vadd.f32 %v1057, %v1063
  %v1066 = vlaneseq
  %v1067 = vshrl.u32 %v1066, 7
  %v1068 = vsub.s32 0, %v1067
  %v1069 = vrot.slane %v1046, %v1068
  %v1070 = vmul.f32 %v881, %v1069
  %v1071 = vmul.f32 %v886, %v1069
  %v1072 = vlaneseq
  %v1073 = vshrl.u32 %v1072, 7
  %v1074 = vsub.s32 1, %v1073
  %v1075 = vrot.slane %v1046, %v1074
  %v1076 = vmul.f32 %v892, %v1075
  %v1077 = vmul.f32 %v896, %v1075
  %v1078 = vadd.f32 %v1070, %v1076
  %v1079 = vadd.f32 %v1071, %v1077
  %v1080 = vlaneseq
  %v1081 = vshrl.u32 %v1080, 7
  %v1082 = vsub.s32 2, %v1081
  %v1083 = vrot.slane %v1046, %v1082
  %v1084 = vmul.f32 %v904, %v1083
  %v1085 = vmul.f32 %v908, %v1083
  %v1086 = vadd.f32 %v1078, %v1084
  %v1087 = vadd.f32 %v1079, %v1085
  %v1088 = vlaneseq
  %v1089 = vshrl.u32 %v1088, 7
  %v1090 = vsub.s32 3, %v1089
  %v1091 = vrot.slane %v1046, %v1090
  %v1092 = vmul.f32 %v916, %v1091
  %v1093 = vmul.f32 %v920, %v1091
  %v1094 = vadd.f32 %v1086, %v1092
  %v1095 = vadd.f32 %v1087, %v1093
  %v1096 = vadd.f32 %v1064, %v1094
  %v1097 = vadd.f32 %v1065, %v1095
  %v1098 = vadd.f32 %v1096, %v931
  %v1099 = vadd.f32 %v1097, %v936
  %v1100 = vxor.u32 %v1098, 2147483648
  %v1101 = vxor.u32 %v1099, 2147483648
  %v1102 = vmul.f32 %v1100, 1.442695
  %v1103 = vpow.pop %v1102
  %v1104 = vmul.f32 %v1101, 1.442695
  %v1105 = vpow.pop %v1104
  %v1106 = vadd.f32 %v1103, 1.0
  %v1107 = vadd.f32 %v1105, 1.0
  %v1108 = vrcp.pop %v1106
  %v1109 = vmul.f32 1.0, %v1108
  %v1110 = vrcp.pop %v1107
  %v1111 = vmul.f32 1.0, %v1110
  %v1112 = vtanh.pop %v1099
  %v1113 = vmul.f32 %v1109, %v1041
  %v1115 = vrot.slane %v1112, 4
  %v1117 = vmul.f32 %v1109, %v1115
  %v1119 = vrot.slane %v1117, 4
  %v1121 = vadd.f32 %v1113, %v1119
  %v1122 = vtanh.pop %v1121
  %v1124 = vrot.slane %v1122, 4
  %v1126 = vmul.f32 %v1111, %v1124
  %v1127 = vmax.f32 %v1126, 0.0
  %s1128 = scalar_lea.vmem [#allocation2], 8
  %1129 = vst.msk [vmem:[%s1128] sm:$0x3] %vm395, %v1127
  %s1130 = scalar_lea.vmem [#allocation2], 24
  %1131 = vst.msk [vmem:[%s1130] sm:$0xc] %vm970, %v1127
  %v1132 = vlaneseq
  %v1133 = vshrl.u32 %v1132, 7
  %v1134 = vsub.s32 3, %v1133
  %v1135 = vrot.slane %v834, %v1134
  %v1136 = vmul.f32 %v847, %v1135
  %v1137 = vmul.f32 %v852, %v1135
  %v1138 = vlaneseq
  %v1139 = vshrl.u32 %v1138, 7
  %v1140 = vsub.s32 5, %v1139
  %v1141 = vrot.slane %v834, %v1140
  %v1142 = vmul.f32 %v863, %v1141
  %v1143 = vmul.f32 %v868, %v1141
  %v1144 = vadd.f32 %v1136, %v1142
  %v1145 = vadd.f32 %v1137, %v1143
  %v1146 = vlaneseq
  %v1147 = vshrl.u32 %v1146, 7
  %v1148 = vsub.s32 0, %v1147
  %v1149 = vrot.slane %v1126, %v1148
  %v1150 = vmul.f32 %v881, %v1149
  %v1151 = vmul.f32 %v886, %v1149
  %v1152 = vlaneseq
  %v1153 = vshrl.u32 %v1152, 7
  %v1154 = vsub.s32 1, %v1153
  %v1155 = vrot.slane %v1126, %v1154
  %v1156 = vmul.f32 %v892, %v1155
  %v1157 = vmul.f32 %v896, %v1155
  %v1158 = vadd.f32 %v1150, %v1156
  %v1159 = vadd.f32 %v1151, %v1157
  %v1160 = vlaneseq
  %v1161 = vshrl.u32 %v1160, 7
  %v1162 = vsub.s32 2, %v1161
  %v1163 = vrot.slane %v1126, %v1162
  %v1164 = vmul.f32 %v904, %v1163
  %v1165 = vmul.f32 %v908, %v1163
  %v1166 = vadd.f32 %v1158, %v1164
  %v1167 = vadd.f32 %v1159, %v1165
  %v1168 = vlaneseq
  %v1169 = vshrl.u32 %v1168, 7
  %v1170 = vsub.s32 3, %v1169
  %v1171 = vrot.slane %v1126, %v1170
  %v1172 = vmul.f32 %v916, %v1171
  %v1173 = vmul.f32 %v920, %v1171
  %v1174 = vadd.f32 %v1166, %v1172
  %v1175 = vadd.f32 %v1167, %v1173
  %v1176 = vadd.f32 %v1144, %v1174
  %v1177 = vadd.f32 %v1145, %v1175
  %v1178 = vadd.f32 %v1176, %v931
  %v1179 = vadd.f32 %v1177, %v936
  %v1180 = vxor.u32 %v1178, 2147483648
  %v1181 = vxor.u32 %v1179, 2147483648
  %v1182 = vmul.f32 %v1180, 1.442695
  %v1183 = vpow.pop %v1182
  %v1184 = vmul.f32 %v1181, 1.442695
  %v1185 = vpow.pop %v1184
  %v1186 = vadd.f32 %v1183, 1.0
  %v1187 = vadd.f32 %v1185, 1.0
  %v1188 = vrcp.pop %v1186
  %v1189 = vmul.f32 1.0, %v1188
  %v1190 = vrcp.pop %v1187
  %v1191 = vmul.f32 1.0, %v1190
  %v1192 = vtanh.pop %v1179
  %v1193 = vmul.f32 %v1189, %v1121
  %v1195 = vrot.slane %v1192, 4
  %v1197 = vmul.f32 %v1189, %v1195
  %v1199 = vrot.slane %v1197, 4
  %v1201 = vadd.f32 %v1193, %v1199
  %v1202 = vtanh.pop %v1201
  %v1204 = vrot.slane %v1202, 4
  %v1206 = vmul.f32 %v1191, %v1204
  %v1207 = vmax.f32 %v1206, 0.0
  %s1208 = scalar_lea.vmem [#allocation2], 12
  %1209 = vst.msk [vmem:[%s1208] sm:$0x3] %vm395, %v1207
  %s1210 = scalar_lea.vmem [#allocation2], 20
  %1211 = vst.msk [vmem:[%s1210] sm:$0xc] %vm970, %v1207
  %v1212 = vlaneseq
  %v1213 = vshrl.u32 %v1212, 7
  %v1214 = vsub.s32 4, %v1213
  %v1215 = vrot.slane %v834, %v1214
  %v1216 = vmul.f32 %v847, %v1215
  %v1217 = vmul.f32 %v852, %v1215
  %v1218 = vmul.f32 %v863, %v1215
  %v1219 = vmul.f32 %v868, %v1215
  %v1220 = vadd.f32 %v1216, %v1218
  %v1221 = vadd.f32 %v1217, %v1219
  %v1222 = vlaneseq
  %v1223 = vshrl.u32 %v1222, 7
  %v1224 = vsub.s32 0, %v1223
  %v1225 = vrot.slane %v1206, %v1224
  %v1226 = vmul.f32 %v881, %v1225
  %v1227 = vmul.f32 %v886, %v1225
  %v1228 = vlaneseq
  %v1229 = vshrl.u32 %v1228, 7
  %v1230 = vsub.s32 1, %v1229
  %v1231 = vrot.slane %v1206, %v1230
  %v1232 = vmul.f32 %v892, %v1231
  %v1233 = vmul.f32 %v896, %v1231
  %v1234 = vadd.f32 %v1226, %v1232
  %v1235 = vadd.f32 %v1227, %v1233
  %v1236 = vlaneseq
  %v1237 = vshrl.u32 %v1236, 7
  %v1238 = vsub.s32 2, %v1237
  %v1239 = vrot.slane %v1206, %v1238
  %v1240 = vmul.f32 %v904, %v1239
  %v1241 = vmul.f32 %v908, %v1239
  %v1242 = vadd.f32 %v1234, %v1240
  %v1243 = vadd.f32 %v1235, %v1241
  %v1244 = vlaneseq
  %v1245 = vshrl.u32 %v1244, 7
  %v1246 = vsub.s32 3, %v1245
  %v1247 = vrot.slane %v1206, %v1246
  %v1248 = vmul.f32 %v916, %v1247
  %v1249 = vmul.f32 %v920, %v1247
  %v1250 = vadd.f32 %v1242, %v1248
  %v1251 = vadd.f32 %v1243, %v1249
  %v1252 = vadd.f32 %v1220, %v1250
  %v1253 = vadd.f32 %v1221, %v1251
  %v1254 = vadd.f32 %v1252, %v931
  %v1255 = vadd.f32 %v1253, %v936
  %v1256 = vxor.u32 %v1254, 2147483648
  %v1257 = vxor.u32 %v1255, 2147483648
  %v1258 = vmul.f32 %v1256, 1.442695
  %v1259 = vpow.pop %v1258
  %v1260 = vmul.f32 %v1257, 1.442695
  %v1261 = vpow.pop %v1260
  %v1262 = vadd.f32 %v1259, 1.0
  %v1263 = vadd.f32 %v1261, 1.0
  %v1264 = vrcp.pop %v1262
  %v1265 = vmul.f32 1.0, %v1264
  %v1266 = vrcp.pop %v1263
  %v1267 = vmul.f32 1.0, %v1266
  %v1268 = vtanh.pop %v1255
  %v1269 = vmul.f32 %v1265, %v1201
  %v1271 = vrot.slane %v1268, 4
  %v1273 = vmul.f32 %v1265, %v1271
  %v1275 = vrot.slane %v1273, 4
  %v1277 = vadd.f32 %v1269, %v1275
  %v1278 = vtanh.pop %v1277
  %v1280 = vrot.slane %v1278, 4
  %v1282 = vmul.f32 %v1267, %v1280
  %v1283 = vmax.f32 %v1282, 0.0
  %s1284 = scalar_lea.vmem [#allocation2], 16
  %1285 = vst.msk [vmem:[%s1284] sm:$0x3] %vm395, %v1283
  %1286 = vst.msk [vmem:[%s1284] sm:$0xc] %vm970, %v1283
  %v1287 = vmul.f32 %v847, %v1141
  %v1288 = vmul.f32 %v852, %v1141
  %v1289 = vmul.f32 %v863, %v1135
  %v1290 = vmul.f32 %v868, %v1135
  %v1291 = vadd.f32 %v1287, %v1289
  %v1292 = vadd.f32 %v1288, %v1290
  %v1293 = vlaneseq
  %v1294 = vshrl.u32 %v1293, 7
  %v1295 = vsub.s32 0, %v1294
  %v1296 = vrot.slane %v1282, %v1295
  %v1297 = vmul.f32 %v881, %v1296
  %v1298 = vmul.f32 %v886, %v1296
  %v1299 = vlaneseq
  %v1300 = vshrl.u32 %v1299, 7
  %v1301 = vsub.s32 1, %v1300
  %v1302 = vrot.slane %v1282, %v1301
  %v1303 = vmul.f32 %v892, %v1302
  %v1304 = vmul.f32 %v896, %v1302
  %v1305 = vadd.f32 %v1297, %v1303
  %v1306 = vadd.f32 %v1298, %v1304
  %v1307 = vlaneseq
  %v1308 = vshrl.u32 %v1307, 7
  %v1309 = vsub.s32 2, %v1308
  %v1310 = vrot.slane %v1282, %v1309
  %v1311 = vmul.f32 %v904, %v1310
  %v1312 = vmul.f32 %v908, %v1310
  %v1313 = vadd.f32 %v1305, %v1311
  %v1314 = vadd.f32 %v1306, %v1312
  %v1315 = vlaneseq
  %v1316 = vshrl.u32 %v1315, 7
  %v1317 = vsub.s32 3, %v1316
  %v1318 = vrot.slane %v1282, %v1317
  %v1319 = vmul.f32 %v916, %v1318
  %v1320 = vmul.f32 %v920, %v1318
  %v1321 = vadd.f32 %v1313, %v1319
  %v1322 = vadd.f32 %v1314, %v1320
  %v1323 = vadd.f32 %v1291, %v1321
  %v1324 = vadd.f32 %v1292, %v1322
  %v1325 = vadd.f32 %v1323, %v931
  %v1326 = vadd.f32 %v1324, %v936
  %v1327 = vxor.u32 %v1325, 2147483648
  %v1328 = vxor.u32 %v1326, 2147483648
  %v1329 = vmul.f32 %v1327, 1.442695
  %v1330 = vpow.pop %v1329
  %v1331 = vmul.f32 %v1328, 1.442695
  %v1332 = vpow.pop %v1331
  %v1333 = vadd.f32 %v1330, 1.0
  %v1334 = vadd.f32 %v1332, 1.0
  %v1335 = vrcp.pop %v1333
  %v1336 = vmul.f32 1.0, %v1335
  %v1337 = vrcp.pop %v1334
  %v1338 = vmul.f32 1.0, %v1337
  %v1339 = vtanh.pop %v1326
  %v1340 = vmul.f32 %v1336, %v1277
  %v1342 = vrot.slane %v1339, 4
  %v1344 = vmul.f32 %v1336, %v1342
  %v1346 = vrot.slane %v1344, 4
  %v1348 = vadd.f32 %v1340, %v1346
  %v1349 = vtanh.pop %v1348
  %v1351 = vrot.slane %v1349, 4
  %v1353 = vmul.f32 %v1338, %v1351
  %v1354 = vmax.f32 %v1353, 0.0
  %1355 = vst.msk [vmem:[%s1210] sm:$0x3] %vm395, %v1354
  %1356 = vst.msk [vmem:[%s1208] sm:$0xc] %vm970, %v1354
  %v1357 = vmul.f32 %v847, %v1061
  %v1358 = vmul.f32 %v852, %v1061
  %v1359 = vmul.f32 %v863, %v1055
  %v1360 = vmul.f32 %v868, %v1055
  %v1361 = vadd.f32 %v1357, %v1359
  %v1362 = vadd.f32 %v1358, %v1360
  %v1363 = vlaneseq
  %v1364 = vshrl.u32 %v1363, 7
  %v1365 = vsub.s32 0, %v1364
  %v1366 = vrot.slane %v1353, %v1365
  %v1367 = vmul.f32 %v881, %v1366
  %v1368 = vmul.f32 %v886, %v1366
  %v1369 = vlaneseq
  %v1370 = vshrl.u32 %v1369, 7
  %v1371 = vsub.s32 1, %v1370
  %v1372 = vrot.slane %v1353, %v1371
  %v1373 = vmul.f32 %v892, %v1372
  %v1374 = vmul.f32 %v896, %v1372
  %v1375 = vadd.f32 %v1367, %v1373
  %v1376 = vadd.f32 %v1368, %v1374
  %v1377 = vlaneseq
  %v1378 = vshrl.u32 %v1377, 7
  %v1379 = vsub.s32 2, %v1378
  %v1380 = vrot.slane %v1353, %v1379
  %v1381 = vmul.f32 %v904, %v1380
  %v1382 = vmul.f32 %v908, %v1380
  %v1383 = vadd.f32 %v1375, %v1381
  %v1384 = vadd.f32 %v1376, %v1382
  %v1385 = vlaneseq
  %v1386 = vshrl.u32 %v1385, 7
  %v1387 = vsub.s32 3, %v1386
  %v1388 = vrot.slane %v1353, %v1387
  %v1389 = vmul.f32 %v916, %v1388
  %v1390 = vmul.f32 %v920, %v1388
  %v1391 = vadd.f32 %v1383, %v1389
  %v1392 = vadd.f32 %v1384, %v1390
  %v1393 = vadd.f32 %v1361, %v1391
  %v1394 = vadd.f32 %v1362, %v1392
  %v1395 = vadd.f32 %v1393, %v931
  %v1396 = vadd.f32 %v1394, %v936
  %v1397 = vxor.u32 %v1395, 2147483648
  %v1398 = vxor.u32 %v1396, 2147483648
  %v1399 = vmul.f32 %v1397, 1.442695
  %v1400 = vpow.pop %v1399
  %v1401 = vmul.f32 %v1398, 1.442695
  %v1402 = vpow.pop %v1401
  %v1403 = vadd.f32 %v1400, 1.0
  %v1404 = vadd.f32 %v1402, 1.0
  %v1405 = vrcp.pop %v1403
  %v1406 = vmul.f32 1.0, %v1405
  %v1407 = vrcp.pop %v1404
  %v1408 = vmul.f32 1.0, %v1407
  %v1409 = vtanh.pop %v1396
  %v1410 = vmul.f32 %v1406, %v1348
  %v1412 = vrot.slane %v1409, 4
  %v1414 = vmul.f32 %v1406, %v1412
  %v1416 = vrot.slane %v1414, 4
  %v1418 = vadd.f32 %v1410, %v1416
  %v1419 = vtanh.pop %v1418
  %v1421 = vrot.slane %v1419, 4
  %v1423 = vmul.f32 %v1408, %v1421
  %v1424 = vmax.f32 %v1423, 0.0
  %1425 = vst.msk [vmem:[%s1130] sm:$0x3] %vm395, %v1424
  %1426 = vst.msk [vmem:[%s1128] sm:$0xc] %vm970, %v1424
  %v1427 = vmul.f32 %v847, %v981
  %v1428 = vmul.f32 %v852, %v981
  %v1429 = vmul.f32 %v863, %v975
  %v1430 = vmul.f32 %v868, %v975
  %v1431 = vadd.f32 %v1427, %v1429
  %v1432 = vadd.f32 %v1428, %v1430
  %v1433 = vlaneseq
  %v1434 = vshrl.u32 %v1433, 7
  %v1435 = vsub.s32 0, %v1434
  %v1436 = vrot.slane %v1423, %v1435
  %v1437 = vmul.f32 %v881, %v1436
  %v1438 = vmul.f32 %v886, %v1436
  %v1439 = vlaneseq
  %v1440 = vshrl.u32 %v1439, 7
  %v1441 = vsub.s32 1, %v1440
  %v1442 = vrot.slane %v1423, %v1441
  %v1443 = vmul.f32 %v892, %v1442
  %v1444 = vmul.f32 %v896, %v1442
  %v1445 = vadd.f32 %v1437, %v1443
  %v1446 = vadd.f32 %v1438, %v1444
  %v1447 = vlaneseq
  %v1448 = vshrl.u32 %v1447, 7
  %v1449 = vsub.s32 2, %v1448
  %v1450 = vrot.slane %v1423, %v1449
  %v1451 = vmul.f32 %v904, %v1450
  %v1452 = vmul.f32 %v908, %v1450
  %v1453 = vadd.f32 %v1445, %v1451
  %v1454 = vadd.f32 %v1446, %v1452
  %v1455 = vlaneseq
  %v1456 = vshrl.u32 %v1455, 7
  %v1457 = vsub.s32 3, %v1456
  %v1458 = vrot.slane %v1423, %v1457
  %v1459 = vmul.f32 %v916, %v1458
  %v1460 = vmul.f32 %v920, %v1458
  %v1461 = vadd.f32 %v1453, %v1459
  %v1462 = vadd.f32 %v1454, %v1460
  %v1463 = vadd.f32 %v1431, %v1461
  %v1464 = vadd.f32 %v1432, %v1462
  %v1465 = vadd.f32 %v1463, %v931
  %v1466 = vadd.f32 %v1464, %v936
  %v1467 = vxor.u32 %v1465, 2147483648
  %v1468 = vxor.u32 %v1466, 2147483648
  %v1469 = vmul.f32 %v1467, 1.442695
  %v1470 = vpow.pop %v1469
  %v1471 = vmul.f32 %v1468, 1.442695
  %v1472 = vpow.pop %v1471
  %v1473 = vadd.f32 %v1470, 1.0
  %v1474 = vadd.f32 %v1472, 1.0
  %v1475 = vrcp.pop %v1473
  %v1476 = vmul.f32 1.0, %v1475
  %v1477 = vrcp.pop %v1474
  %v1478 = vmul.f32 1.0, %v1477
  %v1479 = vtanh.pop %v1466
  %v1480 = vmul.f32 %v1476, %v1418
  %v1482 = vrot.slane %v1479, 4
  %v1484 = vmul.f32 %v1476, %v1482
  %v1486 = vrot.slane %v1484, 4
  %v1488 = vadd.f32 %v1480, %v1486
  %v1489 = vtanh.pop %v1488
  %v1491 = vrot.slane %v1489, 4
  %v1493 = vmul.f32 %v1478, %v1491
  %v1494 = vmax.f32 %v1493, 0.0
  %1495 = vst.msk [vmem:[%s1050] sm:$0x3] %vm395, %v1494
  %1496 = vst.msk [vmem:[%s1048] sm:$0xc] %vm970, %v1494
  %v1497 = vmul.f32 %v847, %v873
  %v1498 = vmul.f32 %v852, %v873
  %v1499 = vmul.f32 %v863, %v857
  %v1500 = vmul.f32 %v868, %v857
  %v1501 = vadd.f32 %v1497, %v1499
  %v1502 = vadd.f32 %v1498, %v1500
  %v1503 = vlaneseq
  %v1504 = vshrl.u32 %v1503, 7
  %v1505 = vsub.s32 0, %v1504
  %v1506 = vrot.slane %v1493, %v1505
  %v1507 = vmul.f32 %v881, %v1506
  %v1508 = vmul.f32 %v886, %v1506
  %v1509 = vlaneseq
  %v1510 = vshrl.u32 %v1509, 7
  %v1511 = vsub.s32 1, %v1510
  %v1512 = vrot.slane %v1493, %v1511
  %v1513 = vmul.f32 %v892, %v1512
  %v1514 = vmul.f32 %v896, %v1512
  %v1515 = vadd.f32 %v1507, %v1513
  %v1516 = vadd.f32 %v1508, %v1514
  %v1517 = vlaneseq
  %v1518 = vshrl.u32 %v1517, 7
  %v1519 = vsub.s32 2, %v1518
  %v1520 = vrot.slane %v1493, %v1519
  %v1521 = vmul.f32 %v904, %v1520
  %v1522 = vmul.f32 %v908, %v1520
  %v1523 = vadd.f32 %v1515, %v1521
  %v1524 = vadd.f32 %v1516, %v1522
  %v1525 = vlaneseq
  %v1526 = vshrl.u32 %v1525, 7
  %v1527 = vsub.s32 3, %v1526
  %v1528 = vrot.slane %v1493, %v1527
  %v1529 = vmul.f32 %v916, %v1528
  %v1530 = vmul.f32 %v920, %v1528
  %v1531 = vadd.f32 %v1523, %v1529
  %v1532 = vadd.f32 %v1524, %v1530
  %v1533 = vadd.f32 %v1501, %v1531
  %v1534 = vadd.f32 %v1502, %v1532
  %v1535 = vadd.f32 %v1533, %v931
  %v1536 = vadd.f32 %v1534, %v936
  %v1537 = vxor.u32 %v1535, 2147483648
  %v1538 = vxor.u32 %v1536, 2147483648
  %v1539 = vmul.f32 %v1537, 1.442695
  %v1540 = vpow.pop %v1539
  %v1541 = vmul.f32 %v1538, 1.442695
  %v1542 = vpow.pop %v1541
  %v1543 = vadd.f32 %v1540, 1.0
  %v1544 = vadd.f32 %v1542, 1.0
  %v1545 = vrcp.pop %v1543
  %v1546 = vmul.f32 1.0, %v1545
  %v1547 = vrcp.pop %v1544
  %v1548 = vmul.f32 1.0, %v1547
  %v1549 = vtanh.pop %v1536
  %v1550 = vmul.f32 %v1546, %v1488
  %v1552 = vrot.slane %v1549, 4
  %v1554 = vmul.f32 %v1546, %v1552
  %v1556 = vrot.slane %v1554, 4
  %v1558 = vadd.f32 %v1550, %v1556
  %v1559 = vtanh.pop %v1558
  %v1561 = vrot.slane %v1559, 4
  %v1563 = vmul.f32 %v1548, %v1561
  %v1564 = vmax.f32 %v1563, 0.0
  %1565 = vst.msk [vmem:[%s969] sm:$0x3] %vm395, %v1564
  %1566 = vst.msk [vmem:[#allocation2] sm:$0xc] %vm970, %v1564
  %v1567 = vld [vmem:[%s14] sm:$0xff]
  %v1568 = vld [vmem:[%s15] sm:$0xff]
  %v1569 = vld [vmem:[%s16] sm:$0xff]
  %v1570 = vld [vmem:[%s17] sm:$0xff]
  %v1571 = vld [vmem:[#allocation2] sm:$0xf]
  %v1572 = vld [vmem:[%s969] sm:$0xf]
  %1574 = vset.pattern.permute.xlu0 0
  %1575 = vperm.xlu0 %1574, %v1567
  %v1576 = vpop.permute.xlu0 %1575
  %v1578 = vlaneseq
  %v1579 = vshrl.u32 %v1578, 7
  %v1580 = vsub.s32 0, %v1579
  %v1581 = vrot.slane %v1571, %v1580
  %v1582 = vmul.f32 %v1576, %v1581
  %1583 = vset.pattern.permute.xlu0 1
  %1584 = vperm.xlu0 %1583, %v1567
  %v1585 = vpop.permute.xlu0 %1584
  %v1587 = vlaneseq
  %v1588 = vshrl.u32 %v1587, 7
  %v1589 = vsub.s32 1, %v1588
  %v1590 = vrot.slane %v1571, %v1589
  %v1591 = vmul.f32 %v1585, %v1590
  %v1592 = vadd.f32 %v1582, %v1591
  %1593 = vset.pattern.permute.xlu0 2
  %1594 = vperm.xlu0 %1593, %v1567
  %v1595 = vpop.permute.xlu0 %1594
  %v1597 = vlaneseq
  %v1598 = vshrl.u32 %v1597, 7
  %v1599 = vsub.s32 2, %v1598
  %v1600 = vrot.slane %v1571, %v1599
  %v1601 = vmul.f32 %v1595, %v1600
  %v1602 = vadd.f32 %v1592, %v1601
  %1603 = vset.pattern.permute.xlu0 3
  %1604 = vperm.xlu0 %1603, %v1567
  %v1605 = vpop.permute.xlu0 %1604
  %v1607 = vlaneseq
  %v1608 = vshrl.u32 %v1607, 7
  %v1609 = vsub.s32 3, %v1608
  %v1610 = vrot.slane %v1571, %v1609
  %v1611 = vmul.f32 %v1605, %v1610
  %v1612 = vadd.f32 %v1602, %v1611
  %1614 = vset.pattern.permute.xlu0 0
  %1615 = vperm.xlu0 %1614, %v1568
  %v1616 = vpop.permute.xlu0 %1615
  %v1618 = vlaneseq
  %v1619 = vshrl.u32 %v1618, 7
  %v1620 = vsub.s32 0, %v1619
  %v1621 = vrot.slane %v1572, %v1620
  %v1622 = vmul.f32 %v1616, %v1621
  %1623 = vset.pattern.permute.xlu0 1
  %1624 = vperm.xlu0 %1623, %v1568
  %v1625 = vpop.permute.xlu0 %1624
  %v1627 = vlaneseq
  %v1628 = vshrl.u32 %v1627, 7
  %v1629 = vsub.s32 1, %v1628
  %v1630 = vrot.slane %v1572, %v1629
  %v1631 = vmul.f32 %v1625, %v1630
  %v1632 = vadd.f32 %v1622, %v1631
  %1633 = vset.pattern.permute.xlu0 2
  %1634 = vperm.xlu0 %1633, %v1568
  %v1635 = vpop.permute.xlu0 %1634
  %v1637 = vlaneseq
  %v1638 = vshrl.u32 %v1637, 7
  %v1639 = vsub.s32 2, %v1638
  %v1640 = vrot.slane %v1572, %v1639
  %v1641 = vmul.f32 %v1635, %v1640
  %v1642 = vadd.f32 %v1632, %v1641
  %1643 = vset.pattern.permute.xlu0 3
  %1644 = vperm.xlu0 %1643, %v1568
  %v1645 = vpop.permute.xlu0 %1644
  %v1647 = vlaneseq
  %v1648 = vshrl.u32 %v1647, 7
  %v1649 = vsub.s32 3, %v1648
  %v1650 = vrot.slane %v1572, %v1649
  %v1651 = vmul.f32 %v1645, %v1650
  %v1652 = vadd.f32 %v1642, %v1651
  %v1653 = vadd.f32 %v1612, %v1652
  %1655 = vset.pattern.permute.xlu0 0
  %1656 = vperm.xlu0 %1655, %v1569
  %v1657 = vpop.permute.xlu0 %1656
  %v1659 = vmul.f32 %v1657, 0.0
  %1660 = vset.pattern.permute.xlu0 1
  %1661 = vperm.xlu0 %1660, %v1569
  %v1662 = vpop.permute.xlu0 %1661
  %v1664 = vmul.f32 %v1662, 0.0
  %v1665 = vadd.f32 %v1659, %v1664
  %v1666 = vadd.f32 %v1653, %v1665
  %1668 = vset.pattern.permute.xlu0 0
  %1669 = vperm.xlu0 %1668, %v1570
  %v1670 = vpop.permute.xlu0 %1669
  %v1672 = vadd.f32 %v1666, %v1670
  %v1673 = vxor.u32 %v1672, 2147483648
  %v1674 = vmul.f32 %v1673, 1.442695
  %v1675 = vpow.pop %v1674
  %v1676 = vadd.f32 %v1675, 1.0
  %v1677 = vrcp.pop %v1676
  %v1678 = vmul.f32 1.0, %v1677
  %v1679 = vtanh.pop %v1672
  %v1680 = vmul.f32 %v1678, 0.0
  %v1682 = vrot.slane %v1679, 6
  %v1684 = vmul.f32 %v1678, %v1682
  %v1686 = vrot.slane %v1684, 6
  %v1688 = vadd.f32 %v1680, %v1686
  %v1689 = vtanh.pop %v1688
  %v1691 = vrot.slane %v1689, 6
  %v1693 = vmul.f32 %v1678, %v1691
  %vm1694 = vcmask 61444
  %1695 = vst.msk [vmem:[%s18 - $0x4] sm:$0x10] %vm1694, %v1693
  %s1696 = scalar_lea.vmem %s18, 16
  %vm1697 = vcmask 62469
  %1698 = vst.msk [vmem:[%s1696 + $0x3] sm:$0x20] %vm1697, %v1693
  %v1699 = vld [vmem:[%s1048] sm:$0xf]
  %v1700 = vld [vmem:[%s1050] sm:$0xf]
  %v1701 = vlaneseq
  %v1702 = vshrl.u32 %v1701, 7
  %v1703 = vsub.s32 0, %v1702
  %v1704 = vrot.slane %v1699, %v1703
  %v1705 = vmul.f32 %v1576, %v1704
  %v1706 = vlaneseq
  %v1707 = vshrl.u32 %v1706, 7
  %v1708 = vsub.s32 1, %v1707
  %v1709 = vrot.slane %v1699, %v1708
  %v1710 = vmul.f32 %v1585, %v1709
  %v1711 = vadd.f32 %v1705, %v1710
  %v1712 = vlaneseq
  %v1713 = vshrl.u32 %v1712, 7
  %v1714 = vsub.s32 2, %v1713
  %v1715 = vrot.slane %v1699, %v1714
  %v1716 = vmul.f32 %v1595, %v1715
  %v1717 = vadd.f32 %v1711, %v1716
  %v1718 = vlaneseq
  %v1719 = vshrl.u32 %v1718, 7
  %v1720 = vsub.s32 3, %v1719
  %v1721 = vrot.slane %v1699, %v1720
  %v1722 = vmul.f32 %v1605, %v1721
  %v1723 = vadd.f32 %v1717, %v1722
  %v1724 = vlaneseq
  %v1725 = vshrl.u32 %v1724, 7
  %v1726 = vsub.s32 0, %v1725
  %v1727 = vrot.slane %v1700, %v1726
  %v1728 = vmul.f32 %v1616, %v1727
  %v1729 = vlaneseq
  %v1730 = vshrl.u32 %v1729, 7
  %v1731 = vsub.s32 1, %v1730
  %v1732 = vrot.slane %v1700, %v1731
  %v1733 = vmul.f32 %v1625, %v1732
  %v1734 = vadd.f32 %v1728, %v1733
  %v1735 = vlaneseq
  %v1736 = vshrl.u32 %v1735, 7
  %v1737 = vsub.s32 2, %v1736
  %v1738 = vrot.slane %v1700, %v1737
  %v1739 = vmul.f32 %v1635, %v1738
  %v1740 = vadd.f32 %v1734, %v1739
  %v1741 = vlaneseq
  %v1742 = vshrl.u32 %v1741, 7
  %v1743 = vsub.s32 3, %v1742
  %v1744 = vrot.slane %v1700, %v1743
  %v1745 = vmul.f32 %v1645, %v1744
  %v1746 = vadd.f32 %v1740, %v1745
  %v1747 = vadd.f32 %v1723, %v1746
  %v1748 = vlaneseq
  %v1749 = vshrl.u32 %v1748, 7
  %v1750 = vsub.s32 4, %v1749
  %v1751 = vrot.slane %v1693, %v1750
  %v1752 = vmul.f32 %v1657, %v1751
  %v1753 = vlaneseq
  %v1754 = vshrl.u32 %v1753, 7
  %v1755 = vsub.s32 5, %v1754
  %v1756 = vrot.slane %v1693, %v1755
  %v1757 = vmul.f32 %v1662, %v1756
  %v1758 = vadd.f32 %v1752, %v1757
  %v1759 = vadd.f32 %v1747, %v1758
  %v1760 = vadd.f32 %v1759, %v1670
  %v1761 = vxor.u32 %v1760, 2147483648
  %v1762 = vmul.f32 %v1761, 1.442695
  %v1763 = vpow.pop %v1762
  %v1764 = vadd.f32 %v1763, 1.0
  %v1765 = vrcp.pop %v1764
  %v1766 = vmul.f32 1.0, %v1765
  %v1767 = vtanh.pop %v1760
  %v1768 = vmul.f32 %v1766, %v1688
  %v1770 = vrot.slane %v1767, 6
  %v1772 = vmul.f32 %v1766, %v1770
  %v1774 = vrot.slane %v1772, 6
  %v1776 = vadd.f32 %v1768, %v1774
  %v1777 = vtanh.pop %v1776
  %v1779 = vrot.slane %v1777, 6
  %v1781 = vmul.f32 %v1766, %v1779
  %1782 = vst.msk [vmem:[%s18 - $0x3] sm:$0x10] %vm1694, %v1781
  %1783 = vst.msk [vmem:[%s1696 + $0x2] sm:$0x20] %vm1697, %v1781
  %v1784 = vld [vmem:[%s1128] sm:$0xf]
  %v1785 = vld [vmem:[%s1130] sm:$0xf]
  %v1786 = vlaneseq
  %v1787 = vshrl.u32 %v1786, 7
  %v1788 = vsub.s32 0, %v1787
  %v1789 = vrot.slane %v1784, %v1788
  %v1790 = vmul.f32 %v1576, %v1789
  %v1791 = vlaneseq
  %v1792 = vshrl.u32 %v1791, 7
  %v1793 = vsub.s32 1, %v1792
  %v1794 = vrot.slane %v1784, %v1793
  %v1795 = vmul.f32 %v1585, %v1794
  %v1796 = vadd.f32 %v1790, %v1795
  %v1797 = vlaneseq
  %v1798 = vshrl.u32 %v1797, 7
  %v1799 = vsub.s32 2, %v1798
  %v1800 = vrot.slane %v1784, %v1799
  %v1801 = vmul.f32 %v1595, %v1800
  %v1802 = vadd.f32 %v1796, %v1801
  %v1803 = vlaneseq
  %v1804 = vshrl.u32 %v1803, 7
  %v1805 = vsub.s32 3, %v1804
  %v1806 = vrot.slane %v1784, %v1805
  %v1807 = vmul.f32 %v1605, %v1806
  %v1808 = vadd.f32 %v1802, %v1807
  %v1809 = vlaneseq
  %v1810 = vshrl.u32 %v1809, 7
  %v1811 = vsub.s32 0, %v1810
  %v1812 = vrot.slane %v1785, %v1811
  %v1813 = vmul.f32 %v1616, %v1812
  %v1814 = vlaneseq
  %v1815 = vshrl.u32 %v1814, 7
  %v1816 = vsub.s32 1, %v1815
  %v1817 = vrot.slane %v1785, %v1816
  %v1818 = vmul.f32 %v1625, %v1817
  %v1819 = vadd.f32 %v1813, %v1818
  %v1820 = vlaneseq
  %v1821 = vshrl.u32 %v1820, 7
  %v1822 = vsub.s32 2, %v1821
  %v1823 = vrot.slane %v1785, %v1822
  %v1824 = vmul.f32 %v1635, %v1823
  %v1825 = vadd.f32 %v1819, %v1824
  %v1826 = vlaneseq
  %v1827 = vshrl.u32 %v1826, 7
  %v1828 = vsub.s32 3, %v1827
  %v1829 = vrot.slane %v1785, %v1828
  %v1830 = vmul.f32 %v1645, %v1829
  %v1831 = vadd.f32 %v1825, %v1830
  %v1832 = vadd.f32 %v1808, %v1831
  %v1833 = vlaneseq
  %v1834 = vshrl.u32 %v1833, 7
  %v1835 = vsub.s32 4, %v1834
  %v1836 = vrot.slane %v1781, %v1835
  %v1837 = vmul.f32 %v1657, %v1836
  %v1838 = vlaneseq
  %v1839 = vshrl.u32 %v1838, 7
  %v1840 = vsub.s32 5, %v1839
  %v1841 = vrot.slane %v1781, %v1840
  %v1842 = vmul.f32 %v1662, %v1841
  %v1843 = vadd.f32 %v1837, %v1842
  %v1844 = vadd.f32 %v1832, %v1843
  %v1845 = vadd.f32 %v1844, %v1670
  %v1846 = vxor.u32 %v1845, 2147483648
  %v1847 = vmul.f32 %v1846, 1.442695
  %v1848 = vpow.pop %v1847
  %v1849 = vadd.f32 %v1848, 1.0
  %v1850 = vrcp.pop %v1849
  %v1851 = vmul.f32 1.0, %v1850
  %v1852 = vtanh.pop %v1845
  %v1853 = vmul.f32 %v1851, %v1776
  %v1855 = vrot.slane %v1852, 6
  %v1857 = vmul.f32 %v1851, %v1855
  %v1859 = vrot.slane %v1857, 6
  %v1861 = vadd.f32 %v1853, %v1859
  %v1862 = vtanh.pop %v1861
  %v1864 = vrot.slane %v1862, 6
  %v1866 = vmul.f32 %v1851, %v1864
  %1867 = vst.msk [vmem:[%s18 - $0x2] sm:$0x10] %vm1694, %v1866
  %1868 = vst.msk [vmem:[%s1696 + $0x1] sm:$0x20] %vm1697, %v1866
  %v1869 = vld [vmem:[%s1208] sm:$0xf]
  %v1870 = vld [vmem:[%s1210] sm:$0xf]
  %v1871 = vlaneseq
  %v1872 = vshrl.u32 %v1871, 7
  %v1873 = vsub.s32 0, %v1872
  %v1874 = vrot.slane %v1869, %v1873
  %v1875 = vmul.f32 %v1576, %v1874
  %v1876 = vlaneseq
  %v1877 = vshrl.u32 %v1876, 7
  %v1878 = vsub.s32 1, %v1877
  %v1879 = vrot.slane %v1869, %v1878
  %v1880 = vmul.f32 %v1585, %v1879
  %v1881 = vadd.f32 %v1875, %v1880
  %v1882 = vlaneseq
  %v1883 = vshrl.u32 %v1882, 7
  %v1884 = vsub.s32 2, %v1883
  %v1885 = vrot.slane %v1869, %v1884
  %v1886 = vmul.f32 %v1595, %v1885
  %v1887 = vadd.f32 %v1881, %v1886
  %v1888 = vlaneseq
  %v1889 = vshrl.u32 %v1888, 7
  %v1890 = vsub.s32 3, %v1889
  %v1891 = vrot.slane %v1869, %v1890
  %v1892 = vmul.f32 %v1605, %v1891
  %v1893 = vadd.f32 %v1887, %v1892
  %v1894 = vlaneseq
  %v1895 = vshrl.u32 %v1894, 7
  %v1896 = vsub.s32 0, %v1895
  %v1897 = vrot.slane %v1870, %v1896
  %v1898 = vmul.f32 %v1616, %v1897
  %v1899 = vlaneseq
  %v1900 = vshrl.u32 %v1899, 7
  %v1901 = vsub.s32 1, %v1900
  %v1902 = vrot.slane %v1870, %v1901
  %v1903 = vmul.f32 %v1625, %v1902
  %v1904 = vadd.f32 %v1898, %v1903
  %v1905 = vlaneseq
  %v1906 = vshrl.u32 %v1905, 7
  %v1907 = vsub.s32 2, %v1906
  %v1908 = vrot.slane %v1870, %v1907
  %v1909 = vmul.f32 %v1635, %v1908
  %v1910 = vadd.f32 %v1904, %v1909
  %v1911 = vlaneseq
  %v1912 = vshrl.u32 %v1911, 7
  %v1913 = vsub.s32 3, %v1912
  %v1914 = vrot.slane %v1870, %v1913
  %v1915 = vmul.f32 %v1645, %v1914
  %v1916 = vadd.f32 %v1910, %v1915
  %v1917 = vadd.f32 %v1893, %v1916
  %v1918 = vlaneseq
  %v1919 = vshrl.u32 %v1918, 7
  %v1920 = vsub.s32 4, %v1919
  %v1921 = vrot.slane %v1866, %v1920
  %v1922 = vmul.f32 %v1657, %v1921
  %v1923 = vlaneseq
  %v1924 = vshrl.u32 %v1923, 7
  %v1925 = vsub.s32 5, %v1924
  %v1926 = vrot.slane %v1866, %v1925
  %v1927 = vmul.f32 %v1662, %v1926
  %v1928 = vadd.f32 %v1922, %v1927
  %v1929 = vadd.f32 %v1917, %v1928
  %v1930 = vadd.f32 %v1929, %v1670
  %v1931 = vxor.u32 %v1930, 2147483648
  %v1932 = vmul.f32 %v1931, 1.442695
  %v1933 = vpow.pop %v1932
  %v1934 = vadd.f32 %v1933, 1.0
  %v1935 = vrcp.pop %v1934
  %v1936 = vmul.f32 1.0, %v1935
  %v1937 = vtanh.pop %v1930
  %v1938 = vmul.f32 %v1936, %v1861
  %v1940 = vrot.slane %v1937, 6
  %v1942 = vmul.f32 %v1936, %v1940
  %v1944 = vrot.slane %v1942, 6
  %v1946 = vadd.f32 %v1938, %v1944
  %v1947 = vtanh.pop %v1946
  %v1949 = vrot.slane %v1947, 6
  %v1951 = vmul.f32 %v1936, %v1949
  %1952 = vst.msk [vmem:[%s18 - $0x1] sm:$0x10] %vm1694, %v1951
  %1953 = vst.msk [vmem:[%s1696] sm:$0x20] %vm1697, %v1951
  %v1954 = vld [vmem:[%s1284] sm:$0xf]
  %v1955 = vlaneseq
  %v1956 = vshrl.u32 %v1955, 7
  %v1957 = vsub.s32 0, %v1956
  %v1958 = vrot.slane %v1954, %v1957
  %v1959 = vmul.f32 %v1576, %v1958
  %v1960 = vlaneseq
  %v1961 = vshrl.u32 %v1960, 7
  %v1962 = vsub.s32 1, %v1961
  %v1963 = vrot.slane %v1954, %v1962
  %v1964 = vmul.f32 %v1585, %v1963
  %v1965 = vadd.f32 %v1959, %v1964
  %v1966 = vlaneseq
  %v1967 = vshrl.u32 %v1966, 7
  %v1968 = vsub.s32 2, %v1967
  %v1969 = vrot.slane %v1954, %v1968
  %v1970 = vmul.f32 %v1595, %v1969
  %v1971 = vadd.f32 %v1965, %v1970
  %v1972 = vlaneseq
  %v1973 = vshrl.u32 %v1972, 7
  %v1974 = vsub.s32 3, %v1973
  %v1975 = vrot.slane %v1954, %v1974
  %v1976 = vmul.f32 %v1605, %v1975
  %v1977 = vadd.f32 %v1971, %v1976
  %v1978 = vmul.f32 %v1616, %v1958
  %v1979 = vmul.f32 %v1625, %v1963
  %v1980 = vadd.f32 %v1978, %v1979
  %v1981 = vmul.f32 %v1635, %v1969
  %v1982 = vadd.f32 %v1980, %v1981
  %v1983 = vmul.f32 %v1645, %v1975
  %v1984 = vadd.f32 %v1982, %v1983
  %v1985 = vadd.f32 %v1977, %v1984
  %v1986 = vlaneseq
  %v1987 = vshrl.u32 %v1986, 7
  %v1988 = vsub.s32 4, %v1987
  %v1989 = vrot.slane %v1951, %v1988
  %v1990 = vmul.f32 %v1657, %v1989
  %v1991 = vlaneseq
  %v1992 = vshrl.u32 %v1991, 7
  %v1993 = vsub.s32 5, %v1992
  %v1994 = vrot.slane %v1951, %v1993
  %v1995 = vmul.f32 %v1662, %v1994
  %v1996 = vadd.f32 %v1990, %v1995
  %v1997 = vadd.f32 %v1985, %v1996
  %v1998 = vadd.f32 %v1997, %v1670
  %v1999 = vxor.u32 %v1998, 2147483648
  %v2000 = vmul.f32 %v1999, 1.442695
  %v2001 = vpow.pop %v2000
  %v2002 = vadd.f32 %v2001, 1.0
  %v2003 = vrcp.pop %v2002
  %v2004 = vmul.f32 1.0, %v2003
  %v2005 = vtanh.pop %v1998
  %v2006 = vmul.f32 %v2004, %v1946
  %v2008 = vrot.slane %v2005, 6
  %v2010 = vmul.f32 %v2004, %v2008
  %v2012 = vrot.slane %v2010, 6
  %v2014 = vadd.f32 %v2006, %v2012
  %v2015 = vtanh.pop %v2014
  %v2017 = vrot.slane %v2015, 6
  %v2019 = vmul.f32 %v2004, %v2017
  %2020 = vst.msk [vmem:[%s18] sm:$0x10] %vm1694, %v2019
  %2021 = vst.msk [vmem:[%s1696 - $0x1] sm:$0x20] %vm1697, %v2019
  %v2022 = vld [vmem:[%s1210] sm:$0xf]
  %v2023 = vld [vmem:[%s1208] sm:$0xf]
  %v2024 = vlaneseq
  %v2025 = vshrl.u32 %v2024, 7
  %v2026 = vsub.s32 0, %v2025
  %v2027 = vrot.slane %v2022, %v2026
  %v2028 = vmul.f32 %v1576, %v2027
  %v2029 = vlaneseq
  %v2030 = vshrl.u32 %v2029, 7
  %v2031 = vsub.s32 1, %v2030
  %v2032 = vrot.slane %v2022, %v2031
  %v2033 = vmul.f32 %v1585, %v2032
  %v2034 = vadd.f32 %v2028, %v2033
  %v2035 = vlaneseq
  %v2036 = vshrl.u32 %v2035, 7
  %v2037 = vsub.s32 2, %v2036
  %v2038 = vrot.slane %v2022, %v2037
  %v2039 = vmul.f32 %v1595, %v2038
  %v2040 = vadd.f32 %v2034, %v2039
  %v2041 = vlaneseq
  %v2042 = vshrl.u32 %v2041, 7
  %v2043 = vsub.s32 3, %v2042
  %v2044 = vrot.slane %v2022, %v2043
  %v2045 = vmul.f32 %v1605, %v2044
  %v2046 = vadd.f32 %v2040, %v2045
  %v2047 = vlaneseq
  %v2048 = vshrl.u32 %v2047, 7
  %v2049 = vsub.s32 0, %v2048
  %v2050 = vrot.slane %v2023, %v2049
  %v2051 = vmul.f32 %v1616, %v2050
  %v2052 = vlaneseq
  %v2053 = vshrl.u32 %v2052, 7
  %v2054 = vsub.s32 1, %v2053
  %v2055 = vrot.slane %v2023, %v2054
  %v2056 = vmul.f32 %v1625, %v2055
  %v2057 = vadd.f32 %v2051, %v2056
  %v2058 = vlaneseq
  %v2059 = vshrl.u32 %v2058, 7
  %v2060 = vsub.s32 2, %v2059
  %v2061 = vrot.slane %v2023, %v2060
  %v2062 = vmul.f32 %v1635, %v2061
  %v2063 = vadd.f32 %v2057, %v2062
  %v2064 = vlaneseq
  %v2065 = vshrl.u32 %v2064, 7
  %v2066 = vsub.s32 3, %v2065
  %v2067 = vrot.slane %v2023, %v2066
  %v2068 = vmul.f32 %v1645, %v2067
  %v2069 = vadd.f32 %v2063, %v2068
  %v2070 = vadd.f32 %v2046, %v2069
  %v2071 = vlaneseq
  %v2072 = vshrl.u32 %v2071, 7
  %v2073 = vsub.s32 4, %v2072
  %v2074 = vrot.slane %v2019, %v2073
  %v2075 = vmul.f32 %v1657, %v2074
  %v2076 = vlaneseq
  %v2077 = vshrl.u32 %v2076, 7
  %v2078 = vsub.s32 5, %v2077
  %v2079 = vrot.slane %v2019, %v2078
  %v2080 = vmul.f32 %v1662, %v2079
  %v2081 = vadd.f32 %v2075, %v2080
  %v2082 = vadd.f32 %v2070, %v2081
  %v2083 = vadd.f32 %v2082, %v1670
  %v2084 = vxor.u32 %v2083, 2147483648
  %v2085 = vmul.f32 %v2084, 1.442695
  %v2086 = vpow.pop %v2085
  %v2087 = vadd.f32 %v2086, 1.0
  %v2088 = vrcp.pop %v2087
  %v2089 = vmul.f32 1.0, %v2088
  %v2090 = vtanh.pop %v2083
  %v2091 = vmul.f32 %v2089, %v2014
  %v2093 = vrot.slane %v2090, 6
  %v2095 = vmul.f32 %v2089, %v2093
  %v2097 = vrot.slane %v2095, 6
  %v2099 = vadd.f32 %v2091, %v2097
  %v2100 = vtanh.pop %v2099
  %v2102 = vrot.slane %v2100, 6
  %v2104 = vmul.f32 %v2089, %v2102
  %2105 = vst.msk [vmem:[%s18 + $0x1] sm:$0x10] %vm1694, %v2104
  %2106 = vst.msk [vmem:[%s1696 - $0x2] sm:$0x20] %vm1697, %v2104
  %v2107 = vld [vmem:[%s1130] sm:$0xf]
  %v2108 = vld [vmem:[%s1128] sm:$0xf]
  %v2109 = vlaneseq
  %v2110 = vshrl.u32 %v2109, 7
  %v2111 = vsub.s32 0, %v2110
  %v2112 = vrot.slane %v2107, %v2111
  %v2113 = vmul.f32 %v1576, %v2112
  %v2114 = vlaneseq
  %v2115 = vshrl.u32 %v2114, 7
  %v2116 = vsub.s32 1, %v2115
  %v2117 = vrot.slane %v2107, %v2116
  %v2118 = vmul.f32 %v1585, %v2117
  %v2119 = vadd.f32 %v2113, %v2118
  %v2120 = vlaneseq
  %v2121 = vshrl.u32 %v2120, 7
  %v2122 = vsub.s32 2, %v2121
  %v2123 = vrot.slane %v2107, %v2122
  %v2124 = vmul.f32 %v1595, %v2123
  %v2125 = vadd.f32 %v2119, %v2124
  %v2126 = vlaneseq
  %v2127 = vshrl.u32 %v2126, 7
  %v2128 = vsub.s32 3, %v2127
  %v2129 = vrot.slane %v2107, %v2128
  %v2130 = vmul.f32 %v1605, %v2129
  %v2131 = vadd.f32 %v2125, %v2130
  %v2132 = vlaneseq
  %v2133 = vshrl.u32 %v2132, 7
  %v2134 = vsub.s32 0, %v2133
  %v2135 = vrot.slane %v2108, %v2134
  %v2136 = vmul.f32 %v1616, %v2135
  %v2137 = vlaneseq
  %v2138 = vshrl.u32 %v2137, 7
  %v2139 = vsub.s32 1, %v2138
  %v2140 = vrot.slane %v2108, %v2139
  %v2141 = vmul.f32 %v1625, %v2140
  %v2142 = vadd.f32 %v2136, %v2141
  %v2143 = vlaneseq
  %v2144 = vshrl.u32 %v2143, 7
  %v2145 = vsub.s32 2, %v2144
  %v2146 = vrot.slane %v2108, %v2145
  %v2147 = vmul.f32 %v1635, %v2146
  %v2148 = vadd.f32 %v2142, %v2147
  %v2149 = vlaneseq
  %v2150 = vshrl.u32 %v2149, 7
  %v2151 = vsub.s32 3, %v2150
  %v2152 = vrot.slane %v2108, %v2151
  %v2153 = vmul.f32 %v1645, %v2152
  %v2154 = vadd.f32 %v2148, %v2153
  %v2155 = vadd.f32 %v2131, %v2154
  %v2156 = vlaneseq
  %v2157 = vshrl.u32 %v2156, 7
  %v2158 = vsub.s32 4, %v2157
  %v2159 = vrot.slane %v2104, %v2158
  %v2160 = vmul.f32 %v1657, %v2159
  %v2161 = vlaneseq
  %v2162 = vshrl.u32 %v2161, 7
  %v2163 = vsub.s32 5, %v2162
  %v2164 = vrot.slane %v2104, %v2163
  %v2165 = vmul.f32 %v1662, %v2164
  %v2166 = vadd.f32 %v2160, %v2165
  %v2167 = vadd.f32 %v2155, %v2166
  %v2168 = vadd.f32 %v2167, %v1670
  %v2169 = vxor.u32 %v2168, 2147483648
  %v2170 = vmul.f32 %v2169, 1.442695
  %v2171 = vpow.pop %v2170
  %v2172 = vadd.f32 %v2171, 1.0
  %v2173 = vrcp.pop %v2172
  %v2174 = vmul.f32 1.0, %v2173
  %v2175 = vtanh.pop %v2168
  %v2176 = vmul.f32 %v2174, %v2099
  %v2178 = vrot.slane %v2175, 6
  %v2180 = vmul.f32 %v2174, %v2178
  %v2182 = vrot.slane %v2180, 6
  %v2184 = vadd.f32 %v2176, %v2182
  %v2185 = vtanh.pop %v2184
  %v2187 = vrot.slane %v2185, 6
  %v2189 = vmul.f32 %v2174, %v2187
  %2190 = vst.msk [vmem:[%s18 + $0x2] sm:$0x10] %vm1694, %v2189
  %2191 = vst.msk [vmem:[%s1696 - $0x3] sm:$0x20] %vm1697, %v2189
  %v2192 = vld [vmem:[%s1050] sm:$0xf]
  %v2193 = vld [vmem:[%s1048] sm:$0xf]
  %v2194 = vlaneseq
  %v2195 = vshrl.u32 %v2194, 7
  %v2196 = vsub.s32 0, %v2195
  %v2197 = vrot.slane %v2192, %v2196
  %v2198 = vmul.f32 %v1576, %v2197
  %v2199 = vlaneseq
  %v2200 = vshrl.u32 %v2199, 7
  %v2201 = vsub.s32 1, %v2200
  %v2202 = vrot.slane %v2192, %v2201
  %v2203 = vmul.f32 %v1585, %v2202
  %v2204 = vadd.f32 %v2198, %v2203
  %v2205 = vlaneseq
  %v2206 = vshrl.u32 %v2205, 7
  %v2207 = vsub.s32 2, %v2206
  %v2208 = vrot.slane %v2192, %v2207
  %v2209 = vmul.f32 %v1595, %v2208
  %v2210 = vadd.f32 %v2204, %v2209
  %v2211 = vlaneseq
  %v2212 = vshrl.u32 %v2211, 7
  %v2213 = vsub.s32 3, %v2212
  %v2214 = vrot.slane %v2192, %v2213
  %v2215 = vmul.f32 %v1605, %v2214
  %v2216 = vadd.f32 %v2210, %v2215
  %v2217 = vlaneseq
  %v2218 = vshrl.u32 %v2217, 7
  %v2219 = vsub.s32 0, %v2218
  %v2220 = vrot.slane %v2193, %v2219
  %v2221 = vmul.f32 %v1616, %v2220
  %v2222 = vlaneseq
  %v2223 = vshrl.u32 %v2222, 7
  %v2224 = vsub.s32 1, %v2223
  %v2225 = vrot.slane %v2193, %v2224
  %v2226 = vmul.f32 %v1625, %v2225
  %v2227 = vadd.f32 %v2221, %v2226
  %v2228 = vlaneseq
  %v2229 = vshrl.u32 %v2228, 7
  %v2230 = vsub.s32 2, %v2229
  %v2231 = vrot.slane %v2193, %v2230
  %v2232 = vmul.f32 %v1635, %v2231
  %v2233 = vadd.f32 %v2227, %v2232
  %v2234 = vlaneseq
  %v2235 = vshrl.u32 %v2234, 7
  %v2236 = vsub.s32 3, %v2235
  %v2237 = vrot.slane %v2193, %v2236
  %v2238 = vmul.f32 %v1645, %v2237
  %v2239 = vadd.f32 %v2233, %v2238
  %v2240 = vadd.f32 %v2216, %v2239
  %v2241 = vlaneseq
  %v2242 = vshrl.u32 %v2241, 7
  %v2243 = vsub.s32 4, %v2242
  %v2244 = vrot.slane %v2189, %v2243
  %v2245 = vmul.f32 %v1657, %v2244
  %v2246 = vlaneseq
  %v2247 = vshrl.u32 %v2246, 7
  %v2248 = vsub.s32 5, %v2247
  %v2249 = vrot.slane %v2189, %v2248
  %v2250 = vmul.f32 %v1662, %v2249
  %v2251 = vadd.f32 %v2245, %v2250
  %v2252 = vadd.f32 %v2240, %v2251
  %v2253 = vadd.f32 %v2252, %v1670
  %v2254 = vxor.u32 %v2253, 2147483648
  %v2255 = vmul.f32 %v2254, 1.442695
  %v2256 = vpow.pop %v2255
  %v2257 = vadd.f32 %v2256, 1.0
  %v2258 = vrcp.pop %v2257
  %v2259 = vmul.f32 1.0, %v2258
  %v2260 = vtanh.pop %v2253
  %v2261 = vmul.f32 %v2259, %v2184
  %v2263 = vrot.slane %v2260, 6
  %v2265 = vmul.f32 %v2259, %v2263
  %v2267 = vrot.slane %v2265, 6
  %v2269 = vadd.f32 %v2261, %v2267
  %v2270 = vtanh.pop %v2269
  %v2272 = vrot.slane %v2270, 6
  %v2274 = vmul.f32 %v2259, %v2272
  %2275 = vst.msk [vmem:[%s18 + $0x3] sm:$0x10] %vm1694, %v2274
  %2276 = vst.msk [vmem:[%s1696 - $0x4] sm:$0x20] %vm1697, %v2274
  %v2277 = vld [vmem:[%s969] sm:$0xf]
  %v2278 = vld [vmem:[#allocation2] sm:$0xf]
  %v2279 = vlaneseq
  %v2280 = vshrl.u32 %v2279, 7
  %v2281 = vsub.s32 0, %v2280
  %v2282 = vrot.slane %v2277, %v2281
  %v2283 = vmul.f32 %v1576, %v2282
  %v2284 = vlaneseq
  %v2285 = vshrl.u32 %v2284, 7
  %v2286 = vsub.s32 1, %v2285
  %v2287 = vrot.slane %v2277, %v2286
  %v2288 = vmul.f32 %v1585, %v2287
  %v2289 = vadd.f32 %v2283, %v2288
  %v2290 = vlaneseq
  %v2291 = vshrl.u32 %v2290, 7
  %v2292 = vsub.s32 2, %v2291
  %v2293 = vrot.slane %v2277, %v2292
  %v2294 = vmul.f32 %v1595, %v2293
  %v2295 = vadd.f32 %v2289, %v2294
  %v2296 = vlaneseq
  %v2297 = vshrl.u32 %v2296, 7
  %v2298 = vsub.s32 3, %v2297
  %v2299 = vrot.slane %v2277, %v2298
  %v2300 = vmul.f32 %v1605, %v2299
  %v2301 = vadd.f32 %v2295, %v2300
  %v2302 = vlaneseq
  %v2303 = vshrl.u32 %v2302, 7
  %v2304 = vsub.s32 0, %v2303
  %v2305 = vrot.slane %v2278, %v2304
  %v2306 = vmul.f32 %v1616, %v2305
  %v2307 = vlaneseq
  %v2308 = vshrl.u32 %v2307, 7
  %v2309 = vsub.s32 1, %v2308
  %v2310 = vrot.slane %v2278, %v2309
  %v2311 = vmul.f32 %v1625, %v2310
  %v2312 = vadd.f32 %v2306, %v2311
  %v2313 = vlaneseq
  %v2314 = vshrl.u32 %v2313, 7
  %v2315 = vsub.s32 2, %v2314
  %v2316 = vrot.slane %v2278, %v2315
  %v2317 = vmul.f32 %v1635, %v2316
  %v2318 = vadd.f32 %v2312, %v2317
  %v2319 = vlaneseq
  %v2320 = vshrl.u32 %v2319, 7
  %v2321 = vsub.s32 3, %v2320
  %v2322 = vrot.slane %v2278, %v2321
  %v2323 = vmul.f32 %v1645, %v2322
  %v2324 = vadd.f32 %v2318, %v2323
  %v2325 = vadd.f32 %v2301, %v2324
  %v2326 = vlaneseq
  %v2327 = vshrl.u32 %v2326, 7
  %v2328 = vsub.s32 4, %v2327
  %v2329 = vrot.slane %v2274, %v2328
  %v2330 = vmul.f32 %v1657, %v2329
  %v2331 = vlaneseq
  %v2332 = vshrl.u32 %v2331, 7
  %v2333 = vsub.s32 5, %v2332
  %v2334 = vrot.slane %v2274, %v2333
  %v2335 = vmul.f32 %v1662, %v2334
  %v2336 = vadd.f32 %v2330, %v2335
  %v2337 = vadd.f32 %v2325, %v2336
  %v2338 = vadd.f32 %v2337, %v1670
  %v2339 = vxor.u32 %v2338, 2147483648
  %v2340 = vmul.f32 %v2339, 1.442695
  %v2341 = vpow.pop %v2340
  %v2342 = vadd.f32 %v2341, 1.0
  %v2343 = vrcp.pop %v2342
  %v2344 = vmul.f32 1.0, %v2343
  %v2345 = vtanh.pop %v2338
  %v2346 = vmul.f32 %v2344, %v2269
  %v2348 = vrot.slane %v2345, 6
  %v2350 = vmul.f32 %v2344, %v2348
  %v2352 = vrot.slane %v2350, 6
  %v2354 = vadd.f32 %v2346, %v2352
  %v2355 = vtanh.pop %v2354
  %v2357 = vrot.slane %v2355, 6
  %v2359 = vmul.f32 %v2344, %v2357
  %2360 = vst.msk [vmem:[%s18 + $0x4] sm:$0x10] %vm1694, %v2359
  %2361 = vst.msk [vmem:[%s1696 - $0x5] sm:$0x20] %vm1697, %v2359
  // Predicated region
  $region74: #{tpu_custom_call.1} parent=0 // pred_check
    _
  $region75: #{tpu_custom_call.1} parent=0 // pred_check_branch
    %2363 = sbr.rel (0) target = $region77
  $region76: #{tpu_custom_call.1} parent=0 // pred_region
    _
  $region77: #{tpu_custom_call.1} parent=0 // pred_fallthru
    _
  // Predicated region
  $region78: #{tpu_custom_call.1} parent=0 // pred_check
    _
  $region79: #{tpu_custom_call.1} parent=0 // pred_check_branch
    %2365 = sbr.rel (0) target = $region81
  $region80: #{tpu_custom_call.1} parent=0 // pred_region
    _
  $region81: #{tpu_custom_call.1} parent=0 // pred_fallthru
    _

</llo_original>
